<compile_context>
chip_gen: v6e
topology: v6e:2x2x1
jax: 0.10.0
libtpu: 0.0.40
codegen_flags: <defaults>
</compile_context>

<pallas_src>
import jax
import jax.numpy as jnp
from jax.experimental import pallas as pl
from jax.experimental.pallas import tpu as pltpu

LATENT_DIM = 9
_LANE = 128
_SUBL = 16  # bf16 packs 16 rows per sublane tile


def _round_up(x, m):
    return (x + m - 1) // m * m


def _autoencoder_kernel(
    x_ref,
    # encoder params (padded, W stored (in, out))
    w1, b1, w2, b2, w3, b3, w4, b4,
    # decoder params
    w5, b5, w6, b6, w7, b7, w8, b8,
    # single packed output: recon lanes [0, input_dim), latent lanes
    # [input_dim, input_dim + latent_dim), zeros elsewhere
    packed_ref,
):
    def lin(h_bf16, w_ref, b_ref, relu):
        # bf16 x bf16 MXU matmul with f32 accumulation; epilogue in f32.
        y = jnp.dot(h_bf16, w_ref[...], preferred_element_type=jnp.float32)
        y = y + b_ref[...]
        if relu:
            y = jnp.maximum(y, 0.0)
        return y

    h = x_ref[...]                                       # bf16 (TB, in_p)

    # encoder
    h = lin(h, w1, b1, True).astype(jnp.bfloat16)        # (TB, 256)
    h = lin(h, w2, b2, True).astype(jnp.bfloat16)        # (TB, 128)
    h = lin(h, w3, b3, True).astype(jnp.bfloat16)        # (TB, 128)  (64 real)
    # latent: f32, real columns live at lanes [input_dim, input_dim+latent_dim)
    latent = lin(h, w4, b4, False)                       # (TB, in_p)

    # decoder (W5 rows are placed at the same shifted lanes, so this is exact)
    h = lin(latent.astype(jnp.bfloat16), w5, b5, True).astype(jnp.bfloat16)  # (TB, 128)
    h = lin(h, w6, b6, True).astype(jnp.bfloat16)        # (TB, 128)
    h = lin(h, w7, b7, True).astype(jnp.bfloat16)        # (TB, 256)
    # recon: f32, real columns at lanes [0, input_dim), zeros elsewhere
    recon = lin(h, w8, b8, False)                        # (TB, in_p)

    # Exact packing: recon and latent are zero outside their own lanes.
    packed_ref[...] = (recon + latent).astype(packed_ref.dtype)


def _pad_params(params, input_dim, latent_dim):
    """Zero-pad every Linear so all matmul dims are multiples of 128; cast
    weights to bf16 (padding is exact zero -> padded lanes stay exactly zero
    through ReLU).  The latent layer is placed at lane offset `input_dim`
    inside a width-in_p block so recon+latent pack into one lane-dense slab."""
    in_p = _round_up(input_dim + latent_dim, _LANE)
    lat_off = input_dim
    # (padded_in, padded_out, row_offset, col_offset) per Linear layer
    layout = [
        (in_p, 256, 0, 0),
        (256, 128, 0, 0),
        (128, _LANE, 0, 0),
        (128, in_p, 0, lat_off),     # latent columns at shifted lanes
        (in_p, 128, lat_off, 0),     # decoder reads latent from shifted lanes
        (_LANE, 128, 0, 0),
        (128, 256, 0, 0),
        (256, in_p, 0, 0),
    ]
    padded = []
    for (w, b), (fip, fop, ro, co) in zip(params, layout):
        fi, fo = w.shape
        wp = jnp.zeros((fip, fop), jnp.float32).at[ro:ro + fi, co:co + fo].set(w)
        bp = jnp.zeros((1, fop), jnp.float32).at[:, co:co + fo].set(
            b.reshape(1, fo))
        padded.append((wp.astype(jnp.bfloat16), bp))
    return padded, in_p, lat_off


def weather_autoencoder_forward(x, params, *, batch_tile=2048):
    """params: list of 8 (W, b) with W shaped (in, out), b shaped (1, out).
    Returns (recon, latent) in float32 with original (unpadded) shapes."""
    B, input_dim = x.shape
    latent_dim = params[3][0].shape[1]

    padded, in_p, lat_off = _pad_params(params, input_dim, latent_dim)

    # ---- batch tiling: big tiles to amortize per-step overhead and per-step
    # MXU weight staging, but always >= 2 (even) grid steps when the batch
    # allows so both v7x TensorCores get work.  Tiles are multiples of 16. ----
    b16 = _round_up(max(B, _SUBL), _SUBL)
    n_tiles = pl.cdiv(b16, max(batch_tile, _SUBL))
    if b16 >= 2 * _SUBL:
        n_tiles = max(n_tiles, 2)
    if n_tiles > 1 and n_tiles % 2 == 1:
        n_tiles += 1
    tile = _round_up(pl.cdiv(b16, n_tiles), _SUBL)
    B_p = n_tiles * tile

    # Pad input in bf16 (no full-size f32 intermediate in the wrapper).
    x_p = jnp.pad(x.astype(jnp.bfloat16),
                  ((0, B_p - B), (0, in_p - input_dim)))

    flat_params = []
    for w, b in padded:
        flat_params.extend([w, b])

    # Parameters: whole-array, resident in VMEM (no per-step double buffering).
    param_spec = pl.BlockSpec(memory_space=pltpu.MemorySpace.VMEM)
    in_specs = [pl.BlockSpec((tile, in_p), lambda i: (i, 0))]
    in_specs += [param_spec for _ in flat_params]

    # Single packed, lane-dense f32 output (halves HBM writeback vs. two
    # padded f32 outputs; no masked vst.msk stores).
    out_specs = pl.BlockSpec((tile, in_p), lambda i: (i, 0))
    out_shape = jax.ShapeDtypeStruct((B_p, in_p), jnp.float32)

    # ---- explicit VMEM budget (v7x has 64 MiB/TC; scoped defaults are less).
    param_bytes = sum(int(w.size) * 2 + int(b.size) * 4 for w, b in padded)
    io_bytes = 2 * (tile * in_p * 2 + tile * in_p * 4)   # double-buffered in/out
    act_bytes = tile * 256 * (4 + 2) * 2                 # f32 + bf16 activations
    vmem_limit = int(min(64 << 20,
                         max(32 << 20, 2 * (param_bytes + io_bytes + act_bytes))))

    # Cost estimate: 2*B*sum(in*out) flops over the padded network.
    flops = 2 * B_p * sum(int(w.shape[0]) * int(w.shape[1]) for w, _ in padded)
    bytes_accessed = int(x_p.size) * 2 + B_p * in_p * 4 + param_bytes
    cost = pl.CostEstimate(flops=flops, transcendentals=0,
                           bytes_accessed=bytes_accessed)

    grid_spec = pltpu.PrefetchScalarGridSpec(
        num_scalar_prefetch=0,
        grid=(n_tiles,),
        in_specs=in_specs,
        out_specs=out_specs,
    )

    packed = pl.pallas_call(
        _autoencoder_kernel,
        out_shape=out_shape,
        grid_spec=grid_spec,
        compiler_params=pltpu.CompilerParams(
            dimension_semantics=("parallel",),
            vmem_limit_bytes=vmem_limit,
        ),
        cost_estimate=cost,
    )(x_p, *flat_params)

    recon = packed[:B, :input_dim]
    latent = packed[:B, lat_off:lat_off + latent_dim]
    return recon, latent


def init_params(key, input_dim, latent_dim=LATENT_DIM):
    """Deterministic init matching nn.Linear shapes (W stored as (in, out))."""
    dims = [
        # encoder
        (input_dim, 256), (256, 128), (128, 64), (64, latent_dim),
        # decoder
        (latent_dim, 64), (64, 128), (128, 256), (256, input_dim),
    ]
    params = []
    for (fan_in, fan_out) in dims:
        key, kw, kb = jax.random.split(key, 3)
        bound = 1.0 / jnp.sqrt(fan_in)
        w = jax.random.uniform(kw, (fan_in, fan_out), jnp.float32, -bound, bound)
        b = jax.random.uniform(kb, (1, fan_out), jnp.float32, -bound, bound)
        params.append((w, b))
    return params


def _reference_forward(x, params):
    """Pure f32 reference matching the PyTorch module semantics."""
    h = x
    for i in range(3):
        w, b = params[i]
        h = jnp.maximum(h @ w + b, 0.0)
    latent = h @ params[3][0] + params[3][1]
    h = latent
    for i in range(4, 7):
        w, b = params[i]
        h = jnp.maximum(h @ w + b, 0.0)
    recon = h @ params[7][0] + params[7][1]
    return recon, latent


if __name__ == "__main__":
    INPUT_DIM = 32
    BATCH = 512          # -> grid of 2 parallel 256-row tiles

    key = jax.random.PRNGKey(0)
    key, kx = jax.random.split(key)
    x = jax.random.normal(kx, (BATCH, INPUT_DIM), jnp.float32)
    params = init_params(key, INPUT_DIM, LATENT_DIM)

    recon, latent = weather_autoencoder_forward(x, params)
    recon = jax.block_until_ready(recon)
    latent = jax.block_until_ready(latent)

    recon_ref, latent_ref = _reference_forward(x, params)
    assert recon.shape == (BATCH, INPUT_DIM)
    assert latent.shape == (BATCH, LATENT_DIM)
    # bf16 matmul inputs / activations with f32 accumulation -> loose but
    # meaningful check against the pure-f32 reference.
    assert jnp.allclose(recon, recon_ref, atol=1e-1, rtol=1e-1), (
        float(jnp.max(jnp.abs(recon - recon_ref))))
    assert jnp.allclose(latent, latent_ref, atol=1e-1, rtol=1e-1), (
        float(jnp.max(jnp.abs(latent - latent_ref))))

    print("KERNEL_OK")
</pallas_src>

<mosaic_0001>
module attributes {stable_mosaic.version = 11 : i64} {
  func.func @_autoencoder_kernel(%arg0: i32, %arg1: memref<256x128xbf16, #tpu.memory_space<vmem>>, %arg2: memref<128x256xbf16, #tpu.memory_space<vmem>>, %arg3: memref<1x256xf32, #tpu.memory_space<vmem>>, %arg4: memref<256x128xbf16, #tpu.memory_space<vmem>>, %arg5: memref<1x128xf32, #tpu.memory_space<vmem>>, %arg6: memref<128x128xbf16, #tpu.memory_space<vmem>>, %arg7: memref<1x128xf32, #tpu.memory_space<vmem>>, %arg8: memref<128x128xbf16, #tpu.memory_space<vmem>>, %arg9: memref<1x128xf32, #tpu.memory_space<vmem>>, %arg10: memref<128x128xbf16, #tpu.memory_space<vmem>>, %arg11: memref<1x128xf32, #tpu.memory_space<vmem>>, %arg12: memref<128x128xbf16, #tpu.memory_space<vmem>>, %arg13: memref<1x128xf32, #tpu.memory_space<vmem>>, %arg14: memref<128x256xbf16, #tpu.memory_space<vmem>>, %arg15: memref<1x256xf32, #tpu.memory_space<vmem>>, %arg16: memref<256x128xbf16, #tpu.memory_space<vmem>>, %arg17: memref<1x128xf32, #tpu.memory_space<vmem>>, %arg18: memref<256x128xf32, #tpu.memory_space<vmem>>) attributes {dimension_semantics = [#tpu.dimension_semantics<parallel>], iteration_bounds = array<i64: 2>, scalar_prefetch = 0 : i64, scratch_operands = 0 : i64, tpu.core_type = #tpu.core_type<tc>, window_params = [{transform_indices = @transform_0, window_bounds = array<i64: 256, 128>}, {pipeline_mode = #tpu.pipeline_mode<synchronous>, transform_indices = @transform_1, window_bounds = array<i64: 128, 256>}, {pipeline_mode = #tpu.pipeline_mode<synchronous>, transform_indices = @transform_2, window_bounds = array<i64: 1, 256>}, {pipeline_mode = #tpu.pipeline_mode<synchronous>, transform_indices = @transform_3, window_bounds = array<i64: 256, 128>}, {pipeline_mode = #tpu.pipeline_mode<synchronous>, transform_indices = @transform_4, window_bounds = array<i64: 1, 128>}, {pipeline_mode = #tpu.pipeline_mode<synchronous>, transform_indices = @transform_5, window_bounds = array<i64: 128, 128>}, {pipeline_mode = #tpu.pipeline_mode<synchronous>, transform_indices = @transform_6, window_bounds = array<i64: 1, 128>}, {pipeline_mode = #tpu.pipeline_mode<synchronous>, transform_indices = @transform_7, window_bounds = array<i64: 128, 128>}, {pipeline_mode = #tpu.pipeline_mode<synchronous>, transform_indices = @transform_8, window_bounds = array<i64: 1, 128>}, {pipeline_mode = #tpu.pipeline_mode<synchronous>, transform_indices = @transform_9, window_bounds = array<i64: 128, 128>}, {pipeline_mode = #tpu.pipeline_mode<synchronous>, transform_indices = @transform_10, window_bounds = array<i64: 1, 128>}, {pipeline_mode = #tpu.pipeline_mode<synchronous>, transform_indices = @transform_11, window_bounds = array<i64: 128, 128>}, {pipeline_mode = #tpu.pipeline_mode<synchronous>, transform_indices = @transform_12, window_bounds = array<i64: 1, 128>}, {pipeline_mode = #tpu.pipeline_mode<synchronous>, transform_indices = @transform_13, window_bounds = array<i64: 128, 256>}, {pipeline_mode = #tpu.pipeline_mode<synchronous>, transform_indices = @transform_14, window_bounds = array<i64: 1, 256>}, {pipeline_mode = #tpu.pipeline_mode<synchronous>, transform_indices = @transform_15, window_bounds = array<i64: 256, 128>}, {pipeline_mode = #tpu.pipeline_mode<synchronous>, transform_indices = @transform_16, window_bounds = array<i64: 1, 128>}, {transform_indices = @transform_17, window_bounds = array<i64: 256, 128>}]} {
    %c0 = arith.constant 0 : index
    %c0_0 = arith.constant 0 : index
    %0 = vector.load %arg1[%c0, %c0_0] : memref<256x128xbf16, #tpu.memory_space<vmem>>, vector<256x128xbf16>
    %c0_1 = arith.constant 0 : index
    %c0_2 = arith.constant 0 : index
    %1 = vector.load %arg2[%c0_1, %c0_2] : memref<128x256xbf16, #tpu.memory_space<vmem>>, vector<128x256xbf16>
    %cst = arith.constant dense<0.000000e+00> : vector<256x256xf32>
    %2 = tpu.matmul %0, %1, %cst {dimension_numbers = #tpu.dot_dimension_numbers<[1], [0], [0], [1], [0, 0, 1, 1], [], []>} : vector<256x128xbf16>, vector<128x256xbf16>, vector<256x256xf32> -> vector<256x256xf32>
    %c0_3 = arith.constant 0 : index
    %c0_4 = arith.constant 0 : index
    %3 = vector.load %arg3[%c0_3, %c0_4] : memref<1x256xf32, #tpu.memory_space<vmem>>, vector<1x256xf32>
    %4 = vector.broadcast %3 : vector<1x256xf32> to vector<256x256xf32>
    %5 = arith.addf %2, %4 : vector<256x256xf32>
    %cst_5 = arith.constant 0.000000e+00 : f32
    %6 = vector.broadcast %cst_5 : f32 to vector<256x256xf32>
    %7 = arith.maximumf %5, %6 : vector<256x256xf32>
    %8 = arith.truncf %7 : vector<256x256xf32> to vector<256x256xbf16>
    %c0_6 = arith.constant 0 : index
    %c0_7 = arith.constant 0 : index
    %9 = vector.load %arg4[%c0_6, %c0_7] : memref<256x128xbf16, #tpu.memory_space<vmem>>, vector<256x128xbf16>
    %cst_8 = arith.constant dense<0.000000e+00> : vector<256x128xf32>
    %10 = tpu.matmul %8, %9, %cst_8 {dimension_numbers = #tpu.dot_dimension_numbers<[1], [0], [0], [1], [0, 0, 1, 1], [], []>} : vector<256x256xbf16>, vector<256x128xbf16>, vector<256x128xf32> -> vector<256x128xf32>
    %c0_9 = arith.constant 0 : index
    %c0_10 = arith.constant 0 : index
    %11 = vector.load %arg5[%c0_9, %c0_10] : memref<1x128xf32, #tpu.memory_space<vmem>>, vector<1x128xf32>
    %12 = vector.broadcast %11 : vector<1x128xf32> to vector<256x128xf32>
    %13 = arith.addf %10, %12 : vector<256x128xf32>
    %cst_11 = arith.constant 0.000000e+00 : f32
    %14 = vector.broadcast %cst_11 : f32 to vector<256x128xf32>
    %15 = arith.maximumf %13, %14 : vector<256x128xf32>
    %16 = arith.truncf %15 : vector<256x128xf32> to vector<256x128xbf16>
    %c0_12 = arith.constant 0 : index
    %c0_13 = arith.constant 0 : index
    %17 = vector.load %arg6[%c0_12, %c0_13] : memref<128x128xbf16, #tpu.memory_space<vmem>>, vector<128x128xbf16>
    %cst_14 = arith.constant dense<0.000000e+00> : vector<256x128xf32>
    %18 = tpu.matmul %16, %17, %cst_14 {dimension_numbers = #tpu.dot_dimension_numbers<[1], [0], [0], [1], [0, 0, 1, 1], [], []>} : vector<256x128xbf16>, vector<128x128xbf16>, vector<256x128xf32> -> vector<256x128xf32>
    %c0_15 = arith.constant 0 : index
    %c0_16 = arith.constant 0 : index
    %19 = vector.load %arg7[%c0_15, %c0_16] : memref<1x128xf32, #tpu.memory_space<vmem>>, vector<1x128xf32>
    %20 = vector.broadcast %19 : vector<1x128xf32> to vector<256x128xf32>
    %21 = arith.addf %18, %20 : vector<256x128xf32>
    %cst_17 = arith.constant 0.000000e+00 : f32
    %22 = vector.broadcast %cst_17 : f32 to vector<256x128xf32>
    %23 = arith.maximumf %21, %22 : vector<256x128xf32>
    %24 = arith.truncf %23 : vector<256x128xf32> to vector<256x128xbf16>
    %c0_18 = arith.constant 0 : index
    %c0_19 = arith.constant 0 : index
    %25 = vector.load %arg8[%c0_18, %c0_19] : memref<128x128xbf16, #tpu.memory_space<vmem>>, vector<128x128xbf16>
    %cst_20 = arith.constant dense<0.000000e+00> : vector<256x128xf32>
    %26 = tpu.matmul %24, %25, %cst_20 {dimension_numbers = #tpu.dot_dimension_numbers<[1], [0], [0], [1], [0, 0, 1, 1], [], []>} : vector<256x128xbf16>, vector<128x128xbf16>, vector<256x128xf32> -> vector<256x128xf32>
    %c0_21 = arith.constant 0 : index
    %c0_22 = arith.constant 0 : index
    %27 = vector.load %arg9[%c0_21, %c0_22] : memref<1x128xf32, #tpu.memory_space<vmem>>, vector<1x128xf32>
    %28 = vector.broadcast %27 : vector<1x128xf32> to vector<256x128xf32>
    %29 = arith.addf %26, %28 : vector<256x128xf32>
    %30 = arith.truncf %29 : vector<256x128xf32> to vector<256x128xbf16>
    %c0_23 = arith.constant 0 : index
    %c0_24 = arith.constant 0 : index
    %31 = vector.load %arg10[%c0_23, %c0_24] : memref<128x128xbf16, #tpu.memory_space<vmem>>, vector<128x128xbf16>
    %cst_25 = arith.constant dense<0.000000e+00> : vector<256x128xf32>
    %32 = tpu.matmul %30, %31, %cst_25 {dimension_numbers = #tpu.dot_dimension_numbers<[1], [0], [0], [1], [0, 0, 1, 1], [], []>} : vector<256x128xbf16>, vector<128x128xbf16>, vector<256x128xf32> -> vector<256x128xf32>
    %c0_26 = arith.constant 0 : index
    %c0_27 = arith.constant 0 : index
    %33 = vector.load %arg11[%c0_26, %c0_27] : memref<1x128xf32, #tpu.memory_space<vmem>>, vector<1x128xf32>
    %34 = vector.broadcast %33 : vector<1x128xf32> to vector<256x128xf32>
    %35 = arith.addf %32, %34 : vector<256x128xf32>
    %cst_28 = arith.constant 0.000000e+00 : f32
    %36 = vector.broadcast %cst_28 : f32 to vector<256x128xf32>
    %37 = arith.maximumf %35, %36 : vector<256x128xf32>
    %38 = arith.truncf %37 : vector<256x128xf32> to vector<256x128xbf16>
    %c0_29 = arith.constant 0 : index
    %c0_30 = arith.constant 0 : index
    %39 = vector.load %arg12[%c0_29, %c0_30] : memref<128x128xbf16, #tpu.memory_space<vmem>>, vector<128x128xbf16>
    %cst_31 = arith.constant dense<0.000000e+00> : vector<256x128xf32>
    %40 = tpu.matmul %38, %39, %cst_31 {dimension_numbers = #tpu.dot_dimension_numbers<[1], [0], [0], [1], [0, 0, 1, 1], [], []>} : vector<256x128xbf16>, vector<128x128xbf16>, vector<256x128xf32> -> vector<256x128xf32>
    %c0_32 = arith.constant 0 : index
    %c0_33 = arith.constant 0 : index
    %41 = vector.load %arg13[%c0_32, %c0_33] : memref<1x128xf32, #tpu.memory_space<vmem>>, vector<1x128xf32>
    %42 = vector.broadcast %41 : vector<1x128xf32> to vector<256x128xf32>
    %43 = arith.addf %40, %42 : vector<256x128xf32>
    %cst_34 = arith.constant 0.000000e+00 : f32
    %44 = vector.broadcast %cst_34 : f32 to vector<256x128xf32>
    %45 = arith.maximumf %43, %44 : vector<256x128xf32>
    %46 = arith.truncf %45 : vector<256x128xf32> to vector<256x128xbf16>
    %c0_35 = arith.constant 0 : index
    %c0_36 = arith.constant 0 : index
    %47 = vector.load %arg14[%c0_35, %c0_36] : memref<128x256xbf16, #tpu.memory_space<vmem>>, vector<128x256xbf16>
    %cst_37 = arith.constant dense<0.000000e+00> : vector<256x256xf32>
    %48 = tpu.matmul %46, %47, %cst_37 {dimension_numbers = #tpu.dot_dimension_numbers<[1], [0], [0], [1], [0, 0, 1, 1], [], []>} : vector<256x128xbf16>, vector<128x256xbf16>, vector<256x256xf32> -> vector<256x256xf32>
    %c0_38 = arith.constant 0 : index
    %c0_39 = arith.constant 0 : index
    %49 = vector.load %arg15[%c0_38, %c0_39] : memref<1x256xf32, #tpu.memory_space<vmem>>, vector<1x256xf32>
    %50 = vector.broadcast %49 : vector<1x256xf32> to vector<256x256xf32>
    %51 = arith.addf %48, %50 : vector<256x256xf32>
    %cst_40 = arith.constant 0.000000e+00 : f32
    %52 = vector.broadcast %cst_40 : f32 to vector<256x256xf32>
    %53 = arith.maximumf %51, %52 : vector<256x256xf32>
    %54 = arith.truncf %53 : vector<256x256xf32> to vector<256x256xbf16>
    %c0_41 = arith.constant 0 : index
    %c0_42 = arith.constant 0 : index
    %55 = vector.load %arg16[%c0_41, %c0_42] : memref<256x128xbf16, #tpu.memory_space<vmem>>, vector<256x128xbf16>
    %cst_43 = arith.constant dense<0.000000e+00> : vector<256x128xf32>
    %56 = tpu.matmul %54, %55, %cst_43 {dimension_numbers = #tpu.dot_dimension_numbers<[1], [0], [0], [1], [0, 0, 1, 1], [], []>} : vector<256x256xbf16>, vector<256x128xbf16>, vector<256x128xf32> -> vector<256x128xf32>
    %c0_44 = arith.constant 0 : index
    %c0_45 = arith.constant 0 : index
    %57 = vector.load %arg17[%c0_44, %c0_45] : memref<1x128xf32, #tpu.memory_space<vmem>>, vector<1x128xf32>
    %58 = vector.broadcast %57 : vector<1x128xf32> to vector<256x128xf32>
    %59 = arith.addf %56, %58 : vector<256x128xf32>
    %60 = arith.addf %59, %29 : vector<256x128xf32>
    %c0_46 = arith.constant 0 : index
    %c0_47 = arith.constant 0 : index
    %61 = vector.load %arg18[%c0_46, %c0_47] : memref<256x128xf32, #tpu.memory_space<vmem>>, vector<256x128xf32>
    tpu.vector_store %arg18[%c0_46, %c0_47], %60 {strides = array<i32>} : memref<256x128xf32, #tpu.memory_space<vmem>>, vector<256x128xf32>,
    return
  }
  func.func @transform_0(%arg0: i32) -> (i32, i32) {
    %c0_i32 = arith.constant 0 : i32
    %c0_i32_0 = arith.constant 0 : i32
    return %arg0, %c0_i32 : i32, i32
  }
  func.func @transform_1(%arg0: i32) -> (i32, i32) {
    %c0_i32 = arith.constant 0 : i32
    %c0_i32_0 = arith.constant 0 : i32
    %c0_i32_1 = arith.constant 0 : i32
    return %c0_i32, %c0_i32_0 : i32, i32
  }
  func.func @transform_2(%arg0: i32) -> (i32, i32) {
    %c0_i32 = arith.constant 0 : i32
    %c0_i32_0 = arith.constant 0 : i32
    %c0_i32_1 = arith.constant 0 : i32
    return %c0_i32, %c0_i32_0 : i32, i32
  }
  func.func @transform_3(%arg0: i32) -> (i32, i32) {
    %c0_i32 = arith.constant 0 : i32
    %c0_i32_0 = arith.constant 0 : i32
    %c0_i32_1 = arith.constant 0 : i32
    return %c0_i32, %c0_i32_0 : i32, i32
  }
  func.func @transform_4(%arg0: i32) -> (i32, i32) {
    %c0_i32 = arith.constant 0 : i32
    %c0_i32_0 = arith.constant 0 : i32
    %c0_i32_1 = arith.constant 0 : i32
    return %c0_i32, %c0_i32_0 : i32, i32
  }
  func.func @transform_5(%arg0: i32) -> (i32, i32) {
    %c0_i32 = arith.constant 0 : i32
    %c0_i32_0 = arith.constant 0 : i32
    %c0_i32_1 = arith.constant 0 : i32
    return %c0_i32, %c0_i32_0 : i32, i32
  }
  func.func @transform_6(%arg0: i32) -> (i32, i32) {
    %c0_i32 = arith.constant 0 : i32
    %c0_i32_0 = arith.constant 0 : i32
    %c0_i32_1 = arith.constant 0 : i32
    return %c0_i32, %c0_i32_0 : i32, i32
  }
  func.func @transform_7(%arg0: i32) -> (i32, i32) {
    %c0_i32 = arith.constant 0 : i32
    %c0_i32_0 = arith.constant 0 : i32
    %c0_i32_1 = arith.constant 0 : i32
    return %c0_i32, %c0_i32_0 : i32, i32
  }
  func.func @transform_8(%arg0: i32) -> (i32, i32) {
    %c0_i32 = arith.constant 0 : i32
    %c0_i32_0 = arith.constant 0 : i32
    %c0_i32_1 = arith.constant 0 : i32
    return %c0_i32, %c0_i32_0 : i32, i32
  }
  func.func @transform_9(%arg0: i32) -> (i32, i32) {
    %c0_i32 = arith.constant 0 : i32
    %c0_i32_0 = arith.constant 0 : i32
    %c0_i32_1 = arith.constant 0 : i32
    return %c0_i32, %c0_i32_0 : i32, i32
  }
  func.func @transform_10(%arg0: i32) -> (i32, i32) {
    %c0_i32 = arith.constant 0 : i32
    %c0_i32_0 = arith.constant 0 : i32
    %c0_i32_1 = arith.constant 0 : i32
    return %c0_i32, %c0_i32_0 : i32, i32
  }
  func.func @transform_11(%arg0: i32) -> (i32, i32) {
    %c0_i32 = arith.constant 0 : i32
    %c0_i32_0 = arith.constant 0 : i32
    %c0_i32_1 = arith.constant 0 : i32
    return %c0_i32, %c0_i32_0 : i32, i32
  }
  func.func @transform_12(%arg0: i32) -> (i32, i32) {
    %c0_i32 = arith.constant 0 : i32
    %c0_i32_0 = arith.constant 0 : i32
    %c0_i32_1 = arith.constant 0 : i32
    return %c0_i32, %c0_i32_0 : i32, i32
  }
  func.func @transform_13(%arg0: i32) -> (i32, i32) {
    %c0_i32 = arith.constant 0 : i32
    %c0_i32_0 = arith.constant 0 : i32
    %c0_i32_1 = arith.constant 0 : i32
    return %c0_i32, %c0_i32_0 : i32, i32
  }
  func.func @transform_14(%arg0: i32) -> (i32, i32) {
    %c0_i32 = arith.constant 0 : i32
    %c0_i32_0 = arith.constant 0 : i32
    %c0_i32_1 = arith.constant 0 : i32
    return %c0_i32, %c0_i32_0 : i32, i32
  }
  func.func @transform_15(%arg0: i32) -> (i32, i32) {
    %c0_i32 = arith.constant 0 : i32
    %c0_i32_0 = arith.constant 0 : i32
    %c0_i32_1 = arith.constant 0 : i32
    return %c0_i32, %c0_i32_0 : i32, i32
  }
  func.func @transform_16(%arg0: i32) -> (i32, i32) {
    %c0_i32 = arith.constant 0 : i32
    %c0_i32_0 = arith.constant 0 : i32
    %c0_i32_1 = arith.constant 0 : i32
    return %c0_i32, %c0_i32_0 : i32, i32
  }
  func.func @transform_17(%arg0: i32) -> (i32, i32) {
    %c0_i32 = arith.constant 0 : i32
    %c0_i32_0 = arith.constant 0 : i32
    return %arg0, %c0_i32 : i32, i32
  }
}

</mosaic_0001>

<llo_original>
// kernel: tpu_custom_call.1
$region0: #{tpu_custom_call.1}
  #allocation0 [shape = 'u32[]', space=smem, size = 0x4, offset = 0x4, fixed_abs, tag = 'smem constant byte address 0x4 - core index']
  #allocation1 [shape = 'u32[144,128]{1,0:T(1,128)}', space=vmem, size = 0x12000, scoped, tag = 'internal scratch']
  %s0 = inlined_call_operand.hbm [shape: bf16[512,128], index: 0, kind: input, shape index: {}]
  %s1 = inlined_call_operand.hbm [shape: bf16[128,256], index: 1, kind: input, shape index: {}]
  %s2 = inlined_call_operand.vmem [shape: f32[1,256], index: 2, kind: input, shape index: {}]
  %s3 = inlined_call_operand.hbm [shape: bf16[256,128], index: 3, kind: input, shape index: {}]
  %s4 = inlined_call_operand.vmem [shape: f32[1,128], index: 4, kind: input, shape index: {}]
  %s5 = inlined_call_operand.hbm [shape: bf16[128,128], index: 5, kind: input, shape index: {}]
  %s6 = inlined_call_operand.vmem [shape: f32[1,128], index: 6, kind: input, shape index: {}]
  %s7 = inlined_call_operand.hbm [shape: bf16[128,128], index: 7, kind: input, shape index: {}]
  %s8 = inlined_call_operand.vmem [shape: f32[1,128], index: 8, kind: input, shape index: {}]
  %s9 = inlined_call_operand.hbm [shape: bf16[128,128], index: 9, kind: input, shape index: {}]
  %s10 = inlined_call_operand.vmem [shape: f32[1,128], index: 10, kind: input, shape index: {}]
  %s11 = inlined_call_operand.hbm [shape: bf16[128,128], index: 11, kind: input, shape index: {}]
  %s12 = inlined_call_operand.vmem [shape: f32[1,128], index: 12, kind: input, shape index: {}]
  %s13 = inlined_call_operand.hbm [shape: bf16[128,256], index: 13, kind: input, shape index: {}]
  %s14 = inlined_call_operand.vmem [shape: f32[1,256], index: 14, kind: input, shape index: {}]
  %s15 = inlined_call_operand.hbm [shape: bf16[256,128], index: 15, kind: input, shape index: {}]
  %s16 = inlined_call_operand.vmem [shape: f32[1,128], index: 16, kind: input, shape index: {}]
  %s17 = inlined_call_operand.hbm [shape: f32[512,128], index: 17, kind: output, shape index: {}]
  %s18 = sld [smem:[#allocation0]]
  $region137: #{tpu_custom_call.1} parent=0
    _
  %s20 = ssub.s32 1, %s18
  %s21 = scalar_select 0, %s20, %s18
  $region1: #{tpu_custom_call.1} parent=0
    #allocation2 [shape = 'u8[131072]{0}', space=vmem, size = 0x20000, scoped, tag = 'input window, operand 0']
    #allocation3 [shape = 's32[2]{0}', space=sflag, size = 0x8, scoped, tag = 'scoped memory for tpu_custom_call.1']
    #allocation4 [shape = 's32[2]{0}', space=sflag, size = 0x8, scoped, tag = 'scoped memory for tpu_custom_call.1']
    #allocation5 [shape = 'u8[65536]{0}', space=vmem, size = 0x10000, scoped, tag = 'input window, operand 1, single buffered']
    #allocation6 [shape = 's32[1]{0}', space=sflag, size = 0x4, scoped, tag = 'scoped memory for tpu_custom_call.1']
    #allocation7 [shape = 'u8[65536]{0}', space=vmem, size = 0x10000, scoped, tag = 'input window, operand 3, single buffered']
    #allocation8 [shape = 'u8[32768]{0}', space=vmem, size = 0x8000, scoped, tag = 'input window, operand 5, single buffered']
    #allocation9 [shape = 's32[1]{0}', space=sflag, size = 0x4, scoped, tag = 'scoped memory for tpu_custom_call.1']
    #allocation10 [shape = 'u8[32768]{0}', space=vmem, size = 0x8000, scoped, tag = 'input window, operand 7, single buffered']
    #allocation11 [shape = 'u8[32768]{0}', space=vmem, size = 0x8000, scoped, tag = 'input window, operand 9, single buffered']
    #allocation12 [shape = 's32[1]{0}', space=sflag, size = 0x4, scoped, tag = 'scoped memory for tpu_custom_call.1']
    #allocation13 [shape = 'u8[32768]{0}', space=vmem, size = 0x8000, scoped, tag = 'input window, operand 11, single buffered']
    #allocation14 [shape = 'u8[65536]{0}', space=vmem, size = 0x10000, scoped, tag = 'input window, operand 13, single buffered']
    #allocation15 [shape = 's32[1]{0}', space=sflag, size = 0x4, scoped, tag = 'scoped memory for tpu_custom_call.1']
    #allocation16 [shape = 'u8[65536]{0}', space=vmem, size = 0x10000, scoped, tag = 'input window, operand 15, single buffered']
    #allocation17 [shape = 'u8[262144]{0}', space=vmem, size = 0x40000, scoped, tag = 'output window, operand 0']
    %22 = vsyncpa [#allocation3], 0
    %s23 = scalar_lea.sflag [#allocation3], 1
    %24 = vsyncpa %s23, 0
    %25 = vsyncpa [#allocation6], 0
    %26 = vsyncpa [#allocation9], 0
    %27 = vsyncpa [#allocation12], 0
    %28 = vsyncpa [#allocation15], 0
    %29 = vsyncpa [#allocation4], 0
    %s30 = scalar_lea.sflag [#allocation4], 1
    %31 = vsyncpa %s30, 0
    loop: start=0, step=1, limit=4
    $region2: #{tpu_custom_call.1} parent=1 // loop_pre_header
      _
    $region3: #{tpu_custom_call.1} parent=1 // loop_header
      %s33 = sphi 0, %s37
      %p34 = scmp.ge.s32.totalorder %s33, 4
      %s43 = sphi 0, %s45
      %s46 = sphi 0, %s43
      %s47 = sphi 0, %s46
      %s63 = sphi 0, %s47
      %s67 = sphi 0, %s67
      %s69 = sphi 0, %s67
      %s70 = sphi 0, %s69
      %s84 = sphi 0, %s70
      %s88 = sphi 0, %s88
      %s90 = sphi 0, %s88
      %s91 = sphi 0, %s90
      %s105 = sphi 0, %s91
      %s109 = sphi 0, %s109
      %s111 = sphi 0, %s109
      %s112 = sphi 0, %s111
      %s126 = sphi 0, %s112
      %s130 = sphi 0, %s130
      %s132 = sphi 0, %s130
      %s133 = sphi 0, %s132
      %s147 = sphi 0, %s133
      %s151 = sphi 0, %s151
      %s153 = sphi 0, %s151
      %s154 = sphi 0, %s153
      %s168 = sphi 0, %s154
      %s172 = sphi 0, %s172
      %s174 = sphi 0, %s172
      %s175 = sphi 0, %s174
      %s189 = sphi 0, %s175
      %s193 = sphi 0, %s193
      %s195 = sphi 0, %s193
      %s196 = sphi 0, %s195
      %s210 = sphi 0, %s196
      %s214 = sphi 0, %s214
      %s216 = sphi 0, %s214
      %s217 = sphi 0, %s216
      %s231 = sphi 0, %s217
      %s235 = sphi 0, %s235
      %s237 = sphi 0, %s235
      %s238 = sphi 0, %s237
      %s252 = sphi 0, %s238
      %s256 = sphi 0, %s256
      %s258 = sphi 0, %s256
      %s259 = sphi 0, %s258
      %s273 = sphi 0, %s259
      %s277 = sphi 0, %s277
      %s279 = sphi 0, %s277
      %s280 = sphi 0, %s279
      %s294 = sphi 0, %s280
      %s298 = sphi 0, %s298
      %s300 = sphi 0, %s298
      %s301 = sphi 0, %s300
      %s315 = sphi 0, %s301
      %s319 = sphi 0, %s319
      %s321 = sphi 0, %s319
      %s322 = sphi 0, %s321
      %s336 = sphi 0, %s322
      %s340 = sphi 0, %s340
      %s342 = sphi 0, %s340
      %s343 = sphi 0, %s342
      %s357 = sphi 0, %s343
      %s361 = sphi 0, %s361
      %s363 = sphi 0, %s361
      %s364 = sphi 0, %s363
      %s378 = sphi 0, %s364
      %s382 = sphi 0, %s382
      %s384 = sphi 0, %s382
      %s385 = sphi 0, %s384
      %s399 = sphi 0, %s385
      %s405 = sphi 0, %s407
      %s408 = sphi 0, %s405
      %s409 = sphi 0, %s408
      %s425 = sphi 0, %s409
    $region4: #{tpu_custom_call.1} parent=1 // loop_header_branch
      %36 = sbr.rel (%p34) target = $region8
    $region5: #{tpu_custom_call.1} parent=1 // loop_body
      %s38 = ssub.s32 %s33, 1
      %s39 = ssub.s32 %s33, 2
      %s40 = sadd.s32 %s33, 1
      %s41 = ssub.s32 %s33, %s40
      %p42 = scmp.eq.s32.totalorder %s41, 0
      %s44 = sadd.s32 %s43, 1
      %s45 = scalar_select %p42, %s43, %s44
      %p48 = pneg %p42
      %p49 = scmp.eq.s32.totalorder %s33, 1
      %p50 = por %p48, %p49
      %p51 = scmp.ne.s32.totalorder %s43, %s46
      %p52 = scmp.eq.s32.totalorder %s33, 0
      %p53 = por %p51, %p52
      %p54 = scmp.ne.s32.totalorder %s43, %s46
      %p55 = scmp.eq.s32.totalorder %s38, 1
      %p56 = por %p54, %p55
      %p57 = scmp.ne.s32.totalorder %s46, %s47
      %p58 = scmp.eq.s32.totalorder %s38, 0
      %p59 = por %p57, %p58
      %p60 = scmp.ne.s32.totalorder %s46, %s47
      %p61 = scmp.eq.s32.totalorder %s39, 1
      %p62 = por %p60, %p61
      %p64 = scmp.ne.s32.totalorder %s47, %s63
      %p65 = scmp.eq.s32.totalorder %s39, 0
      %p66 = por %p64, %p65
      %s68 = sadd.s32 %s67, 1
      %p71 = scmp.eq.s32.totalorder %s33, 1
      %p72 = scmp.ne.s32.totalorder %s67, %s69
      %p73 = scmp.eq.s32.totalorder %s33, 0
      %p74 = por %p72, %p73
      %p75 = scmp.ne.s32.totalorder %s67, %s69
      %p76 = scmp.eq.s32.totalorder %s38, 1
      %p77 = por %p75, %p76
      %p78 = scmp.ne.s32.totalorder %s69, %s70
      %p79 = scmp.eq.s32.totalorder %s38, 0
      %p80 = por %p78, %p79
      %p81 = scmp.ne.s32.totalorder %s69, %s70
      %p82 = scmp.eq.s32.totalorder %s39, 1
      %p83 = por %p81, %p82
      %p85 = scmp.ne.s32.totalorder %s70, %s84
      %p86 = scmp.eq.s32.totalorder %s39, 0
      %p87 = por %p85, %p86
      %s89 = sadd.s32 %s88, 1
      %p92 = scmp.eq.s32.totalorder %s33, 1
      %p93 = scmp.ne.s32.totalorder %s88, %s90
      %p94 = scmp.eq.s32.totalorder %s33, 0
      %p95 = por %p93, %p94
      %p96 = scmp.ne.s32.totalorder %s88, %s90
      %p97 = scmp.eq.s32.totalorder %s38, 1
      %p98 = por %p96, %p97
      %p99 = scmp.ne.s32.totalorder %s90, %s91
      %p100 = scmp.eq.s32.totalorder %s38, 0
      %p101 = por %p99, %p100
      %p102 = scmp.ne.s32.totalorder %s90, %s91
      %p103 = scmp.eq.s32.totalorder %s39, 1
      %p104 = por %p102, %p103
      %p106 = scmp.ne.s32.totalorder %s91, %s105
      %p107 = scmp.eq.s32.totalorder %s39, 0
      %p108 = por %p106, %p107
      %s110 = sadd.s32 %s109, 1
      %p113 = scmp.eq.s32.totalorder %s33, 1
      %p114 = scmp.ne.s32.totalorder %s109, %s111
      %p115 = scmp.eq.s32.totalorder %s33, 0
      %p116 = por %p114, %p115
      %p117 = scmp.ne.s32.totalorder %s109, %s111
      %p118 = scmp.eq.s32.totalorder %s38, 1
      %p119 = por %p117, %p118
      %p120 = scmp.ne.s32.totalorder %s111, %s112
      %p121 = scmp.eq.s32.totalorder %s38, 0
      %p122 = por %p120, %p121
      %p123 = scmp.ne.s32.totalorder %s111, %s112
      %p124 = scmp.eq.s32.totalorder %s39, 1
      %p125 = por %p123, %p124
      %p127 = scmp.ne.s32.totalorder %s112, %s126
      %p128 = scmp.eq.s32.totalorder %s39, 0
      %p129 = por %p127, %p128
      %s131 = sadd.s32 %s130, 1
      %p134 = scmp.eq.s32.totalorder %s33, 1
      %p135 = scmp.ne.s32.totalorder %s130, %s132
      %p136 = scmp.eq.s32.totalorder %s33, 0
      %p137 = por %p135, %p136
      %p138 = scmp.ne.s32.totalorder %s130, %s132
      %p139 = scmp.eq.s32.totalorder %s38, 1
      %p140 = por %p138, %p139
      %p141 = scmp.ne.s32.totalorder %s132, %s133
      %p142 = scmp.eq.s32.totalorder %s38, 0
      %p143 = por %p141, %p142
      %p144 = scmp.ne.s32.totalorder %s132, %s133
      %p145 = scmp.eq.s32.totalorder %s39, 1
      %p146 = por %p144, %p145
      %p148 = scmp.ne.s32.totalorder %s133, %s147
      %p149 = scmp.eq.s32.totalorder %s39, 0
      %p150 = por %p148, %p149
      %s152 = sadd.s32 %s151, 1
      %p155 = scmp.eq.s32.totalorder %s33, 1
      %p156 = scmp.ne.s32.totalorder %s151, %s153
      %p157 = scmp.eq.s32.totalorder %s33, 0
      %p158 = por %p156, %p157
      %p159 = scmp.ne.s32.totalorder %s151, %s153
      %p160 = scmp.eq.s32.totalorder %s38, 1
      %p161 = por %p159, %p160
      %p162 = scmp.ne.s32.totalorder %s153, %s154
      %p163 = scmp.eq.s32.totalorder %s38, 0
      %p164 = por %p162, %p163
      %p165 = scmp.ne.s32.totalorder %s153, %s154
      %p166 = scmp.eq.s32.totalorder %s39, 1
      %p167 = por %p165, %p166
      %p169 = scmp.ne.s32.totalorder %s154, %s168
      %p170 = scmp.eq.s32.totalorder %s39, 0
      %p171 = por %p169, %p170
      %s173 = sadd.s32 %s172, 1
      %p176 = scmp.eq.s32.totalorder %s33, 1
      %p177 = scmp.ne.s32.totalorder %s172, %s174
      %p178 = scmp.eq.s32.totalorder %s33, 0
      %p179 = por %p177, %p178
      %p180 = scmp.ne.s32.totalorder %s172, %s174
      %p181 = scmp.eq.s32.totalorder %s38, 1
      %p182 = por %p180, %p181
      %p183 = scmp.ne.s32.totalorder %s174, %s175
      %p184 = scmp.eq.s32.totalorder %s38, 0
      %p185 = por %p183, %p184
      %p186 = scmp.ne.s32.totalorder %s174, %s175
      %p187 = scmp.eq.s32.totalorder %s39, 1
      %p188 = por %p186, %p187
      %p190 = scmp.ne.s32.totalorder %s175, %s189
      %p191 = scmp.eq.s32.totalorder %s39, 0
      %p192 = por %p190, %p191
      %s194 = sadd.s32 %s193, 1
      %p197 = scmp.eq.s32.totalorder %s33, 1
      %p198 = scmp.ne.s32.totalorder %s193, %s195
      %p199 = scmp.eq.s32.totalorder %s33, 0
      %p200 = por %p198, %p199
      %p201 = scmp.ne.s32.totalorder %s193, %s195
      %p202 = scmp.eq.s32.totalorder %s38, 1
      %p203 = por %p201, %p202
      %p204 = scmp.ne.s32.totalorder %s195, %s196
      %p205 = scmp.eq.s32.totalorder %s38, 0
      %p206 = por %p204, %p205
      %p207 = scmp.ne.s32.totalorder %s195, %s196
      %p208 = scmp.eq.s32.totalorder %s39, 1
      %p209 = por %p207, %p208
      %p211 = scmp.ne.s32.totalorder %s196, %s210
      %p212 = scmp.eq.s32.totalorder %s39, 0
      %p213 = por %p211, %p212
      %s215 = sadd.s32 %s214, 1
      %p218 = scmp.eq.s32.totalorder %s33, 1
      %p219 = scmp.ne.s32.totalorder %s214, %s216
      %p220 = scmp.eq.s32.totalorder %s33, 0
      %p221 = por %p219, %p220
      %p222 = scmp.ne.s32.totalorder %s214, %s216
      %p223 = scmp.eq.s32.totalorder %s38, 1
      %p224 = por %p222, %p223
      %p225 = scmp.ne.s32.totalorder %s216, %s217
      %p226 = scmp.eq.s32.totalorder %s38, 0
      %p227 = por %p225, %p226
      %p228 = scmp.ne.s32.totalorder %s216, %s217
      %p229 = scmp.eq.s32.totalorder %s39, 1
      %p230 = por %p228, %p229
      %p232 = scmp.ne.s32.totalorder %s217, %s231
      %p233 = scmp.eq.s32.totalorder %s39, 0
      %p234 = por %p232, %p233
      %s236 = sadd.s32 %s235, 1
      %p239 = scmp.eq.s32.totalorder %s33, 1
      %p240 = scmp.ne.s32.totalorder %s235, %s237
      %p241 = scmp.eq.s32.totalorder %s33, 0
      %p242 = por %p240, %p241
      %p243 = scmp.ne.s32.totalorder %s235, %s237
      %p244 = scmp.eq.s32.totalorder %s38, 1
      %p245 = por %p243, %p244
      %p246 = scmp.ne.s32.totalorder %s237, %s238
      %p247 = scmp.eq.s32.totalorder %s38, 0
      %p248 = por %p246, %p247
      %p249 = scmp.ne.s32.totalorder %s237, %s238
      %p250 = scmp.eq.s32.totalorder %s39, 1
      %p251 = por %p249, %p250
      %p253 = scmp.ne.s32.totalorder %s238, %s252
      %p254 = scmp.eq.s32.totalorder %s39, 0
      %p255 = por %p253, %p254
      %s257 = sadd.s32 %s256, 1
      %p260 = scmp.eq.s32.totalorder %s33, 1
      %p261 = scmp.ne.s32.totalorder %s256, %s258
      %p262 = scmp.eq.s32.totalorder %s33, 0
      %p263 = por %p261, %p262
      %p264 = scmp.ne.s32.totalorder %s256, %s258
      %p265 = scmp.eq.s32.totalorder %s38, 1
      %p266 = por %p264, %p265
      %p267 = scmp.ne.s32.totalorder %s258, %s259
      %p268 = scmp.eq.s32.totalorder %s38, 0
      %p269 = por %p267, %p268
      %p270 = scmp.ne.s32.totalorder %s258, %s259
      %p271 = scmp.eq.s32.totalorder %s39, 1
      %p272 = por %p270, %p271
      %p274 = scmp.ne.s32.totalorder %s259, %s273
      %p275 = scmp.eq.s32.totalorder %s39, 0
      %p276 = por %p274, %p275
      %s278 = sadd.s32 %s277, 1
      %p281 = scmp.eq.s32.totalorder %s33, 1
      %p282 = scmp.ne.s32.totalorder %s277, %s279
      %p283 = scmp.eq.s32.totalorder %s33, 0
      %p284 = por %p282, %p283
      %p285 = scmp.ne.s32.totalorder %s277, %s279
      %p286 = scmp.eq.s32.totalorder %s38, 1
      %p287 = por %p285, %p286
      %p288 = scmp.ne.s32.totalorder %s279, %s280
      %p289 = scmp.eq.s32.totalorder %s38, 0
      %p290 = por %p288, %p289
      %p291 = scmp.ne.s32.totalorder %s279, %s280
      %p292 = scmp.eq.s32.totalorder %s39, 1
      %p293 = por %p291, %p292
      %p295 = scmp.ne.s32.totalorder %s280, %s294
      %p296 = scmp.eq.s32.totalorder %s39, 0
      %p297 = por %p295, %p296
      %s299 = sadd.s32 %s298, 1
      %p302 = scmp.eq.s32.totalorder %s33, 1
      %p303 = scmp.ne.s32.totalorder %s298, %s300
      %p304 = scmp.eq.s32.totalorder %s33, 0
      %p305 = por %p303, %p304
      %p306 = scmp.ne.s32.totalorder %s298, %s300
      %p307 = scmp.eq.s32.totalorder %s38, 1
      %p308 = por %p306, %p307
      %p309 = scmp.ne.s32.totalorder %s300, %s301
      %p310 = scmp.eq.s32.totalorder %s38, 0
      %p311 = por %p309, %p310
      %p312 = scmp.ne.s32.totalorder %s300, %s301
      %p313 = scmp.eq.s32.totalorder %s39, 1
      %p314 = por %p312, %p313
      %p316 = scmp.ne.s32.totalorder %s301, %s315
      %p317 = scmp.eq.s32.totalorder %s39, 0
      %p318 = por %p316, %p317
      %s320 = sadd.s32 %s319, 1
      %p323 = scmp.eq.s32.totalorder %s33, 1
      %p324 = scmp.ne.s32.totalorder %s319, %s321
      %p325 = scmp.eq.s32.totalorder %s33, 0
      %p326 = por %p324, %p325
      %p327 = scmp.ne.s32.totalorder %s319, %s321
      %p328 = scmp.eq.s32.totalorder %s38, 1
      %p329 = por %p327, %p328
      %p330 = scmp.ne.s32.totalorder %s321, %s322
      %p331 = scmp.eq.s32.totalorder %s38, 0
      %p332 = por %p330, %p331
      %p333 = scmp.ne.s32.totalorder %s321, %s322
      %p334 = scmp.eq.s32.totalorder %s39, 1
      %p335 = por %p333, %p334
      %p337 = scmp.ne.s32.totalorder %s322, %s336
      %p338 = scmp.eq.s32.totalorder %s39, 0
      %p339 = por %p337, %p338
      %s341 = sadd.s32 %s340, 1
      %p344 = scmp.eq.s32.totalorder %s33, 1
      %p345 = scmp.ne.s32.totalorder %s340, %s342
      %p346 = scmp.eq.s32.totalorder %s33, 0
      %p347 = por %p345, %p346
      %p348 = scmp.ne.s32.totalorder %s340, %s342
      %p349 = scmp.eq.s32.totalorder %s38, 1
      %p350 = por %p348, %p349
      %p351 = scmp.ne.s32.totalorder %s342, %s343
      %p352 = scmp.eq.s32.totalorder %s38, 0
      %p353 = por %p351, %p352
      %p354 = scmp.ne.s32.totalorder %s342, %s343
      %p355 = scmp.eq.s32.totalorder %s39, 1
      %p356 = por %p354, %p355
      %p358 = scmp.ne.s32.totalorder %s343, %s357
      %p359 = scmp.eq.s32.totalorder %s39, 0
      %p360 = por %p358, %p359
      %s362 = sadd.s32 %s361, 1
      %p365 = scmp.eq.s32.totalorder %s33, 1
      %p366 = scmp.ne.s32.totalorder %s361, %s363
      %p367 = scmp.eq.s32.totalorder %s33, 0
      %p368 = por %p366, %p367
      %p369 = scmp.ne.s32.totalorder %s361, %s363
      %p370 = scmp.eq.s32.totalorder %s38, 1
      %p371 = por %p369, %p370
      %p372 = scmp.ne.s32.totalorder %s363, %s364
      %p373 = scmp.eq.s32.totalorder %s38, 0
      %p374 = por %p372, %p373
      %p375 = scmp.ne.s32.totalorder %s363, %s364
      %p376 = scmp.eq.s32.totalorder %s39, 1
      %p377 = por %p375, %p376
      %p379 = scmp.ne.s32.totalorder %s364, %s378
      %p380 = scmp.eq.s32.totalorder %s39, 0
      %p381 = por %p379, %p380
      %s383 = sadd.s32 %s382, 1
      %p386 = scmp.eq.s32.totalorder %s33, 1
      %p387 = scmp.ne.s32.totalorder %s382, %s384
      %p388 = scmp.eq.s32.totalorder %s33, 0
      %p389 = por %p387, %p388
      %p390 = scmp.ne.s32.totalorder %s382, %s384
      %p391 = scmp.eq.s32.totalorder %s38, 1
      %p392 = por %p390, %p391
      %p393 = scmp.ne.s32.totalorder %s384, %s385
      %p394 = scmp.eq.s32.totalorder %s38, 0
      %p395 = por %p393, %p394
      %p396 = scmp.ne.s32.totalorder %s384, %s385
      %p397 = scmp.eq.s32.totalorder %s39, 1
      %p398 = por %p396, %p397
      %p400 = scmp.ne.s32.totalorder %s385, %s399
      %p401 = scmp.eq.s32.totalorder %s39, 0
      %p402 = por %p400, %p401
      %s403 = ssub.s32 %s33, %s40
      %p404 = scmp.eq.s32.totalorder %s403, 0
      %s406 = sadd.s32 %s405, 1
      %s407 = scalar_select %p404, %s405, %s406
      %p410 = pneg %p404
      %p411 = scmp.eq.s32.totalorder %s33, 1
      %p412 = por %p410, %p411
      %p413 = scmp.ne.s32.totalorder %s405, %s408
      %p414 = scmp.eq.s32.totalorder %s33, 0
      %p415 = por %p413, %p414
      %p416 = scmp.ne.s32.totalorder %s405, %s408
      %p417 = scmp.eq.s32.totalorder %s38, 1
      %p418 = por %p416, %p417
      %p419 = scmp.ne.s32.totalorder %s408, %s409
      %p420 = scmp.eq.s32.totalorder %s38, 0
      %p421 = por %p419, %p420
      %p422 = scmp.ne.s32.totalorder %s408, %s409
      %p423 = scmp.eq.s32.totalorder %s39, 1
      %p424 = por %p422, %p423
      %p426 = scmp.ne.s32.totalorder %s409, %s425
      %p427 = scmp.eq.s32.totalorder %s39, 0
      %p428 = por %p426, %p427
      %p429 = scmp.le.s32.totalorder 1, %s33
      %p430 = scmp.lt.s32.totalorder %s33, 3
      %p431 = pnand %p429, %p430
      %p432 = pneg %p431
      // Predicated region
      $region9: #{tpu_custom_call.1} parent=5 // pred_check
        _
      $region10: #{tpu_custom_call.1} parent=5 // pred_check_branch
        %434 = sbr.rel (%p431) target = $region12
      $region11: #{tpu_custom_call.1} parent=5 // pred_region
        %s435 = ssub.s32 %s33, 1
        // Predicated region
        $region13: #{tpu_custom_call.1} parent=11 // pred_check
          %p436 = pneg %p80
        $region14: #{tpu_custom_call.1} parent=11 // pred_check_branch
          %438 = sbr.rel (%p436) target = $region16
        $region15: #{tpu_custom_call.1} parent=11 // pred_region
          %s440 = ssub.s32 2048, 2048
          %441 = vsyncadd [#allocation6], %s440
          %s442 = sshll.u32 [#allocation5], 4
          %s443 = int_to_ptr.vmem [resolvable:$true] %s442
          %448 = dma.hbm_to_vmem [thread:$0]  %s1, 2048, %s443, [#allocation6], 128, 128, 8
        $region16: #{tpu_custom_call.1} parent=11 // pred_fallthru
          _
        // Predicated region
        $region17: #{tpu_custom_call.1} parent=11 // pred_check
          %p449 = pneg %p101
        $region18: #{tpu_custom_call.1} parent=11 // pred_check_branch
          %451 = sbr.rel (%p449) target = $region20
        $region19: #{tpu_custom_call.1} parent=11 // pred_region
          _
        $region20: #{tpu_custom_call.1} parent=11 // pred_fallthru
          _
        // Predicated region
        $region21: #{tpu_custom_call.1} parent=11 // pred_check
          %p452 = pneg %p122
        $region22: #{tpu_custom_call.1} parent=11 // pred_check_branch
          %454 = sbr.rel (%p452) target = $region24
        $region23: #{tpu_custom_call.1} parent=11 // pred_region
          %s456 = ssub.s32 2048, 2048
          %457 = vsyncadd [#allocation6], %s456
          %s458 = sshll.u32 [#allocation7], 4
          %s459 = int_to_ptr.vmem [resolvable:$true] %s458
          %464 = dma.hbm_to_vmem [thread:$0]  %s3, 2048, %s459, [#allocation6], 64, 64, 4
        $region24: #{tpu_custom_call.1} parent=11 // pred_fallthru
          _
        // Predicated region
        $region25: #{tpu_custom_call.1} parent=11 // pred_check
          %p465 = pneg %p143
        $region26: #{tpu_custom_call.1} parent=11 // pred_check_branch
          %467 = sbr.rel (%p465) target = $region28
        $region27: #{tpu_custom_call.1} parent=11 // pred_region
          _
        $region28: #{tpu_custom_call.1} parent=11 // pred_fallthru
          _
        // Predicated region
        $region29: #{tpu_custom_call.1} parent=11 // pred_check
          %p468 = pneg %p164
        $region30: #{tpu_custom_call.1} parent=11 // pred_check_branch
          %470 = sbr.rel (%p468) target = $region32
        $region31: #{tpu_custom_call.1} parent=11 // pred_region
          %s472 = ssub.s32 1024, 1024
          %473 = vsyncadd [#allocation9], %s472
          %s474 = sshll.u32 [#allocation8], 4
          %s475 = int_to_ptr.vmem [resolvable:$true] %s474
          %480 = dma.hbm_to_vmem [thread:$0]  %s5, 1024, %s475, [#allocation9], 64, 64, 4
        $region32: #{tpu_custom_call.1} parent=11 // pred_fallthru
          _
        // Predicated region
        $region33: #{tpu_custom_call.1} parent=11 // pred_check
          %p481 = pneg %p185
        $region34: #{tpu_custom_call.1} parent=11 // pred_check_branch
          %483 = sbr.rel (%p481) target = $region36
        $region35: #{tpu_custom_call.1} parent=11 // pred_region
          _
        $region36: #{tpu_custom_call.1} parent=11 // pred_fallthru
          _
        // Predicated region
        $region37: #{tpu_custom_call.1} parent=11 // pred_check
          %p484 = pneg %p206
        $region38: #{tpu_custom_call.1} parent=11 // pred_check_branch
          %486 = sbr.rel (%p484) target = $region40
        $region39: #{tpu_custom_call.1} parent=11 // pred_region
          %s488 = ssub.s32 1024, 1024
          %489 = vsyncadd [#allocation9], %s488
          %s490 = sshll.u32 [#allocation10], 4
          %s491 = int_to_ptr.vmem [resolvable:$true] %s490
          %496 = dma.hbm_to_vmem [thread:$0]  %s7, 1024, %s491, [#allocation9], 64, 64, 4
        $region40: #{tpu_custom_call.1} parent=11 // pred_fallthru
          _
        // Predicated region
        $region41: #{tpu_custom_call.1} parent=11 // pred_check
          %p497 = pneg %p227
        $region42: #{tpu_custom_call.1} parent=11 // pred_check_branch
          %499 = sbr.rel (%p497) target = $region44
        $region43: #{tpu_custom_call.1} parent=11 // pred_region
          _
        $region44: #{tpu_custom_call.1} parent=11 // pred_fallthru
          _
        // Predicated region
        $region45: #{tpu_custom_call.1} parent=11 // pred_check
          %p500 = pneg %p248
        $region46: #{tpu_custom_call.1} parent=11 // pred_check_branch
          %502 = sbr.rel (%p500) target = $region48
        $region47: #{tpu_custom_call.1} parent=11 // pred_region
          %s504 = ssub.s32 1024, 1024
          %505 = vsyncadd [#allocation12], %s504
          %s506 = sshll.u32 [#allocation11], 4
          %s507 = int_to_ptr.vmem [resolvable:$true] %s506
          %512 = dma.hbm_to_vmem [thread:$0]  %s9, 1024, %s507, [#allocation12], 64, 64, 4
        $region48: #{tpu_custom_call.1} parent=11 // pred_fallthru
          _
        // Predicated region
        $region49: #{tpu_custom_call.1} parent=11 // pred_check
          %p513 = pneg %p269
        $region50: #{tpu_custom_call.1} parent=11 // pred_check_branch
          %515 = sbr.rel (%p513) target = $region52
        $region51: #{tpu_custom_call.1} parent=11 // pred_region
          _
        $region52: #{tpu_custom_call.1} parent=11 // pred_fallthru
          _
        // Predicated region
        $region53: #{tpu_custom_call.1} parent=11 // pred_check
          %p516 = pneg %p290
        $region54: #{tpu_custom_call.1} parent=11 // pred_check_branch
          %518 = sbr.rel (%p516) target = $region56
        $region55: #{tpu_custom_call.1} parent=11 // pred_region
          %s520 = ssub.s32 1024, 1024
          %521 = vsyncadd [#allocation12], %s520
          %s522 = sshll.u32 [#allocation13], 4
          %s523 = int_to_ptr.vmem [resolvable:$true] %s522
          %528 = dma.hbm_to_vmem [thread:$0]  %s11, 1024, %s523, [#allocation12], 64, 64, 4
        $region56: #{tpu_custom_call.1} parent=11 // pred_fallthru
          _
        // Predicated region
        $region57: #{tpu_custom_call.1} parent=11 // pred_check
          %p529 = pneg %p311
        $region58: #{tpu_custom_call.1} parent=11 // pred_check_branch
          %531 = sbr.rel (%p529) target = $region60
        $region59: #{tpu_custom_call.1} parent=11 // pred_region
          _
        $region60: #{tpu_custom_call.1} parent=11 // pred_fallthru
          _
        // Predicated region
        $region61: #{tpu_custom_call.1} parent=11 // pred_check
          %p532 = pneg %p332
        $region62: #{tpu_custom_call.1} parent=11 // pred_check_branch
          %534 = sbr.rel (%p532) target = $region64
        $region63: #{tpu_custom_call.1} parent=11 // pred_region
          %s536 = ssub.s32 2048, 2048
          %537 = vsyncadd [#allocation15], %s536
          %s538 = sshll.u32 [#allocation14], 4
          %s539 = int_to_ptr.vmem [resolvable:$true] %s538
          %544 = dma.hbm_to_vmem [thread:$0]  %s13, 2048, %s539, [#allocation15], 128, 128, 8
        $region64: #{tpu_custom_call.1} parent=11 // pred_fallthru
          _
        // Predicated region
        $region65: #{tpu_custom_call.1} parent=11 // pred_check
          %p545 = pneg %p353
        $region66: #{tpu_custom_call.1} parent=11 // pred_check_branch
          %547 = sbr.rel (%p545) target = $region68
        $region67: #{tpu_custom_call.1} parent=11 // pred_region
          _
        $region68: #{tpu_custom_call.1} parent=11 // pred_fallthru
          _
        // Predicated region
        $region69: #{tpu_custom_call.1} parent=11 // pred_check
          %p548 = pneg %p374
        $region70: #{tpu_custom_call.1} parent=11 // pred_check_branch
          %550 = sbr.rel (%p548) target = $region72
        $region71: #{tpu_custom_call.1} parent=11 // pred_region
          %s552 = ssub.s32 2048, 2048
          %553 = vsyncadd [#allocation15], %s552
          %s554 = sshll.u32 [#allocation16], 4
          %s555 = int_to_ptr.vmem [resolvable:$true] %s554
          %560 = dma.hbm_to_vmem [thread:$0]  %s15, 2048, %s555, [#allocation15], 64, 64, 4
        $region72: #{tpu_custom_call.1} parent=11 // pred_fallthru
          _
        // Predicated region
        $region73: #{tpu_custom_call.1} parent=11 // pred_check
          %p561 = pneg %p395
        $region74: #{tpu_custom_call.1} parent=11 // pred_check_branch
          %563 = sbr.rel (%p561) target = $region76
        $region75: #{tpu_custom_call.1} parent=11 // pred_region
          _
        $region76: #{tpu_custom_call.1} parent=11 // pred_fallthru
          _
      $region12: #{tpu_custom_call.1} parent=5 // pred_fallthru
        _
      %p564 = scmp.lt.s32.totalorder %s33, 2
      // Predicated region
      $region77: #{tpu_custom_call.1} parent=5 // pred_check
        %p565 = pneg %p564
      $region78: #{tpu_custom_call.1} parent=5 // pred_check_branch
        %567 = sbr.rel (%p565) target = $region80
      $region79: #{tpu_custom_call.1} parent=5 // pred_region
        // Predicated region
        $region81: #{tpu_custom_call.1} parent=79 // pred_check
          %p568 = pneg %p53
        $region82: #{tpu_custom_call.1} parent=79 // pred_check_branch
          %570 = sbr.rel (%p568) target = $region84
        $region83: #{tpu_custom_call.1} parent=79 // pred_region
          %s571 = sand.u32 %s43, 1
          %s572 = scalar_lea.sflag [#allocation3], %s571
          %s573 = sand.u32 %s43, 1
          %s574 = smul.addr %s573, 128
          %s575 = scalar_lea.vmem [#allocation2], %s574
          %s576 = smul.u32 32, %s33
          %s578 = ssub.s32 2048, 2048
          %579 = vsyncadd %s572, %s578
          %s580 = smul.addr %s576, 64
          %s581 = scalar_lea.hbm %s0, %s580
          %s582 = sshll.u32 %s575, 4
          %s583 = int_to_ptr.vmem [resolvable:$true] %s582
          %588 = dma.hbm_to_vmem [thread:$0]  %s581, 2048, %s583, %s572, 64, 64, 4
        $region84: #{tpu_custom_call.1} parent=79 // pred_fallthru
          _
      $region80: #{tpu_custom_call.1} parent=5 // pred_fallthru
        _
      %p589 = scmp.le.s32.totalorder 1, %s33
      %p590 = scmp.lt.s32.totalorder %s33, 3
      %p591 = pnand %p589, %p590
      %p592 = pneg %p591
      // Predicated region
      $region85: #{tpu_custom_call.1} parent=5 // pred_check
        _
      $region86: #{tpu_custom_call.1} parent=5 // pred_check_branch
        %594 = sbr.rel (%p591) target = $region88
      $region87: #{tpu_custom_call.1} parent=5 // pred_region
        %s595 = ssub.s32 %s33, 1
        %s596 = sand.u32 %s46, 1
        %s597 = scalar_lea.sflag [#allocation3], %s596
        %s598 = sand.u32 %s46, 1
        %s599 = smul.addr %s598, 128
        %s600 = scalar_lea.vmem [#allocation2], %s599
        // Predicated region
        $region89: #{tpu_custom_call.1} parent=87 // pred_check
          %p601 = pneg %p59
        $region90: #{tpu_custom_call.1} parent=87 // pred_check_branch
          %603 = sbr.rel (%p601) target = $region92
        $region91: #{tpu_custom_call.1} parent=87 // pred_region
          %604 = dma.done %s597, 2048
        $region92: #{tpu_custom_call.1} parent=87 // pred_fallthru
          _
        // Predicated region
        $region93: #{tpu_custom_call.1} parent=87 // pred_check
          %p605 = pneg %p80
        $region94: #{tpu_custom_call.1} parent=87 // pred_check_branch
          %607 = sbr.rel (%p605) target = $region96
        $region95: #{tpu_custom_call.1} parent=87 // pred_region
          %608 = dma.done [#allocation6], 2048
        $region96: #{tpu_custom_call.1} parent=87 // pred_fallthru
          _
        // Predicated region
        $region97: #{tpu_custom_call.1} parent=87 // pred_check
          %p609 = pneg %p122
        $region98: #{tpu_custom_call.1} parent=87 // pred_check_branch
          %611 = sbr.rel (%p609) target = $region100
        $region99: #{tpu_custom_call.1} parent=87 // pred_region
          %612 = dma.done [#allocation6], 2048
        $region100: #{tpu_custom_call.1} parent=87 // pred_fallthru
          _
        // Predicated region
        $region101: #{tpu_custom_call.1} parent=87 // pred_check
          %p613 = pneg %p164
        $region102: #{tpu_custom_call.1} parent=87 // pred_check_branch
          %615 = sbr.rel (%p613) target = $region104
        $region103: #{tpu_custom_call.1} parent=87 // pred_region
          %616 = dma.done [#allocation9], 1024
        $region104: #{tpu_custom_call.1} parent=87 // pred_fallthru
          _
        // Predicated region
        $region105: #{tpu_custom_call.1} parent=87 // pred_check
          %p617 = pneg %p206
        $region106: #{tpu_custom_call.1} parent=87 // pred_check_branch
          %619 = sbr.rel (%p617) target = $region108
        $region107: #{tpu_custom_call.1} parent=87 // pred_region
          %620 = dma.done [#allocation9], 1024
        $region108: #{tpu_custom_call.1} parent=87 // pred_fallthru
          _
        // Predicated region
        $region109: #{tpu_custom_call.1} parent=87 // pred_check
          %p621 = pneg %p248
        $region110: #{tpu_custom_call.1} parent=87 // pred_check_branch
          %623 = sbr.rel (%p621) target = $region112
        $region111: #{tpu_custom_call.1} parent=87 // pred_region
          %624 = dma.done [#allocation12], 1024
        $region112: #{tpu_custom_call.1} parent=87 // pred_fallthru
          _
        // Predicated region
        $region113: #{tpu_custom_call.1} parent=87 // pred_check
          %p625 = pneg %p290
        $region114: #{tpu_custom_call.1} parent=87 // pred_check_branch
          %627 = sbr.rel (%p625) target = $region116
        $region115: #{tpu_custom_call.1} parent=87 // pred_region
          %628 = dma.done [#allocation12], 1024
        $region116: #{tpu_custom_call.1} parent=87 // pred_fallthru
          _
        // Predicated region
        $region117: #{tpu_custom_call.1} parent=87 // pred_check
          %p629 = pneg %p332
        $region118: #{tpu_custom_call.1} parent=87 // pred_check_branch
          %631 = sbr.rel (%p629) target = $region120
        $region119: #{tpu_custom_call.1} parent=87 // pred_region
          %632 = dma.done [#allocation15], 2048
        $region120: #{tpu_custom_call.1} parent=87 // pred_fallthru
          _
        // Predicated region
        $region121: #{tpu_custom_call.1} parent=87 // pred_check
          %p633 = pneg %p374
        $region122: #{tpu_custom_call.1} parent=87 // pred_check_branch
          %635 = sbr.rel (%p633) target = $region124
        $region123: #{tpu_custom_call.1} parent=87 // pred_region
          %636 = dma.done [#allocation15], 2048
        $region124: #{tpu_custom_call.1} parent=87 // pred_fallthru
          _
        %s637 = sand.u32 %s46, 1
        %s638 = scalar_lea.sflag [#allocation3], %s637
        %s639 = sand.u32 %s46, 1
        %s640 = smul.addr %s639, 128
        %s641 = scalar_lea.vmem [#allocation2], %s640
        %p642 = pneg %p59
        %p643 = pneg %p56
        %p644 = pneg %p80
        %p645 = pneg %p77
        %p646 = pneg %p101
        %p647 = pneg %p98
        %p648 = pneg %p122
        %p649 = pneg %p119
        %p650 = pneg %p143
        %p651 = pneg %p140
        %p652 = pneg %p164
        %p653 = pneg %p161
        %p654 = pneg %p185
        %p655 = pneg %p182
        %p656 = pneg %p206
        %p657 = pneg %p203
        %p658 = pneg %p227
        %p659 = pneg %p224
        %p660 = pneg %p248
        %p661 = pneg %p245
        %p662 = pneg %p269
        %p663 = pneg %p266
        %p664 = pneg %p290
        %p665 = pneg %p287
        %p666 = pneg %p311
        %p667 = pneg %p308
        %p668 = pneg %p332
        %p669 = pneg %p329
        %p670 = pneg %p353
        %p671 = pneg %p350
        %p672 = pneg %p374
        %p673 = pneg %p371
        %p674 = pneg %p395
        %p675 = pneg %p392
        %p676 = pneg %p421
        %p677 = pneg %p418
        %s678 = sand.u32 %s408, 1
        %s679 = scalar_lea.sflag [#allocation4], %s678
        %s680 = sand.u32 %s408, 1
        %s681 = smul.addr %s680, 256
        %s682 = scalar_lea.vmem [#allocation17], %s681
        %s683 = smul.u32 32, %s38
        %s684 = smul.u32 32, %s38
        %v686 = vld [vmem:[%s600] sm:$0xf]
        %v687 = vld [vmem:[%s600 + $0x4] sm:$0xf]
        %v688 = vld [vmem:[%s600 + $0x8] sm:$0xf]
        %v689 = vld [vmem:[%s600 + $0xc] sm:$0xf]
        %v690 = vld [vmem:[%s600 + $0x10] sm:$0xf]
        %v691 = vld [vmem:[%s600 + $0x14] sm:$0xf]
        %v692 = vld [vmem:[%s600 + $0x18] sm:$0xf]
        %v693 = vld [vmem:[%s600 + $0x1c] sm:$0xf]
        %v694 = vld [vmem:[%s600 + $0x20] sm:$0xf]
        %v695 = vld [vmem:[%s600 + $0x24] sm:$0xf]
        %v696 = vld [vmem:[%s600 + $0x28] sm:$0xf]
        %v697 = vld [vmem:[%s600 + $0x2c] sm:$0xf]
        %v698 = vld [vmem:[%s600 + $0x30] sm:$0xf]
        %v699 = vld [vmem:[%s600 + $0x34] sm:$0xf]
        %v700 = vld [vmem:[%s600 + $0x38] sm:$0xf]
        %v701 = vld [vmem:[%s600 + $0x3c] sm:$0xf]
        %v702 = vld [vmem:[%s600 + $0x40] sm:$0xf]
        %v703 = vld [vmem:[%s600 + $0x44] sm:$0xf]
        %v704 = vld [vmem:[%s600 + $0x48] sm:$0xf]
        %v705 = vld [vmem:[%s600 + $0x4c] sm:$0xf]
        %v706 = vld [vmem:[%s600 + $0x50] sm:$0xf]
        %v707 = vld [vmem:[%s600 + $0x54] sm:$0xf]
        %v708 = vld [vmem:[%s600 + $0x58] sm:$0xf]
        %v709 = vld [vmem:[%s600 + $0x5c] sm:$0xf]
        %v710 = vld [vmem:[%s600 + $0x60] sm:$0xf]
        %v711 = vld [vmem:[%s600 + $0x64] sm:$0xf]
        %v712 = vld [vmem:[%s600 + $0x68] sm:$0xf]
        %v713 = vld [vmem:[%s600 + $0x6c] sm:$0xf]
        %v714 = vld [vmem:[%s600 + $0x70] sm:$0xf]
        %v715 = vld [vmem:[%s600 + $0x74] sm:$0xf]
        %v716 = vld [vmem:[%s600 + $0x78] sm:$0xf]
        %v717 = vld [vmem:[%s600 + $0x7c] sm:$0xf]
        %v718 = vld [vmem:[#allocation5] sm:$0xff]
        %v719 = vld [vmem:[#allocation5 + $0x8] sm:$0xff]
        %v720 = vld [vmem:[#allocation5 + $0x10] sm:$0xff]
        %v721 = vld [vmem:[#allocation5 + $0x18] sm:$0xff]
        %v722 = vld [vmem:[#allocation5 + $0x20] sm:$0xff]
        %v723 = vld [vmem:[#allocation5 + $0x28] sm:$0xff]
        %v724 = vld [vmem:[#allocation5 + $0x30] sm:$0xff]
        %v725 = vld [vmem:[#allocation5 + $0x38] sm:$0xff]
        %v726 = vld [vmem:[#allocation5 + $0x40] sm:$0xff]
        %v727 = vld [vmem:[#allocation5 + $0x48] sm:$0xff]
        %v728 = vld [vmem:[#allocation5 + $0x50] sm:$0xff]
        %v729 = vld [vmem:[#allocation5 + $0x58] sm:$0xff]
        %v730 = vld [vmem:[#allocation5 + $0x60] sm:$0xff]
        %v731 = vld [vmem:[#allocation5 + $0x68] sm:$0xff]
        %v732 = vld [vmem:[#allocation5 + $0x70] sm:$0xff]
        %v733 = vld [vmem:[#allocation5 + $0x78] sm:$0xff]
        %v734 = vld [vmem:[%s2] sm:$0x3]
        %v736 = vlaneseq
        %v737 = vshrl.u32 %v736, 7
        %v738 = vsub.s32 0, %v737
        %v739 = vrot.slane %v734, %v738
        %v740 = vlaneseq
        %v741 = vshrl.u32 %v740, 7
        %v742 = vsub.s32 1, %v741
        %v743 = vrot.slane %v734, %v742
        %v778 = vunpack.c.l.b16 %v686
        %v779 = vunpack.c.l.b16 %v687
        %v780 = vunpack.c.l.b16 %v688
        %v781 = vunpack.c.l.b16 %v689
        %v782 = vunpack.c.l.b16 %v690
        %v783 = vunpack.c.l.b16 %v691
        %v784 = vunpack.c.l.b16 %v692
        %v785 = vunpack.c.l.b16 %v693
        %v786 = vunpack.c.l.b16 %v694
        %v787 = vunpack.c.l.b16 %v695
        %v788 = vunpack.c.l.b16 %v696
        %v789 = vunpack.c.l.b16 %v697
        %v790 = vunpack.c.l.b16 %v698
        %v791 = vunpack.c.l.b16 %v699
        %v792 = vunpack.c.l.b16 %v700
        %v793 = vunpack.c.l.b16 %v701
        %v794 = vunpack.c.l.b16 %v702
        %v795 = vunpack.c.l.b16 %v703
        %v796 = vunpack.c.l.b16 %v704
        %v797 = vunpack.c.l.b16 %v705
        %v798 = vunpack.c.l.b16 %v706
        %v799 = vunpack.c.l.b16 %v707
        %v800 = vunpack.c.l.b16 %v708
        %v801 = vunpack.c.l.b16 %v709
        %v802 = vunpack.c.l.b16 %v710
        %v803 = vunpack.c.l.b16 %v711
        %v804 = vunpack.c.l.b16 %v712
        %v805 = vunpack.c.l.b16 %v713
        %v806 = vunpack.c.l.b16 %v714
        %v807 = vunpack.c.l.b16 %v715
        %v808 = vunpack.c.l.b16 %v716
        %v809 = vunpack.c.l.b16 %v717
        %v810 = vpack.c.b16 %v779, %v778
        %v811 = vpack.c.b16 %v781, %v780
        %v812 = vpack.c.b16 %v783, %v782
        %v813 = vpack.c.b16 %v785, %v784
        %v814 = vpack.c.b16 %v787, %v786
        %v815 = vpack.c.b16 %v789, %v788
        %v816 = vpack.c.b16 %v791, %v790
        %v817 = vpack.c.b16 %v793, %v792
        %v818 = vpack.c.b16 %v795, %v794
        %v819 = vpack.c.b16 %v797, %v796
        %v820 = vpack.c.b16 %v799, %v798
        %v821 = vpack.c.b16 %v801, %v800
        %v822 = vpack.c.b16 %v803, %v802
        %v823 = vpack.c.b16 %v805, %v804
        %v824 = vpack.c.b16 %v807, %v806
        %v825 = vpack.c.b16 %v809, %v808
        %v858 = vunpack.c.l.b16 %v718
        %v859 = vunpack.c.h.b16 %v718
        %v860 = vunpack.c.l.b16 %v719
        %v861 = vunpack.c.h.b16 %v719
        %v862 = vunpack.c.l.b16 %v720
        %v863 = vunpack.c.h.b16 %v720
        %v864 = vunpack.c.l.b16 %v721
        %v865 = vunpack.c.h.b16 %v721
        %v866 = vunpack.c.l.b16 %v722
        %v867 = vunpack.c.h.b16 %v722
        %v868 = vunpack.c.l.b16 %v723
        %v869 = vunpack.c.h.b16 %v723
        %v870 = vunpack.c.l.b16 %v724
        %v871 = vunpack.c.h.b16 %v724
        %v872 = vunpack.c.l.b16 %v725
        %v873 = vunpack.c.h.b16 %v725
        %v874 = vunpack.c.l.b16 %v726
        %v875 = vunpack.c.h.b16 %v726
        %v876 = vunpack.c.l.b16 %v727
        %v877 = vunpack.c.h.b16 %v727
        %v878 = vunpack.c.l.b16 %v728
        %v879 = vunpack.c.h.b16 %v728
        %v880 = vunpack.c.l.b16 %v729
        %v881 = vunpack.c.h.b16 %v729
        %v882 = vunpack.c.l.b16 %v730
        %v883 = vunpack.c.h.b16 %v730
        %v884 = vunpack.c.l.b16 %v731
        %v885 = vunpack.c.h.b16 %v731
        %v886 = vunpack.c.l.b16 %v732
        %v887 = vunpack.c.h.b16 %v732
        %v888 = vunpack.c.l.b16 %v733
        %v889 = vunpack.c.h.b16 %v733
        %v890 = vpack.c.b16 %v860, %v858
        %v891 = vpack.c.b16 %v861, %v859
        %v892 = vpack.c.b16 %v864, %v862
        %v893 = vpack.c.b16 %v865, %v863
        %v894 = vpack.c.b16 %v868, %v866
        %v895 = vpack.c.b16 %v869, %v867
        %v896 = vpack.c.b16 %v872, %v870
        %v897 = vpack.c.b16 %v873, %v871
        %v898 = vpack.c.b16 %v876, %v874
        %v899 = vpack.c.b16 %v877, %v875
        %v900 = vpack.c.b16 %v880, %v878
        %v901 = vpack.c.b16 %v881, %v879
        %v902 = vpack.c.b16 %v884, %v882
        %v903 = vpack.c.b16 %v885, %v883
        %v904 = vpack.c.b16 %v888, %v886
        %v905 = vpack.c.b16 %v889, %v887
        %922 = vmatprep.subr.bf16.mxu0 %v905
        %923 = vmatpush1.bf16.msra.mxu0 %v904
        %924 = vmatprep.subr.bf16.mxu0 %v903
        %925 = vmatpush1.bf16.msra.mxu0 %v902
        %926 = vmatprep.subr.bf16.mxu0 %v901
        %927 = vmatpush1.bf16.msra.mxu0 %v900
        %928 = vmatprep.subr.bf16.mxu0 %v899
        %929 = vmatpush1.bf16.msra.mxu0 %v898
        %930 = vmatprep.subr.bf16.mxu0 %v897
        %931 = vmatpush1.bf16.msra.mxu0 %v896
        %932 = vmatprep.subr.bf16.mxu0 %v895
        %933 = vmatpush1.bf16.msra.mxu0 %v894
        %934 = vmatprep.subr.bf16.mxu0 %v893
        %935 = vmatpush1.bf16.msra.mxu0 %v892
        %936 = vmatprep.subr.bf16.mxu0 %v891
        %937 = vmatpush1.bf16.msra.mxu0 %v890
        %938 = vmatprep.subr.bf16.mxu0 0
        %939 = vmatpush2.bf16.msra.mxu0 0
        %940 = vmatprep.subr.bf16.mxu0 0
        %941 = vmatpush2.bf16.msra.mxu0 0
        %942 = vmatprep.subr.bf16.mxu0 0
        %943 = vmatpush2.bf16.msra.mxu0 0
        %944 = vmatprep.subr.bf16.mxu0 0
        %945 = vmatpush2.bf16.msra.mxu0 0
        %946 = vmatprep.subr.bf16.mxu0 0
        %947 = vmatpush2.bf16.msra.mxu0 0
        %948 = vmatprep.subr.bf16.mxu0 0
        %949 = vmatpush2.bf16.msra.mxu0 0
        %950 = vmatprep.subr.bf16.mxu0 0
        %951 = vmatpush2.bf16.msra.mxu0 0
        %952 = vmatprep.subr.bf16.mxu0 0
        %953 = vmatpush2.bf16.msra.mxu0 0
        %954 = vmatprep.mubr.bf16.mxu0 0
        %955 = vmatmul.mubr.bf16.gmra.mxu0 %v810
        %v956 = vpop.f32.mrf.mxu0
        %v957 = vadd.f32 %v739, %v956
        %v958 = vpop.f32.mrf.mxu0
        %v959 = vadd.f32 %v743, %v958
        %v960 = vpop.f32.mrf.mxu0
        %v961 = vadd.f32 %v739, %v960
        %v962 = vpop.f32.mrf.mxu0
        %v963 = vadd.f32 %v743, %v962
        %964 = vmatprep.mubr.bf16.mxu0 0
        %965 = vmatmul.mubr.bf16.gmra.mxu0 %v811
        %v966 = vpop.f32.mrf.mxu0
        %v967 = vadd.f32 %v739, %v966
        %v968 = vpop.f32.mrf.mxu0
        %v969 = vadd.f32 %v743, %v968
        %v970 = vpop.f32.mrf.mxu0
        %v971 = vadd.f32 %v739, %v970
        %v972 = vpop.f32.mrf.mxu0
        %v973 = vadd.f32 %v743, %v972
        %974 = vmatprep.mubr.bf16.mxu0 0
        %975 = vmatmul.mubr.bf16.gmra.mxu0 %v812
        %v976 = vpop.f32.mrf.mxu0
        %v977 = vadd.f32 %v739, %v976
        %v978 = vpop.f32.mrf.mxu0
        %v979 = vadd.f32 %v743, %v978
        %v980 = vpop.f32.mrf.mxu0
        %v981 = vadd.f32 %v739, %v980
        %v982 = vpop.f32.mrf.mxu0
        %v983 = vadd.f32 %v743, %v982
        %984 = vmatprep.mubr.bf16.mxu0 0
        %985 = vmatmul.mubr.bf16.gmra.mxu0 %v813
        %v986 = vpop.f32.mrf.mxu0
        %v987 = vadd.f32 %v739, %v986
        %v988 = vpop.f32.mrf.mxu0
        %v989 = vadd.f32 %v743, %v988
        %v990 = vpop.f32.mrf.mxu0
        %v991 = vadd.f32 %v739, %v990
        %v992 = vpop.f32.mrf.mxu0
        %v993 = vadd.f32 %v743, %v992
        %994 = vmatprep.mubr.bf16.mxu0 0
        %995 = vmatmul.mubr.bf16.gmra.mxu0 %v814
        %v996 = vpop.f32.mrf.mxu0
        %v997 = vadd.f32 %v739, %v996
        %v998 = vpop.f32.mrf.mxu0
        %v999 = vadd.f32 %v743, %v998
        %v1000 = vpop.f32.mrf.mxu0
        %v1001 = vadd.f32 %v739, %v1000
        %v1002 = vpop.f32.mrf.mxu0
        %v1003 = vadd.f32 %v743, %v1002
        %1004 = vmatprep.mubr.bf16.mxu0 0
        %1005 = vmatmul.mubr.bf16.gmra.mxu0 %v815
        %v1006 = vpop.f32.mrf.mxu0
        %v1007 = vadd.f32 %v739, %v1006
        %v1008 = vpop.f32.mrf.mxu0
        %v1009 = vadd.f32 %v743, %v1008
        %v1010 = vpop.f32.mrf.mxu0
        %v1011 = vadd.f32 %v739, %v1010
        %v1012 = vpop.f32.mrf.mxu0
        %v1013 = vadd.f32 %v743, %v1012
        %1014 = vmatprep.mubr.bf16.mxu0 0
        %1015 = vmatmul.mubr.bf16.gmra.mxu0 %v816
        %v1016 = vpop.f32.mrf.mxu0
        %v1017 = vadd.f32 %v739, %v1016
        %v1018 = vpop.f32.mrf.mxu0
        %v1019 = vadd.f32 %v743, %v1018
        %v1020 = vpop.f32.mrf.mxu0
        %v1021 = vadd.f32 %v739, %v1020
        %v1022 = vpop.f32.mrf.mxu0
        %v1023 = vadd.f32 %v743, %v1022
        %1024 = vmatprep.mubr.bf16.mxu0 0
        %1025 = vmatmul.mubr.bf16.gmra.mxu0 %v817
        %v1026 = vpop.f32.mrf.mxu0
        %v1027 = vadd.f32 %v739, %v1026
        %v1028 = vpop.f32.mrf.mxu0
        %v1029 = vadd.f32 %v743, %v1028
        %v1030 = vpop.f32.mrf.mxu0
        %v1031 = vadd.f32 %v739, %v1030
        %v1032 = vpop.f32.mrf.mxu0
        %v1033 = vadd.f32 %v743, %v1032
        %1034 = vmatprep.mubr.bf16.mxu0 0
        %1035 = vmatmul.mubr.bf16.gmra.mxu0 %v818
        %v1036 = vpop.f32.mrf.mxu0
        %v1037 = vadd.f32 %v739, %v1036
        %v1038 = vpop.f32.mrf.mxu0
        %v1039 = vadd.f32 %v743, %v1038
        %v1040 = vpop.f32.mrf.mxu0
        %v1041 = vadd.f32 %v739, %v1040
        %v1042 = vpop.f32.mrf.mxu0
        %v1043 = vadd.f32 %v743, %v1042
        %1044 = vmatprep.mubr.bf16.mxu0 0
        %1045 = vmatmul.mubr.bf16.gmra.mxu0 %v819
        %v1046 = vpop.f32.mrf.mxu0
        %v1047 = vadd.f32 %v739, %v1046
        %v1048 = vpop.f32.mrf.mxu0
        %v1049 = vadd.f32 %v743, %v1048
        %v1050 = vpop.f32.mrf.mxu0
        %v1051 = vadd.f32 %v739, %v1050
        %v1052 = vpop.f32.mrf.mxu0
        %v1053 = vadd.f32 %v743, %v1052
        %1054 = vmatprep.mubr.bf16.mxu0 0
        %1055 = vmatmul.mubr.bf16.gmra.mxu0 %v820
        %v1056 = vpop.f32.mrf.mxu0
        %v1057 = vadd.f32 %v739, %v1056
        %v1058 = vpop.f32.mrf.mxu0
        %v1059 = vadd.f32 %v743, %v1058
        %v1060 = vpop.f32.mrf.mxu0
        %v1061 = vadd.f32 %v739, %v1060
        %v1062 = vpop.f32.mrf.mxu0
        %v1063 = vadd.f32 %v743, %v1062
        %1064 = vmatprep.mubr.bf16.mxu0 0
        %1065 = vmatmul.mubr.bf16.gmra.mxu0 %v821
        %v1066 = vpop.f32.mrf.mxu0
        %v1067 = vadd.f32 %v739, %v1066
        %v1068 = vpop.f32.mrf.mxu0
        %v1069 = vadd.f32 %v743, %v1068
        %v1070 = vpop.f32.mrf.mxu0
        %v1071 = vadd.f32 %v739, %v1070
        %v1072 = vpop.f32.mrf.mxu0
        %v1073 = vadd.f32 %v743, %v1072
        %1074 = vmatprep.mubr.bf16.mxu0 0
        %1075 = vmatmul.mubr.bf16.gmra.mxu0 %v822
        %v1076 = vpop.f32.mrf.mxu0
        %v1077 = vadd.f32 %v739, %v1076
        %v1078 = vpop.f32.mrf.mxu0
        %v1079 = vadd.f32 %v743, %v1078
        %v1080 = vpop.f32.mrf.mxu0
        %v1081 = vadd.f32 %v739, %v1080
        %v1082 = vpop.f32.mrf.mxu0
        %v1083 = vadd.f32 %v743, %v1082
        %1084 = vmatprep.mubr.bf16.mxu0 0
        %1085 = vmatmul.mubr.bf16.gmra.mxu0 %v823
        %v1086 = vpop.f32.mrf.mxu0
        %v1087 = vadd.f32 %v739, %v1086
        %v1088 = vpop.f32.mrf.mxu0
        %v1089 = vadd.f32 %v743, %v1088
        %v1090 = vpop.f32.mrf.mxu0
        %v1091 = vadd.f32 %v739, %v1090
        %v1092 = vpop.f32.mrf.mxu0
        %v1093 = vadd.f32 %v743, %v1092
        %1094 = vmatprep.mubr.bf16.mxu0 0
        %1095 = vmatmul.mubr.bf16.gmra.mxu0 %v824
        %v1096 = vpop.f32.mrf.mxu0
        %v1097 = vadd.f32 %v739, %v1096
        %v1098 = vpop.f32.mrf.mxu0
        %v1099 = vadd.f32 %v743, %v1098
        %v1100 = vpop.f32.mrf.mxu0
        %v1101 = vadd.f32 %v739, %v1100
        %v1102 = vpop.f32.mrf.mxu0
        %v1103 = vadd.f32 %v743, %v1102
        %1104 = vmatprep.mubr.bf16.mxu0 0
        %1105 = vmatmul.mubr.bf16.gmra.mxu0 %v825
        %v1106 = vpop.f32.mrf.mxu0
        %v1107 = vadd.f32 %v739, %v1106
        %v1108 = vpop.f32.mrf.mxu0
        %v1109 = vadd.f32 %v743, %v1108
        %v1110 = vpop.f32.mrf.mxu0
        %v1111 = vadd.f32 %v739, %v1110
        %v1112 = vpop.f32.mrf.mxu0
        %v1113 = vadd.f32 %v743, %v1112
        %1114 = vdwg.mxu0
        %v1115 = vmax.f32 %v957, 0.0
        %v1116 = vmax.f32 %v959, 0.0
        %v1117 = vmax.f32 %v961, 0.0
        %v1118 = vmax.f32 %v963, 0.0
        %v1119 = vmax.f32 %v967, 0.0
        %v1120 = vmax.f32 %v969, 0.0
        %v1121 = vmax.f32 %v971, 0.0
        %v1122 = vmax.f32 %v973, 0.0
        %v1123 = vmax.f32 %v977, 0.0
        %v1124 = vmax.f32 %v979, 0.0
        %v1125 = vmax.f32 %v981, 0.0
        %v1126 = vmax.f32 %v983, 0.0
        %v1127 = vmax.f32 %v987, 0.0
        %v1128 = vmax.f32 %v989, 0.0
        %v1129 = vmax.f32 %v991, 0.0
        %v1130 = vmax.f32 %v993, 0.0
        %v1131 = vmax.f32 %v997, 0.0
        %v1132 = vmax.f32 %v999, 0.0
        %v1133 = vmax.f32 %v1001, 0.0
        %v1134 = vmax.f32 %v1003, 0.0
        %v1135 = vmax.f32 %v1007, 0.0
        %v1136 = vmax.f32 %v1009, 0.0
        %v1137 = vmax.f32 %v1011, 0.0
        %v1138 = vmax.f32 %v1013, 0.0
        %v1139 = vmax.f32 %v1017, 0.0
        %v1140 = vmax.f32 %v1019, 0.0
        %v1141 = vmax.f32 %v1021, 0.0
        %v1142 = vmax.f32 %v1023, 0.0
        %v1143 = vmax.f32 %v1027, 0.0
        %v1144 = vmax.f32 %v1029, 0.0
        %v1145 = vmax.f32 %v1031, 0.0
        %v1146 = vmax.f32 %v1033, 0.0
        %v1147 = vmax.f32 %v1037, 0.0
        %v1148 = vmax.f32 %v1039, 0.0
        %v1149 = vmax.f32 %v1041, 0.0
        %v1150 = vmax.f32 %v1043, 0.0
        %v1151 = vmax.f32 %v1047, 0.0
        %v1152 = vmax.f32 %v1049, 0.0
        %v1153 = vmax.f32 %v1051, 0.0
        %v1154 = vmax.f32 %v1053, 0.0
        %v1155 = vmax.f32 %v1057, 0.0
        %v1156 = vmax.f32 %v1059, 0.0
        %v1157 = vmax.f32 %v1061, 0.0
        %v1158 = vmax.f32 %v1063, 0.0
        %v1159 = vmax.f32 %v1067, 0.0
        %v1160 = vmax.f32 %v1069, 0.0
        %v1161 = vmax.f32 %v1071, 0.0
        %v1162 = vmax.f32 %v1073, 0.0
        %v1163 = vmax.f32 %v1077, 0.0
        %v1164 = vmax.f32 %v1079, 0.0
        %v1165 = vmax.f32 %v1081, 0.0
        %v1166 = vmax.f32 %v1083, 0.0
        %v1167 = vmax.f32 %v1087, 0.0
        %v1168 = vmax.f32 %v1089, 0.0
        %v1169 = vmax.f32 %v1091, 0.0
        %v1170 = vmax.f32 %v1093, 0.0
        %v1171 = vmax.f32 %v1097, 0.0
        %v1172 = vmax.f32 %v1099, 0.0
        %v1173 = vmax.f32 %v1101, 0.0
        %v1174 = vmax.f32 %v1103, 0.0
        %v1175 = vmax.f32 %v1107, 0.0
        %v1176 = vmax.f32 %v1109, 0.0
        %v1177 = vmax.f32 %v1111, 0.0
        %v1178 = vmax.f32 %v1113, 0.0
        %v1179 = vpack.c.bf16 %v1117, %v1115
        %v1180 = vpack.c.bf16 %v1118, %v1116
        %v1181 = vpack.c.bf16 %v1121, %v1119
        %v1182 = vpack.c.bf16 %v1122, %v1120
        %v1183 = vpack.c.bf16 %v1125, %v1123
        %v1184 = vpack.c.bf16 %v1126, %v1124
        %v1185 = vpack.c.bf16 %v1129, %v1127
        %v1186 = vpack.c.bf16 %v1130, %v1128
        %v1187 = vpack.c.bf16 %v1133, %v1131
        %v1188 = vpack.c.bf16 %v1134, %v1132
        %v1189 = vpack.c.bf16 %v1137, %v1135
        %v1190 = vpack.c.bf16 %v1138, %v1136
        %v1191 = vpack.c.bf16 %v1141, %v1139
        %v1192 = vpack.c.bf16 %v1142, %v1140
        %v1193 = vpack.c.bf16 %v1145, %v1143
        %v1194 = vpack.c.bf16 %v1146, %v1144
        %v1195 = vpack.c.bf16 %v1149, %v1147
        %v1196 = vpack.c.bf16 %v1150, %v1148
        %v1197 = vpack.c.bf16 %v1153, %v1151
        %v1198 = vpack.c.bf16 %v1154, %v1152
        %v1199 = vpack.c.bf16 %v1157, %v1155
        %v1200 = vpack.c.bf16 %v1158, %v1156
        %v1201 = vpack.c.bf16 %v1161, %v1159
        %v1202 = vpack.c.bf16 %v1162, %v1160
        %v1203 = vpack.c.bf16 %v1165, %v1163
        %v1204 = vpack.c.bf16 %v1166, %v1164
        %v1205 = vpack.c.bf16 %v1169, %v1167
        %v1206 = vpack.c.bf16 %v1170, %v1168
        %v1207 = vpack.c.bf16 %v1173, %v1171
        %v1208 = vpack.c.bf16 %v1174, %v1172
        %v1209 = vpack.c.bf16 %v1177, %v1175
        %v1210 = vpack.c.bf16 %v1178, %v1176
        %v1211 = vld [vmem:[#allocation7] sm:$0xf]
        %v1212 = vld [vmem:[#allocation7 + $0x4] sm:$0xf]
        %v1213 = vld [vmem:[#allocation7 + $0x8] sm:$0xf]
        %v1214 = vld [vmem:[#allocation7 + $0xc] sm:$0xf]
        %v1215 = vld [vmem:[#allocation7 + $0x10] sm:$0xf]
        %v1216 = vld [vmem:[#allocation7 + $0x14] sm:$0xf]
        %v1217 = vld [vmem:[#allocation7 + $0x18] sm:$0xf]
        %v1218 = vld [vmem:[#allocation7 + $0x1c] sm:$0xf]
        %v1219 = vld [vmem:[#allocation7 + $0x20] sm:$0xf]
        %v1220 = vld [vmem:[#allocation7 + $0x24] sm:$0xf]
        %v1221 = vld [vmem:[#allocation7 + $0x28] sm:$0xf]
        %v1222 = vld [vmem:[#allocation7 + $0x2c] sm:$0xf]
        %v1223 = vld [vmem:[#allocation7 + $0x30] sm:$0xf]
        %v1224 = vld [vmem:[#allocation7 + $0x34] sm:$0xf]
        %v1225 = vld [vmem:[#allocation7 + $0x38] sm:$0xf]
        %v1226 = vld [vmem:[#allocation7 + $0x3c] sm:$0xf]
        %v1227 = vld [vmem:[#allocation7 + $0x40] sm:$0xf]
        %v1228 = vld [vmem:[#allocation7 + $0x44] sm:$0xf]
        %v1229 = vld [vmem:[#allocation7 + $0x48] sm:$0xf]
        %v1230 = vld [vmem:[#allocation7 + $0x4c] sm:$0xf]
        %v1231 = vld [vmem:[#allocation7 + $0x50] sm:$0xf]
        %v1232 = vld [vmem:[#allocation7 + $0x54] sm:$0xf]
        %v1233 = vld [vmem:[#allocation7 + $0x58] sm:$0xf]
        %v1234 = vld [vmem:[#allocation7 + $0x5c] sm:$0xf]
        %v1235 = vld [vmem:[#allocation7 + $0x60] sm:$0xf]
        %v1236 = vld [vmem:[#allocation7 + $0x64] sm:$0xf]
        %v1237 = vld [vmem:[#allocation7 + $0x68] sm:$0xf]
        %v1238 = vld [vmem:[#allocation7 + $0x6c] sm:$0xf]
        %v1239 = vld [vmem:[#allocation7 + $0x70] sm:$0xf]
        %v1240 = vld [vmem:[#allocation7 + $0x74] sm:$0xf]
        %v1241 = vld [vmem:[#allocation7 + $0x78] sm:$0xf]
        %v1242 = vld [vmem:[#allocation7 + $0x7c] sm:$0xf]
        %v1243 = vld [vmem:[%s4] sm:$0x1]
        %v1245 = vlaneseq
        %v1246 = vshrl.u32 %v1245, 7
        %v1247 = vsub.s32 0, %v1246
        %v1248 = vrot.slane %v1243, %v1247
        %v1282 = vunpack.c.l.b16 %v1211
        %v1283 = vunpack.c.l.b16 %v1212
        %v1284 = vunpack.c.l.b16 %v1213
        %v1285 = vunpack.c.l.b16 %v1214
        %v1286 = vunpack.c.l.b16 %v1215
        %v1287 = vunpack.c.l.b16 %v1216
        %v1288 = vunpack.c.l.b16 %v1217
        %v1289 = vunpack.c.l.b16 %v1218
        %v1290 = vunpack.c.l.b16 %v1219
        %v1291 = vunpack.c.l.b16 %v1220
        %v1292 = vunpack.c.l.b16 %v1221
        %v1293 = vunpack.c.l.b16 %v1222
        %v1294 = vunpack.c.l.b16 %v1223
        %v1295 = vunpack.c.l.b16 %v1224
        %v1296 = vunpack.c.l.b16 %v1225
        %v1297 = vunpack.c.l.b16 %v1226
        %v1298 = vunpack.c.l.b16 %v1227
        %v1299 = vunpack.c.l.b16 %v1228
        %v1300 = vunpack.c.l.b16 %v1229
        %v1301 = vunpack.c.l.b16 %v1230
        %v1302 = vunpack.c.l.b16 %v1231
        %v1303 = vunpack.c.l.b16 %v1232
        %v1304 = vunpack.c.l.b16 %v1233
        %v1305 = vunpack.c.l.b16 %v1234
        %v1306 = vunpack.c.l.b16 %v1235
        %v1307 = vunpack.c.l.b16 %v1236
        %v1308 = vunpack.c.l.b16 %v1237
        %v1309 = vunpack.c.l.b16 %v1238
        %v1310 = vunpack.c.l.b16 %v1239
        %v1311 = vunpack.c.l.b16 %v1240
        %v1312 = vunpack.c.l.b16 %v1241
        %v1313 = vunpack.c.l.b16 %v1242
        %v1314 = vpack.c.b16 %v1283, %v1282
        %v1315 = vpack.c.b16 %v1285, %v1284
        %v1316 = vpack.c.b16 %v1287, %v1286
        %v1317 = vpack.c.b16 %v1289, %v1288
        %v1318 = vpack.c.b16 %v1291, %v1290
        %v1319 = vpack.c.b16 %v1293, %v1292
        %v1320 = vpack.c.b16 %v1295, %v1294
        %v1321 = vpack.c.b16 %v1297, %v1296
        %v1322 = vpack.c.b16 %v1299, %v1298
        %v1323 = vpack.c.b16 %v1301, %v1300
        %v1324 = vpack.c.b16 %v1303, %v1302
        %v1325 = vpack.c.b16 %v1305, %v1304
        %v1326 = vpack.c.b16 %v1307, %v1306
        %v1327 = vpack.c.b16 %v1309, %v1308
        %v1328 = vpack.c.b16 %v1311, %v1310
        %v1329 = vpack.c.b16 %v1313, %v1312
        %1346 = vmatprep.subr.bf16.mxu0 0
        %1347 = vmatpush1.bf16.msra.mxu0 %v1321
        %1348 = vmatprep.subr.bf16.mxu0 0
        %1349 = vmatpush1.bf16.msra.mxu0 %v1320
        %1350 = vmatprep.subr.bf16.mxu0 0
        %1351 = vmatpush1.bf16.msra.mxu0 %v1319
        %1352 = vmatprep.subr.bf16.mxu0 0
        %1353 = vmatpush1.bf16.msra.mxu0 %v1318
        %1354 = vmatprep.subr.bf16.mxu0 0
        %1355 = vmatpush1.bf16.msra.mxu0 %v1317
        %1356 = vmatprep.subr.bf16.mxu0 0
        %1357 = vmatpush1.bf16.msra.mxu0 %v1316
        %1358 = vmatprep.subr.bf16.mxu0 0
        %1359 = vmatpush1.bf16.msra.mxu0 %v1315
        %1360 = vmatprep.subr.bf16.mxu0 0
        %1361 = vmatpush1.bf16.msra.mxu0 %v1314
        %1362 = vmatprep.subr.bf16.mxu0 0
        %1363 = vmatpush2.bf16.msra.mxu0 %v1329
        %1364 = vmatprep.subr.bf16.mxu0 0
        %1365 = vmatpush2.bf16.msra.mxu0 %v1328
        %1366 = vmatprep.subr.bf16.mxu0 0
        %1367 = vmatpush2.bf16.msra.mxu0 %v1327
        %1368 = vmatprep.subr.bf16.mxu0 0
        %1369 = vmatpush2.bf16.msra.mxu0 %v1326
        %1370 = vmatprep.subr.bf16.mxu0 0
        %1371 = vmatpush2.bf16.msra.mxu0 %v1325
        %1372 = vmatprep.subr.bf16.mxu0 0
        %1373 = vmatpush2.bf16.msra.mxu0 %v1324
        %1374 = vmatprep.subr.bf16.mxu0 0
        %1375 = vmatpush2.bf16.msra.mxu0 %v1323
        %1376 = vmatprep.subr.bf16.mxu0 0
        %1377 = vmatpush2.bf16.msra.mxu0 %v1322
        %1378 = vmatprep.mubr.bf16.mxu0 %v1180
        %1379 = vmatmul.mubr.bf16.gmra.mxu0 %v1179
        %v1380 = vpop.f32.mrf.mxu0
        %v1381 = vadd.f32 %v1248, %v1380
        %v1382 = vpop.f32.mrf.mxu0
        %v1383 = vpop.f32.mrf.mxu0
        %v1384 = vadd.f32 %v1248, %v1383
        %v1385 = vpop.f32.mrf.mxu0
        %1386 = vmatprep.mubr.bf16.mxu0 %v1182
        %1387 = vmatmul.mubr.bf16.gmra.mxu0 %v1181
        %v1388 = vpop.f32.mrf.mxu0
        %v1389 = vadd.f32 %v1248, %v1388
        %v1390 = vpop.f32.mrf.mxu0
        %v1391 = vpop.f32.mrf.mxu0
        %v1392 = vadd.f32 %v1248, %v1391
        %v1393 = vpop.f32.mrf.mxu0
        %1394 = vmatprep.mubr.bf16.mxu0 %v1184
        %1395 = vmatmul.mubr.bf16.gmra.mxu0 %v1183
        %v1396 = vpop.f32.mrf.mxu0
        %v1397 = vadd.f32 %v1248, %v1396
        %v1398 = vpop.f32.mrf.mxu0
        %v1399 = vpop.f32.mrf.mxu0
        %v1400 = vadd.f32 %v1248, %v1399
        %v1401 = vpop.f32.mrf.mxu0
        %1402 = vmatprep.mubr.bf16.mxu0 %v1186
        %1403 = vmatmul.mubr.bf16.gmra.mxu0 %v1185
        %v1404 = vpop.f32.mrf.mxu0
        %v1405 = vadd.f32 %v1248, %v1404
        %v1406 = vpop.f32.mrf.mxu0
        %v1407 = vpop.f32.mrf.mxu0
        %v1408 = vadd.f32 %v1248, %v1407
        %v1409 = vpop.f32.mrf.mxu0
        %1410 = vmatprep.mubr.bf16.mxu0 %v1188
        %1411 = vmatmul.mubr.bf16.gmra.mxu0 %v1187
        %v1412 = vpop.f32.mrf.mxu0
        %v1413 = vadd.f32 %v1248, %v1412
        %v1414 = vpop.f32.mrf.mxu0
        %v1415 = vpop.f32.mrf.mxu0
        %v1416 = vadd.f32 %v1248, %v1415
        %v1417 = vpop.f32.mrf.mxu0
        %1418 = vmatprep.mubr.bf16.mxu0 %v1190
        %1419 = vmatmul.mubr.bf16.gmra.mxu0 %v1189
        %v1420 = vpop.f32.mrf.mxu0
        %v1421 = vadd.f32 %v1248, %v1420
        %v1422 = vpop.f32.mrf.mxu0
        %v1423 = vpop.f32.mrf.mxu0
        %v1424 = vadd.f32 %v1248, %v1423
        %v1425 = vpop.f32.mrf.mxu0
        %1426 = vmatprep.mubr.bf16.mxu0 %v1192
        %1427 = vmatmul.mubr.bf16.gmra.mxu0 %v1191
        %v1428 = vpop.f32.mrf.mxu0
        %v1429 = vadd.f32 %v1248, %v1428
        %v1430 = vpop.f32.mrf.mxu0
        %v1431 = vpop.f32.mrf.mxu0
        %v1432 = vadd.f32 %v1248, %v1431
        %v1433 = vpop.f32.mrf.mxu0
        %1434 = vmatprep.mubr.bf16.mxu0 %v1194
        %1435 = vmatmul.mubr.bf16.gmra.mxu0 %v1193
        %v1436 = vpop.f32.mrf.mxu0
        %v1437 = vadd.f32 %v1248, %v1436
        %v1438 = vpop.f32.mrf.mxu0
        %v1439 = vpop.f32.mrf.mxu0
        %v1440 = vadd.f32 %v1248, %v1439
        %v1441 = vpop.f32.mrf.mxu0
        %1442 = vmatprep.mubr.bf16.mxu0 %v1196
        %1443 = vmatmul.mubr.bf16.gmra.mxu0 %v1195
        %v1444 = vpop.f32.mrf.mxu0
        %v1445 = vadd.f32 %v1248, %v1444
        %v1446 = vpop.f32.mrf.mxu0
        %v1447 = vpop.f32.mrf.mxu0
        %v1448 = vadd.f32 %v1248, %v1447
        %v1449 = vpop.f32.mrf.mxu0
        %1450 = vmatprep.mubr.bf16.mxu0 %v1198
        %1451 = vmatmul.mubr.bf16.gmra.mxu0 %v1197
        %v1452 = vpop.f32.mrf.mxu0
        %v1453 = vadd.f32 %v1248, %v1452
        %v1454 = vpop.f32.mrf.mxu0
        %v1455 = vpop.f32.mrf.mxu0
        %v1456 = vadd.f32 %v1248, %v1455
        %v1457 = vpop.f32.mrf.mxu0
        %1458 = vmatprep.mubr.bf16.mxu0 %v1200
        %1459 = vmatmul.mubr.bf16.gmra.mxu0 %v1199
        %v1460 = vpop.f32.mrf.mxu0
        %v1461 = vadd.f32 %v1248, %v1460
        %v1462 = vpop.f32.mrf.mxu0
        %v1463 = vpop.f32.mrf.mxu0
        %v1464 = vadd.f32 %v1248, %v1463
        %v1465 = vpop.f32.mrf.mxu0
        %1466 = vmatprep.mubr.bf16.mxu0 %v1202
        %1467 = vmatmul.mubr.bf16.gmra.mxu0 %v1201
        %v1468 = vpop.f32.mrf.mxu0
        %v1469 = vadd.f32 %v1248, %v1468
        %v1470 = vpop.f32.mrf.mxu0
        %v1471 = vpop.f32.mrf.mxu0
        %v1472 = vadd.f32 %v1248, %v1471
        %v1473 = vpop.f32.mrf.mxu0
        %1474 = vmatprep.mubr.bf16.mxu0 %v1204
        %1475 = vmatmul.mubr.bf16.gmra.mxu0 %v1203
        %v1476 = vpop.f32.mrf.mxu0
        %v1477 = vadd.f32 %v1248, %v1476
        %v1478 = vpop.f32.mrf.mxu0
        %v1479 = vpop.f32.mrf.mxu0
        %v1480 = vadd.f32 %v1248, %v1479
        %v1481 = vpop.f32.mrf.mxu0
        %1482 = vmatprep.mubr.bf16.mxu0 %v1206
        %1483 = vmatmul.mubr.bf16.gmra.mxu0 %v1205
        %v1484 = vpop.f32.mrf.mxu0
        %v1485 = vadd.f32 %v1248, %v1484
        %v1486 = vpop.f32.mrf.mxu0
        %v1487 = vpop.f32.mrf.mxu0
        %v1488 = vadd.f32 %v1248, %v1487
        %v1489 = vpop.f32.mrf.mxu0
        %1490 = vmatprep.mubr.bf16.mxu0 %v1208
        %1491 = vmatmul.mubr.bf16.gmra.mxu0 %v1207
        %v1492 = vpop.f32.mrf.mxu0
        %v1493 = vadd.f32 %v1248, %v1492
        %v1494 = vpop.f32.mrf.mxu0
        %v1495 = vpop.f32.mrf.mxu0
        %v1496 = vadd.f32 %v1248, %v1495
        %v1497 = vpop.f32.mrf.mxu0
        %1498 = vmatprep.mubr.bf16.mxu0 %v1210
        %1499 = vmatmul.mubr.bf16.gmra.mxu0 %v1209
        %v1500 = vpop.f32.mrf.mxu0
        %v1501 = vadd.f32 %v1248, %v1500
        %v1502 = vpop.f32.mrf.mxu0
        %v1503 = vpop.f32.mrf.mxu0
        %v1504 = vadd.f32 %v1248, %v1503
        %v1505 = vpop.f32.mrf.mxu0
        %1506 = vdwg.mxu0
        %v1507 = vmax.f32 %v1381, 0.0
        %v1508 = vmax.f32 %v1384, 0.0
        %v1509 = vmax.f32 %v1389, 0.0
        %v1510 = vmax.f32 %v1392, 0.0
        %v1511 = vmax.f32 %v1397, 0.0
        %v1512 = vmax.f32 %v1400, 0.0
        %v1513 = vmax.f32 %v1405, 0.0
        %v1514 = vmax.f32 %v1408, 0.0
        %v1515 = vmax.f32 %v1413, 0.0
        %v1516 = vmax.f32 %v1416, 0.0
        %v1517 = vmax.f32 %v1421, 0.0
        %v1518 = vmax.f32 %v1424, 0.0
        %v1519 = vmax.f32 %v1429, 0.0
        %v1520 = vmax.f32 %v1432, 0.0
        %v1521 = vmax.f32 %v1437, 0.0
        %v1522 = vmax.f32 %v1440, 0.0
        %v1523 = vmax.f32 %v1445, 0.0
        %v1524 = vmax.f32 %v1448, 0.0
        %v1525 = vmax.f32 %v1453, 0.0
        %v1526 = vmax.f32 %v1456, 0.0
        %v1527 = vmax.f32 %v1461, 0.0
        %v1528 = vmax.f32 %v1464, 0.0
        %v1529 = vmax.f32 %v1469, 0.0
        %v1530 = vmax.f32 %v1472, 0.0
        %v1531 = vmax.f32 %v1477, 0.0
        %v1532 = vmax.f32 %v1480, 0.0
        %v1533 = vmax.f32 %v1485, 0.0
        %v1534 = vmax.f32 %v1488, 0.0
        %v1535 = vmax.f32 %v1493, 0.0
        %v1536 = vmax.f32 %v1496, 0.0
        %v1537 = vmax.f32 %v1501, 0.0
        %v1538 = vmax.f32 %v1504, 0.0
        %v1539 = vpack.c.bf16 %v1508, %v1507
        %v1540 = vpack.c.bf16 %v1510, %v1509
        %v1541 = vpack.c.bf16 %v1512, %v1511
        %v1542 = vpack.c.bf16 %v1514, %v1513
        %v1543 = vpack.c.bf16 %v1516, %v1515
        %v1544 = vpack.c.bf16 %v1518, %v1517
        %v1545 = vpack.c.bf16 %v1520, %v1519
        %v1546 = vpack.c.bf16 %v1522, %v1521
        %v1547 = vpack.c.bf16 %v1524, %v1523
        %v1548 = vpack.c.bf16 %v1526, %v1525
        %v1549 = vpack.c.bf16 %v1528, %v1527
        %v1550 = vpack.c.bf16 %v1530, %v1529
        %v1551 = vpack.c.bf16 %v1532, %v1531
        %v1552 = vpack.c.bf16 %v1534, %v1533
        %v1553 = vpack.c.bf16 %v1536, %v1535
        %v1554 = vpack.c.bf16 %v1538, %v1537
        %v1555 = vld [vmem:[#allocation8] sm:$0xf]
        %v1556 = vld [vmem:[#allocation8 + $0x4] sm:$0xf]
        %v1557 = vld [vmem:[#allocation8 + $0x8] sm:$0xf]
        %v1558 = vld [vmem:[#allocation8 + $0xc] sm:$0xf]
        %v1559 = vld [vmem:[#allocation8 + $0x10] sm:$0xf]
        %v1560 = vld [vmem:[#allocation8 + $0x14] sm:$0xf]
        %v1561 = vld [vmem:[#allocation8 + $0x18] sm:$0xf]
        %v1562 = vld [vmem:[#allocation8 + $0x1c] sm:$0xf]
        %v1563 = vld [vmem:[#allocation8 + $0x20] sm:$0xf]
        %v1564 = vld [vmem:[#allocation8 + $0x24] sm:$0xf]
        %v1565 = vld [vmem:[#allocation8 + $0x28] sm:$0xf]
        %v1566 = vld [vmem:[#allocation8 + $0x2c] sm:$0xf]
        %v1567 = vld [vmem:[#allocation8 + $0x30] sm:$0xf]
        %v1568 = vld [vmem:[#allocation8 + $0x34] sm:$0xf]
        %v1569 = vld [vmem:[#allocation8 + $0x38] sm:$0xf]
        %v1570 = vld [vmem:[#allocation8 + $0x3c] sm:$0xf]
        %v1571 = vld [vmem:[%s6] sm:$0x1]
        %v1573 = vlaneseq
        %v1574 = vshrl.u32 %v1573, 7
        %v1575 = vsub.s32 0, %v1574
        %v1576 = vrot.slane %v1571, %v1575
        %v1594 = vunpack.c.l.b16 %v1555
        %v1595 = vunpack.c.l.b16 %v1556
        %v1596 = vunpack.c.l.b16 %v1557
        %v1597 = vunpack.c.l.b16 %v1558
        %v1598 = vunpack.c.l.b16 %v1559
        %v1599 = vunpack.c.l.b16 %v1560
        %v1600 = vunpack.c.l.b16 %v1561
        %v1601 = vunpack.c.l.b16 %v1562
        %v1602 = vunpack.c.l.b16 %v1563
        %v1603 = vunpack.c.l.b16 %v1564
        %v1604 = vunpack.c.l.b16 %v1565
        %v1605 = vunpack.c.l.b16 %v1566
        %v1606 = vunpack.c.l.b16 %v1567
        %v1607 = vunpack.c.l.b16 %v1568
        %v1608 = vunpack.c.l.b16 %v1569
        %v1609 = vunpack.c.l.b16 %v1570
        %v1610 = vpack.c.b16 %v1595, %v1594
        %v1611 = vpack.c.b16 %v1597, %v1596
        %v1612 = vpack.c.b16 %v1599, %v1598
        %v1613 = vpack.c.b16 %v1601, %v1600
        %v1614 = vpack.c.b16 %v1603, %v1602
        %v1615 = vpack.c.b16 %v1605, %v1604
        %v1616 = vpack.c.b16 %v1607, %v1606
        %v1617 = vpack.c.b16 %v1609, %v1608
        %1626 = vmatprep.subr.bf16.mxu0 0
        %1627 = vmatpush1.bf16.msra.mxu0 %v1617
        %1628 = vmatprep.subr.bf16.mxu0 0
        %1629 = vmatpush1.bf16.msra.mxu0 %v1616
        %1630 = vmatprep.subr.bf16.mxu0 0
        %1631 = vmatpush1.bf16.msra.mxu0 %v1615
        %1632 = vmatprep.subr.bf16.mxu0 0
        %1633 = vmatpush1.bf16.msra.mxu0 %v1614
        %1634 = vmatprep.subr.bf16.mxu0 0
        %1635 = vmatpush1.bf16.msra.mxu0 %v1613
        %1636 = vmatprep.subr.bf16.mxu0 0
        %1637 = vmatpush1.bf16.msra.mxu0 %v1612
        %1638 = vmatprep.subr.bf16.mxu0 0
        %1639 = vmatpush1.bf16.msra.mxu0 %v1611
        %1640 = vmatprep.subr.bf16.mxu0 0
        %1641 = vmatpush1.bf16.msra.mxu0 %v1610
        %1642 = vmatprep.subr.bf16.mxu0 0
        %1643 = vmatpush2.bf16.msra.mxu0 0
        %1644 = vmatprep.subr.bf16.mxu0 0
        %1645 = vmatpush2.bf16.msra.mxu0 0
        %1646 = vmatprep.subr.bf16.mxu0 0
        %1647 = vmatpush2.bf16.msra.mxu0 0
        %1648 = vmatprep.subr.bf16.mxu0 0
        %1649 = vmatpush2.bf16.msra.mxu0 0
        %1650 = vmatprep.subr.bf16.mxu0 0
        %1651 = vmatpush2.bf16.msra.mxu0 0
        %1652 = vmatprep.subr.bf16.mxu0 0
        %1653 = vmatpush2.bf16.msra.mxu0 0
        %1654 = vmatprep.subr.bf16.mxu0 0
        %1655 = vmatpush2.bf16.msra.mxu0 0
        %1656 = vmatprep.subr.bf16.mxu0 0
        %1657 = vmatpush2.bf16.msra.mxu0 0
        %1658 = vmatprep.mubr.bf16.mxu0 0
        %1659 = vmatmul.mubr.bf16.gmra.mxu0 %v1539
        %v1660 = vpop.f32.mrf.mxu0
        %v1661 = vadd.f32 %v1576, %v1660
        %v1662 = vpop.f32.mrf.mxu0
        %v1663 = vpop.f32.mrf.mxu0
        %v1664 = vadd.f32 %v1576, %v1663
        %v1665 = vpop.f32.mrf.mxu0
        %1666 = vmatprep.mubr.bf16.mxu0 0
        %1667 = vmatmul.mubr.bf16.gmra.mxu0 %v1540
        %v1668 = vpop.f32.mrf.mxu0
        %v1669 = vadd.f32 %v1576, %v1668
        %v1670 = vpop.f32.mrf.mxu0
        %v1671 = vpop.f32.mrf.mxu0
        %v1672 = vadd.f32 %v1576, %v1671
        %v1673 = vpop.f32.mrf.mxu0
        %1674 = vmatprep.mubr.bf16.mxu0 0
        %1675 = vmatmul.mubr.bf16.gmra.mxu0 %v1541
        %v1676 = vpop.f32.mrf.mxu0
        %v1677 = vadd.f32 %v1576, %v1676
        %v1678 = vpop.f32.mrf.mxu0
        %v1679 = vpop.f32.mrf.mxu0
        %v1680 = vadd.f32 %v1576, %v1679
        %v1681 = vpop.f32.mrf.mxu0
        %1682 = vmatprep.mubr.bf16.mxu0 0
        %1683 = vmatmul.mubr.bf16.gmra.mxu0 %v1542
        %v1684 = vpop.f32.mrf.mxu0
        %v1685 = vadd.f32 %v1576, %v1684
        %v1686 = vpop.f32.mrf.mxu0
        %v1687 = vpop.f32.mrf.mxu0
        %v1688 = vadd.f32 %v1576, %v1687
        %v1689 = vpop.f32.mrf.mxu0
        %1690 = vmatprep.mubr.bf16.mxu0 0
        %1691 = vmatmul.mubr.bf16.gmra.mxu0 %v1543
        %v1692 = vpop.f32.mrf.mxu0
        %v1693 = vadd.f32 %v1576, %v1692
        %v1694 = vpop.f32.mrf.mxu0
        %v1695 = vpop.f32.mrf.mxu0
        %v1696 = vadd.f32 %v1576, %v1695
        %v1697 = vpop.f32.mrf.mxu0
        %1698 = vmatprep.mubr.bf16.mxu0 0
        %1699 = vmatmul.mubr.bf16.gmra.mxu0 %v1544
        %v1700 = vpop.f32.mrf.mxu0
        %v1701 = vadd.f32 %v1576, %v1700
        %v1702 = vpop.f32.mrf.mxu0
        %v1703 = vpop.f32.mrf.mxu0
        %v1704 = vadd.f32 %v1576, %v1703
        %v1705 = vpop.f32.mrf.mxu0
        %1706 = vmatprep.mubr.bf16.mxu0 0
        %1707 = vmatmul.mubr.bf16.gmra.mxu0 %v1545
        %v1708 = vpop.f32.mrf.mxu0
        %v1709 = vadd.f32 %v1576, %v1708
        %v1710 = vpop.f32.mrf.mxu0
        %v1711 = vpop.f32.mrf.mxu0
        %v1712 = vadd.f32 %v1576, %v1711
        %v1713 = vpop.f32.mrf.mxu0
        %1714 = vmatprep.mubr.bf16.mxu0 0
        %1715 = vmatmul.mubr.bf16.gmra.mxu0 %v1546
        %v1716 = vpop.f32.mrf.mxu0
        %v1717 = vadd.f32 %v1576, %v1716
        %v1718 = vpop.f32.mrf.mxu0
        %v1719 = vpop.f32.mrf.mxu0
        %v1720 = vadd.f32 %v1576, %v1719
        %v1721 = vpop.f32.mrf.mxu0
        %1722 = vmatprep.mubr.bf16.mxu0 0
        %1723 = vmatmul.mubr.bf16.gmra.mxu0 %v1547
        %v1724 = vpop.f32.mrf.mxu0
        %v1725 = vadd.f32 %v1576, %v1724
        %v1726 = vpop.f32.mrf.mxu0
        %v1727 = vpop.f32.mrf.mxu0
        %v1728 = vadd.f32 %v1576, %v1727
        %v1729 = vpop.f32.mrf.mxu0
        %1730 = vmatprep.mubr.bf16.mxu0 0
        %1731 = vmatmul.mubr.bf16.gmra.mxu0 %v1548
        %v1732 = vpop.f32.mrf.mxu0
        %v1733 = vadd.f32 %v1576, %v1732
        %v1734 = vpop.f32.mrf.mxu0
        %v1735 = vpop.f32.mrf.mxu0
        %v1736 = vadd.f32 %v1576, %v1735
        %v1737 = vpop.f32.mrf.mxu0
        %1738 = vmatprep.mubr.bf16.mxu0 0
        %1739 = vmatmul.mubr.bf16.gmra.mxu0 %v1549
        %v1740 = vpop.f32.mrf.mxu0
        %v1741 = vadd.f32 %v1576, %v1740
        %v1742 = vpop.f32.mrf.mxu0
        %v1743 = vpop.f32.mrf.mxu0
        %v1744 = vadd.f32 %v1576, %v1743
        %v1745 = vpop.f32.mrf.mxu0
        %1746 = vmatprep.mubr.bf16.mxu0 0
        %1747 = vmatmul.mubr.bf16.gmra.mxu0 %v1550
        %v1748 = vpop.f32.mrf.mxu0
        %v1749 = vadd.f32 %v1576, %v1748
        %v1750 = vpop.f32.mrf.mxu0
        %v1751 = vpop.f32.mrf.mxu0
        %v1752 = vadd.f32 %v1576, %v1751
        %v1753 = vpop.f32.mrf.mxu0
        %1754 = vmatprep.mubr.bf16.mxu0 0
        %1755 = vmatmul.mubr.bf16.gmra.mxu0 %v1551
        %v1756 = vpop.f32.mrf.mxu0
        %v1757 = vadd.f32 %v1576, %v1756
        %v1758 = vpop.f32.mrf.mxu0
        %v1759 = vpop.f32.mrf.mxu0
        %v1760 = vadd.f32 %v1576, %v1759
        %v1761 = vpop.f32.mrf.mxu0
        %1762 = vmatprep.mubr.bf16.mxu0 0
        %1763 = vmatmul.mubr.bf16.gmra.mxu0 %v1552
        %v1764 = vpop.f32.mrf.mxu0
        %v1765 = vadd.f32 %v1576, %v1764
        %v1766 = vpop.f32.mrf.mxu0
        %v1767 = vpop.f32.mrf.mxu0
        %v1768 = vadd.f32 %v1576, %v1767
        %v1769 = vpop.f32.mrf.mxu0
        %1770 = vmatprep.mubr.bf16.mxu0 0
        %1771 = vmatmul.mubr.bf16.gmra.mxu0 %v1553
        %v1772 = vpop.f32.mrf.mxu0
        %v1773 = vadd.f32 %v1576, %v1772
        %v1774 = vpop.f32.mrf.mxu0
        %v1775 = vpop.f32.mrf.mxu0
        %v1776 = vadd.f32 %v1576, %v1775
        %v1777 = vpop.f32.mrf.mxu0
        %1778 = vmatprep.mubr.bf16.mxu0 0
        %1779 = vmatmul.mubr.bf16.gmra.mxu0 %v1554
        %v1780 = vpop.f32.mrf.mxu0
        %v1781 = vadd.f32 %v1576, %v1780
        %v1782 = vpop.f32.mrf.mxu0
        %v1783 = vpop.f32.mrf.mxu0
        %v1784 = vadd.f32 %v1576, %v1783
        %v1785 = vpop.f32.mrf.mxu0
        %1786 = vdwg.mxu0
        %v1787 = vmax.f32 %v1661, 0.0
        %v1788 = vmax.f32 %v1664, 0.0
        %v1789 = vmax.f32 %v1669, 0.0
        %v1790 = vmax.f32 %v1672, 0.0
        %v1791 = vmax.f32 %v1677, 0.0
        %v1792 = vmax.f32 %v1680, 0.0
        %v1793 = vmax.f32 %v1685, 0.0
        %v1794 = vmax.f32 %v1688, 0.0
        %v1795 = vmax.f32 %v1693, 0.0
        %v1796 = vmax.f32 %v1696, 0.0
        %v1797 = vmax.f32 %v1701, 0.0
        %v1798 = vmax.f32 %v1704, 0.0
        %v1799 = vmax.f32 %v1709, 0.0
        %v1800 = vmax.f32 %v1712, 0.0
        %v1801 = vmax.f32 %v1717, 0.0
        %v1802 = vmax.f32 %v1720, 0.0
        %v1803 = vmax.f32 %v1725, 0.0
        %v1804 = vmax.f32 %v1728, 0.0
        %v1805 = vmax.f32 %v1733, 0.0
        %v1806 = vmax.f32 %v1736, 0.0
        %v1807 = vmax.f32 %v1741, 0.0
        %v1808 = vmax.f32 %v1744, 0.0
        %v1809 = vmax.f32 %v1749, 0.0
        %v1810 = vmax.f32 %v1752, 0.0
        %v1811 = vmax.f32 %v1757, 0.0
        %v1812 = vmax.f32 %v1760, 0.0
        %v1813 = vmax.f32 %v1765, 0.0
        %v1814 = vmax.f32 %v1768, 0.0
        %v1815 = vmax.f32 %v1773, 0.0
        %v1816 = vmax.f32 %v1776, 0.0
        %v1817 = vmax.f32 %v1781, 0.0
        %v1818 = vmax.f32 %v1784, 0.0
        %v1819 = vpack.c.bf16 %v1788, %v1787
        %v1820 = vpack.c.bf16 %v1790, %v1789
        %v1821 = vpack.c.bf16 %v1792, %v1791
        %v1822 = vpack.c.bf16 %v1794, %v1793
        %v1823 = vpack.c.bf16 %v1796, %v1795
        %v1824 = vpack.c.bf16 %v1798, %v1797
        %v1825 = vpack.c.bf16 %v1800, %v1799
        %v1826 = vpack.c.bf16 %v1802, %v1801
        %v1827 = vpack.c.bf16 %v1804, %v1803
        %v1828 = vpack.c.bf16 %v1806, %v1805
        %v1829 = vpack.c.bf16 %v1808, %v1807
        %v1830 = vpack.c.bf16 %v1810, %v1809
        %v1831 = vpack.c.bf16 %v1812, %v1811
        %v1832 = vpack.c.bf16 %v1814, %v1813
        %v1833 = vpack.c.bf16 %v1816, %v1815
        %v1834 = vpack.c.bf16 %v1818, %v1817
        %v1835 = vld [vmem:[#allocation10] sm:$0xf]
        %v1836 = vld [vmem:[#allocation10 + $0x4] sm:$0xf]
        %v1837 = vld [vmem:[#allocation10 + $0x8] sm:$0xf]
        %v1838 = vld [vmem:[#allocation10 + $0xc] sm:$0xf]
        %v1839 = vld [vmem:[#allocation10 + $0x10] sm:$0xf]
        %v1840 = vld [vmem:[#allocation10 + $0x14] sm:$0xf]
        %v1841 = vld [vmem:[#allocation10 + $0x18] sm:$0xf]
        %v1842 = vld [vmem:[#allocation10 + $0x1c] sm:$0xf]
        %v1843 = vld [vmem:[#allocation10 + $0x20] sm:$0xf]
        %v1844 = vld [vmem:[#allocation10 + $0x24] sm:$0xf]
        %v1845 = vld [vmem:[#allocation10 + $0x28] sm:$0xf]
        %v1846 = vld [vmem:[#allocation10 + $0x2c] sm:$0xf]
        %v1847 = vld [vmem:[#allocation10 + $0x30] sm:$0xf]
        %v1848 = vld [vmem:[#allocation10 + $0x34] sm:$0xf]
        %v1849 = vld [vmem:[#allocation10 + $0x38] sm:$0xf]
        %v1850 = vld [vmem:[#allocation10 + $0x3c] sm:$0xf]
        %v1851 = vld [vmem:[%s8] sm:$0x1]
        %v1853 = vlaneseq
        %v1854 = vshrl.u32 %v1853, 7
        %v1855 = vsub.s32 0, %v1854
        %v1856 = vrot.slane %v1851, %v1855
        %v1874 = vunpack.c.l.b16 %v1835
        %v1875 = vunpack.c.l.b16 %v1836
        %v1876 = vunpack.c.l.b16 %v1837
        %v1877 = vunpack.c.l.b16 %v1838
        %v1878 = vunpack.c.l.b16 %v1839
        %v1879 = vunpack.c.l.b16 %v1840
        %v1880 = vunpack.c.l.b16 %v1841
        %v1881 = vunpack.c.l.b16 %v1842
        %v1882 = vunpack.c.l.b16 %v1843
        %v1883 = vunpack.c.l.b16 %v1844
        %v1884 = vunpack.c.l.b16 %v1845
        %v1885 = vunpack.c.l.b16 %v1846
        %v1886 = vunpack.c.l.b16 %v1847
        %v1887 = vunpack.c.l.b16 %v1848
        %v1888 = vunpack.c.l.b16 %v1849
        %v1889 = vunpack.c.l.b16 %v1850
        %v1890 = vpack.c.b16 %v1875, %v1874
        %v1891 = vpack.c.b16 %v1877, %v1876
        %v1892 = vpack.c.b16 %v1879, %v1878
        %v1893 = vpack.c.b16 %v1881, %v1880
        %v1894 = vpack.c.b16 %v1883, %v1882
        %v1895 = vpack.c.b16 %v1885, %v1884
        %v1896 = vpack.c.b16 %v1887, %v1886
        %v1897 = vpack.c.b16 %v1889, %v1888
        %1906 = vmatprep.subr.bf16.mxu0 0
        %1907 = vmatpush1.bf16.msra.mxu0 %v1897
        %1908 = vmatprep.subr.bf16.mxu0 0
        %1909 = vmatpush1.bf16.msra.mxu0 %v1896
        %1910 = vmatprep.subr.bf16.mxu0 0
        %1911 = vmatpush1.bf16.msra.mxu0 %v1895
        %1912 = vmatprep.subr.bf16.mxu0 0
        %1913 = vmatpush1.bf16.msra.mxu0 %v1894
        %1914 = vmatprep.subr.bf16.mxu0 0
        %1915 = vmatpush1.bf16.msra.mxu0 %v1893
        %1916 = vmatprep.subr.bf16.mxu0 0
        %1917 = vmatpush1.bf16.msra.mxu0 %v1892
        %1918 = vmatprep.subr.bf16.mxu0 0
        %1919 = vmatpush1.bf16.msra.mxu0 %v1891
        %1920 = vmatprep.subr.bf16.mxu0 0
        %1921 = vmatpush1.bf16.msra.mxu0 %v1890
        %1922 = vmatprep.subr.bf16.mxu0 0
        %1923 = vmatpush2.bf16.msra.mxu0 0
        %1924 = vmatprep.subr.bf16.mxu0 0
        %1925 = vmatpush2.bf16.msra.mxu0 0
        %1926 = vmatprep.subr.bf16.mxu0 0
        %1927 = vmatpush2.bf16.msra.mxu0 0
        %1928 = vmatprep.subr.bf16.mxu0 0
        %1929 = vmatpush2.bf16.msra.mxu0 0
        %1930 = vmatprep.subr.bf16.mxu0 0
        %1931 = vmatpush2.bf16.msra.mxu0 0
        %1932 = vmatprep.subr.bf16.mxu0 0
        %1933 = vmatpush2.bf16.msra.mxu0 0
        %1934 = vmatprep.subr.bf16.mxu0 0
        %1935 = vmatpush2.bf16.msra.mxu0 0
        %1936 = vmatprep.subr.bf16.mxu0 0
        %1937 = vmatpush2.bf16.msra.mxu0 0
        %1938 = vmatprep.mubr.bf16.mxu0 0
        %1939 = vmatmul.mubr.bf16.gmra.mxu0 %v1819
        %v1940 = vpop.f32.mrf.mxu0
        %v1941 = vadd.f32 %v1856, %v1940
        %v1942 = vpop.f32.mrf.mxu0
        %v1943 = vpop.f32.mrf.mxu0
        %v1944 = vadd.f32 %v1856, %v1943
        %v1945 = vpop.f32.mrf.mxu0
        %1946 = vmatprep.mubr.bf16.mxu0 0
        %1947 = vmatmul.mubr.bf16.gmra.mxu0 %v1820
        %v1948 = vpop.f32.mrf.mxu0
        %v1949 = vadd.f32 %v1856, %v1948
        %v1950 = vpop.f32.mrf.mxu0
        %v1951 = vpop.f32.mrf.mxu0
        %v1952 = vadd.f32 %v1856, %v1951
        %v1953 = vpop.f32.mrf.mxu0
        %1954 = vmatprep.mubr.bf16.mxu0 0
        %1955 = vmatmul.mubr.bf16.gmra.mxu0 %v1821
        %v1956 = vpop.f32.mrf.mxu0
        %v1957 = vadd.f32 %v1856, %v1956
        %v1958 = vpop.f32.mrf.mxu0
        %v1959 = vpop.f32.mrf.mxu0
        %v1960 = vadd.f32 %v1856, %v1959
        %v1961 = vpop.f32.mrf.mxu0
        %1962 = vmatprep.mubr.bf16.mxu0 0
        %1963 = vmatmul.mubr.bf16.gmra.mxu0 %v1822
        %v1964 = vpop.f32.mrf.mxu0
        %v1965 = vadd.f32 %v1856, %v1964
        %v1966 = vpop.f32.mrf.mxu0
        %v1967 = vpop.f32.mrf.mxu0
        %v1968 = vadd.f32 %v1856, %v1967
        %v1969 = vpop.f32.mrf.mxu0
        %1970 = vmatprep.mubr.bf16.mxu0 0
        %1971 = vmatmul.mubr.bf16.gmra.mxu0 %v1823
        %v1972 = vpop.f32.mrf.mxu0
        %v1973 = vadd.f32 %v1856, %v1972
        %v1974 = vpop.f32.mrf.mxu0
        %v1975 = vpop.f32.mrf.mxu0
        %v1976 = vadd.f32 %v1856, %v1975
        %v1977 = vpop.f32.mrf.mxu0
        %1978 = vmatprep.mubr.bf16.mxu0 0
        %1979 = vmatmul.mubr.bf16.gmra.mxu0 %v1824
        %v1980 = vpop.f32.mrf.mxu0
        %v1981 = vadd.f32 %v1856, %v1980
        %v1982 = vpop.f32.mrf.mxu0
        %v1983 = vpop.f32.mrf.mxu0
        %v1984 = vadd.f32 %v1856, %v1983
        %v1985 = vpop.f32.mrf.mxu0
        %1986 = vmatprep.mubr.bf16.mxu0 0
        %1987 = vmatmul.mubr.bf16.gmra.mxu0 %v1825
        %v1988 = vpop.f32.mrf.mxu0
        %v1989 = vadd.f32 %v1856, %v1988
        %v1990 = vpop.f32.mrf.mxu0
        %v1991 = vpop.f32.mrf.mxu0
        %v1992 = vadd.f32 %v1856, %v1991
        %v1993 = vpop.f32.mrf.mxu0
        %1994 = vmatprep.mubr.bf16.mxu0 0
        %1995 = vmatmul.mubr.bf16.gmra.mxu0 %v1826
        %v1996 = vpop.f32.mrf.mxu0
        %v1997 = vadd.f32 %v1856, %v1996
        %v1998 = vpop.f32.mrf.mxu0
        %v1999 = vpop.f32.mrf.mxu0
        %v2000 = vadd.f32 %v1856, %v1999
        %v2001 = vpop.f32.mrf.mxu0
        %2002 = vmatprep.mubr.bf16.mxu0 0
        %2003 = vmatmul.mubr.bf16.gmra.mxu0 %v1827
        %v2004 = vpop.f32.mrf.mxu0
        %v2005 = vadd.f32 %v1856, %v2004
        %v2006 = vpop.f32.mrf.mxu0
        %v2007 = vpop.f32.mrf.mxu0
        %v2008 = vadd.f32 %v1856, %v2007
        %v2009 = vpop.f32.mrf.mxu0
        %2010 = vmatprep.mubr.bf16.mxu0 0
        %2011 = vmatmul.mubr.bf16.gmra.mxu0 %v1828
        %v2012 = vpop.f32.mrf.mxu0
        %v2013 = vadd.f32 %v1856, %v2012
        %v2014 = vpop.f32.mrf.mxu0
        %v2015 = vpop.f32.mrf.mxu0
        %v2016 = vadd.f32 %v1856, %v2015
        %v2017 = vpop.f32.mrf.mxu0
        %2018 = vmatprep.mubr.bf16.mxu0 0
        %2019 = vmatmul.mubr.bf16.gmra.mxu0 %v1829
        %v2020 = vpop.f32.mrf.mxu0
        %v2021 = vadd.f32 %v1856, %v2020
        %v2022 = vpop.f32.mrf.mxu0
        %v2023 = vpop.f32.mrf.mxu0
        %v2024 = vadd.f32 %v1856, %v2023
        %v2025 = vpop.f32.mrf.mxu0
        %2026 = vmatprep.mubr.bf16.mxu0 0
        %2027 = vmatmul.mubr.bf16.gmra.mxu0 %v1830
        %v2028 = vpop.f32.mrf.mxu0
        %v2029 = vadd.f32 %v1856, %v2028
        %v2030 = vpop.f32.mrf.mxu0
        %v2031 = vpop.f32.mrf.mxu0
        %v2032 = vadd.f32 %v1856, %v2031
        %v2033 = vpop.f32.mrf.mxu0
        %2034 = vmatprep.mubr.bf16.mxu0 0
        %2035 = vmatmul.mubr.bf16.gmra.mxu0 %v1831
        %v2036 = vpop.f32.mrf.mxu0
        %v2037 = vadd.f32 %v1856, %v2036
        %v2038 = vpop.f32.mrf.mxu0
        %v2039 = vpop.f32.mrf.mxu0
        %v2040 = vadd.f32 %v1856, %v2039
        %v2041 = vpop.f32.mrf.mxu0
        %2042 = vmatprep.mubr.bf16.mxu0 0
        %2043 = vmatmul.mubr.bf16.gmra.mxu0 %v1832
        %v2044 = vpop.f32.mrf.mxu0
        %v2045 = vadd.f32 %v1856, %v2044
        %v2046 = vpop.f32.mrf.mxu0
        %v2047 = vpop.f32.mrf.mxu0
        %v2048 = vadd.f32 %v1856, %v2047
        %v2049 = vpop.f32.mrf.mxu0
        %2050 = vmatprep.mubr.bf16.mxu0 0
        %2051 = vmatmul.mubr.bf16.gmra.mxu0 %v1833
        %v2052 = vpop.f32.mrf.mxu0
        %v2053 = vadd.f32 %v1856, %v2052
        %v2054 = vpop.f32.mrf.mxu0
        %v2055 = vpop.f32.mrf.mxu0
        %v2056 = vadd.f32 %v1856, %v2055
        %v2057 = vpop.f32.mrf.mxu0
        %2058 = vmatprep.mubr.bf16.mxu0 0
        %2059 = vmatmul.mubr.bf16.gmra.mxu0 %v1834
        %v2060 = vpop.f32.mrf.mxu0
        %v2061 = vadd.f32 %v1856, %v2060
        %v2062 = vpop.f32.mrf.mxu0
        %v2063 = vpop.f32.mrf.mxu0
        %v2064 = vadd.f32 %v1856, %v2063
        %v2065 = vpop.f32.mrf.mxu0
        %2066 = vdwg.mxu0
        %v2067 = vpack.c.bf16 %v1944, %v1941
        %v2068 = vpack.c.bf16 %v1952, %v1949
        %v2069 = vpack.c.bf16 %v1960, %v1957
        %v2070 = vpack.c.bf16 %v1968, %v1965
        %v2071 = vpack.c.bf16 %v1976, %v1973
        %v2072 = vpack.c.bf16 %v1984, %v1981
        %v2073 = vpack.c.bf16 %v1992, %v1989
        %v2074 = vpack.c.bf16 %v2000, %v1997
        %v2075 = vpack.c.bf16 %v2008, %v2005
        %v2076 = vpack.c.bf16 %v2016, %v2013
        %v2077 = vpack.c.bf16 %v2024, %v2021
        %v2078 = vpack.c.bf16 %v2032, %v2029
        %v2079 = vpack.c.bf16 %v2040, %v2037
        %v2080 = vpack.c.bf16 %v2048, %v2045
        %v2081 = vpack.c.bf16 %v2056, %v2053
        %v2082 = vpack.c.bf16 %v2064, %v2061
        %v2083 = vld [vmem:[#allocation11] sm:$0xf]
        %v2084 = vld [vmem:[#allocation11 + $0x4] sm:$0xf]
        %v2085 = vld [vmem:[#allocation11 + $0x8] sm:$0xf]
        %v2086 = vld [vmem:[#allocation11 + $0xc] sm:$0xf]
        %v2087 = vld [vmem:[#allocation11 + $0x10] sm:$0xf]
        %v2088 = vld [vmem:[#allocation11 + $0x14] sm:$0xf]
        %v2089 = vld [vmem:[#allocation11 + $0x18] sm:$0xf]
        %v2090 = vld [vmem:[#allocation11 + $0x1c] sm:$0xf]
        %v2091 = vld [vmem:[#allocation11 + $0x20] sm:$0xf]
        %v2092 = vld [vmem:[#allocation11 + $0x24] sm:$0xf]
        %v2093 = vld [vmem:[#allocation11 + $0x28] sm:$0xf]
        %v2094 = vld [vmem:[#allocation11 + $0x2c] sm:$0xf]
        %v2095 = vld [vmem:[#allocation11 + $0x30] sm:$0xf]
        %v2096 = vld [vmem:[#allocation11 + $0x34] sm:$0xf]
        %v2097 = vld [vmem:[#allocation11 + $0x38] sm:$0xf]
        %v2098 = vld [vmem:[#allocation11 + $0x3c] sm:$0xf]
        %v2099 = vld [vmem:[%s10] sm:$0x1]
        %v2101 = vlaneseq
        %v2102 = vshrl.u32 %v2101, 7
        %v2103 = vsub.s32 0, %v2102
        %v2104 = vrot.slane %v2099, %v2103
        %v2122 = vunpack.c.l.b16 %v2083
        %v2123 = vunpack.c.l.b16 %v2084
        %v2124 = vunpack.c.l.b16 %v2085
        %v2125 = vunpack.c.l.b16 %v2086
        %v2126 = vunpack.c.l.b16 %v2087
        %v2127 = vunpack.c.l.b16 %v2088
        %v2128 = vunpack.c.l.b16 %v2089
        %v2129 = vunpack.c.l.b16 %v2090
        %v2130 = vunpack.c.l.b16 %v2091
        %v2131 = vunpack.c.l.b16 %v2092
        %v2132 = vunpack.c.l.b16 %v2093
        %v2133 = vunpack.c.l.b16 %v2094
        %v2134 = vunpack.c.l.b16 %v2095
        %v2135 = vunpack.c.l.b16 %v2096
        %v2136 = vunpack.c.l.b16 %v2097
        %v2137 = vunpack.c.l.b16 %v2098
        %v2138 = vpack.c.b16 %v2123, %v2122
        %v2139 = vpack.c.b16 %v2125, %v2124
        %v2140 = vpack.c.b16 %v2127, %v2126
        %v2141 = vpack.c.b16 %v2129, %v2128
        %v2142 = vpack.c.b16 %v2131, %v2130
        %v2143 = vpack.c.b16 %v2133, %v2132
        %v2144 = vpack.c.b16 %v2135, %v2134
        %v2145 = vpack.c.b16 %v2137, %v2136
        %2154 = vmatprep.subr.bf16.mxu0 0
        %2155 = vmatpush1.bf16.msra.mxu0 %v2145
        %2156 = vmatprep.subr.bf16.mxu0 0
        %2157 = vmatpush1.bf16.msra.mxu0 %v2144
        %2158 = vmatprep.subr.bf16.mxu0 0
        %2159 = vmatpush1.bf16.msra.mxu0 %v2143
        %2160 = vmatprep.subr.bf16.mxu0 0
        %2161 = vmatpush1.bf16.msra.mxu0 %v2142
        %2162 = vmatprep.subr.bf16.mxu0 0
        %2163 = vmatpush1.bf16.msra.mxu0 %v2141
        %2164 = vmatprep.subr.bf16.mxu0 0
        %2165 = vmatpush1.bf16.msra.mxu0 %v2140
        %2166 = vmatprep.subr.bf16.mxu0 0
        %2167 = vmatpush1.bf16.msra.mxu0 %v2139
        %2168 = vmatprep.subr.bf16.mxu0 0
        %2169 = vmatpush1.bf16.msra.mxu0 %v2138
        %2170 = vmatprep.subr.bf16.mxu0 0
        %2171 = vmatpush2.bf16.msra.mxu0 0
        %2172 = vmatprep.subr.bf16.mxu0 0
        %2173 = vmatpush2.bf16.msra.mxu0 0
        %2174 = vmatprep.subr.bf16.mxu0 0
        %2175 = vmatpush2.bf16.msra.mxu0 0
        %2176 = vmatprep.subr.bf16.mxu0 0
        %2177 = vmatpush2.bf16.msra.mxu0 0
        %2178 = vmatprep.subr.bf16.mxu0 0
        %2179 = vmatpush2.bf16.msra.mxu0 0
        %2180 = vmatprep.subr.bf16.mxu0 0
        %2181 = vmatpush2.bf16.msra.mxu0 0
        %2182 = vmatprep.subr.bf16.mxu0 0
        %2183 = vmatpush2.bf16.msra.mxu0 0
        %2184 = vmatprep.subr.bf16.mxu0 0
        %2185 = vmatpush2.bf16.msra.mxu0 0
        %2186 = vmatprep.mubr.bf16.mxu0 0
        %2187 = vmatmul.mubr.bf16.gmra.mxu0 %v2067
        %v2188 = vpop.f32.mrf.mxu0
        %v2189 = vadd.f32 %v2104, %v2188
        %v2190 = vpop.f32.mrf.mxu0
        %v2191 = vpop.f32.mrf.mxu0
        %v2192 = vadd.f32 %v2104, %v2191
        %v2193 = vpop.f32.mrf.mxu0
        %2194 = vmatprep.mubr.bf16.mxu0 0
        %2195 = vmatmul.mubr.bf16.gmra.mxu0 %v2068
        %v2196 = vpop.f32.mrf.mxu0
        %v2197 = vadd.f32 %v2104, %v2196
        %v2198 = vpop.f32.mrf.mxu0
        %v2199 = vpop.f32.mrf.mxu0
        %v2200 = vadd.f32 %v2104, %v2199
        %v2201 = vpop.f32.mrf.mxu0
        %2202 = vmatprep.mubr.bf16.mxu0 0
        %2203 = vmatmul.mubr.bf16.gmra.mxu0 %v2069
        %v2204 = vpop.f32.mrf.mxu0
        %v2205 = vadd.f32 %v2104, %v2204
        %v2206 = vpop.f32.mrf.mxu0
        %v2207 = vpop.f32.mrf.mxu0
        %v2208 = vadd.f32 %v2104, %v2207
        %v2209 = vpop.f32.mrf.mxu0
        %2210 = vmatprep.mubr.bf16.mxu0 0
        %2211 = vmatmul.mubr.bf16.gmra.mxu0 %v2070
        %v2212 = vpop.f32.mrf.mxu0
        %v2213 = vadd.f32 %v2104, %v2212
        %v2214 = vpop.f32.mrf.mxu0
        %v2215 = vpop.f32.mrf.mxu0
        %v2216 = vadd.f32 %v2104, %v2215
        %v2217 = vpop.f32.mrf.mxu0
        %2218 = vmatprep.mubr.bf16.mxu0 0
        %2219 = vmatmul.mubr.bf16.gmra.mxu0 %v2071
        %v2220 = vpop.f32.mrf.mxu0
        %v2221 = vadd.f32 %v2104, %v2220
        %v2222 = vpop.f32.mrf.mxu0
        %v2223 = vpop.f32.mrf.mxu0
        %v2224 = vadd.f32 %v2104, %v2223
        %v2225 = vpop.f32.mrf.mxu0
        %2226 = vmatprep.mubr.bf16.mxu0 0
        %2227 = vmatmul.mubr.bf16.gmra.mxu0 %v2072
        %v2228 = vpop.f32.mrf.mxu0
        %v2229 = vadd.f32 %v2104, %v2228
        %v2230 = vpop.f32.mrf.mxu0
        %v2231 = vpop.f32.mrf.mxu0
        %v2232 = vadd.f32 %v2104, %v2231
        %v2233 = vpop.f32.mrf.mxu0
        %2234 = vmatprep.mubr.bf16.mxu0 0
        %2235 = vmatmul.mubr.bf16.gmra.mxu0 %v2073
        %v2236 = vpop.f32.mrf.mxu0
        %v2237 = vadd.f32 %v2104, %v2236
        %v2238 = vpop.f32.mrf.mxu0
        %v2239 = vpop.f32.mrf.mxu0
        %v2240 = vadd.f32 %v2104, %v2239
        %v2241 = vpop.f32.mrf.mxu0
        %2242 = vmatprep.mubr.bf16.mxu0 0
        %2243 = vmatmul.mubr.bf16.gmra.mxu0 %v2074
        %v2244 = vpop.f32.mrf.mxu0
        %v2245 = vadd.f32 %v2104, %v2244
        %v2246 = vpop.f32.mrf.mxu0
        %v2247 = vpop.f32.mrf.mxu0
        %v2248 = vadd.f32 %v2104, %v2247
        %v2249 = vpop.f32.mrf.mxu0
        %2250 = vmatprep.mubr.bf16.mxu0 0
        %2251 = vmatmul.mubr.bf16.gmra.mxu0 %v2075
        %v2252 = vpop.f32.mrf.mxu0
        %v2253 = vadd.f32 %v2104, %v2252
        %v2254 = vpop.f32.mrf.mxu0
        %v2255 = vpop.f32.mrf.mxu0
        %v2256 = vadd.f32 %v2104, %v2255
        %v2257 = vpop.f32.mrf.mxu0
        %2258 = vmatprep.mubr.bf16.mxu0 0
        %2259 = vmatmul.mubr.bf16.gmra.mxu0 %v2076
        %v2260 = vpop.f32.mrf.mxu0
        %v2261 = vadd.f32 %v2104, %v2260
        %v2262 = vpop.f32.mrf.mxu0
        %v2263 = vpop.f32.mrf.mxu0
        %v2264 = vadd.f32 %v2104, %v2263
        %v2265 = vpop.f32.mrf.mxu0
        %2266 = vmatprep.mubr.bf16.mxu0 0
        %2267 = vmatmul.mubr.bf16.gmra.mxu0 %v2077
        %v2268 = vpop.f32.mrf.mxu0
        %v2269 = vadd.f32 %v2104, %v2268
        %v2270 = vpop.f32.mrf.mxu0
        %v2271 = vpop.f32.mrf.mxu0
        %v2272 = vadd.f32 %v2104, %v2271
        %v2273 = vpop.f32.mrf.mxu0
        %2274 = vmatprep.mubr.bf16.mxu0 0
        %2275 = vmatmul.mubr.bf16.gmra.mxu0 %v2078
        %v2276 = vpop.f32.mrf.mxu0
        %v2277 = vadd.f32 %v2104, %v2276
        %v2278 = vpop.f32.mrf.mxu0
        %v2279 = vpop.f32.mrf.mxu0
        %v2280 = vadd.f32 %v2104, %v2279
        %v2281 = vpop.f32.mrf.mxu0
        %2282 = vmatprep.mubr.bf16.mxu0 0
        %2283 = vmatmul.mubr.bf16.gmra.mxu0 %v2079
        %v2284 = vpop.f32.mrf.mxu0
        %v2285 = vadd.f32 %v2104, %v2284
        %v2286 = vpop.f32.mrf.mxu0
        %v2287 = vpop.f32.mrf.mxu0
        %v2288 = vadd.f32 %v2104, %v2287
        %v2289 = vpop.f32.mrf.mxu0
        %2290 = vmatprep.mubr.bf16.mxu0 0
        %2291 = vmatmul.mubr.bf16.gmra.mxu0 %v2080
        %v2292 = vpop.f32.mrf.mxu0
        %v2293 = vadd.f32 %v2104, %v2292
        %v2294 = vpop.f32.mrf.mxu0
        %v2295 = vpop.f32.mrf.mxu0
        %v2296 = vadd.f32 %v2104, %v2295
        %v2297 = vpop.f32.mrf.mxu0
        %2298 = vmatprep.mubr.bf16.mxu0 0
        %2299 = vmatmul.mubr.bf16.gmra.mxu0 %v2081
        %v2300 = vpop.f32.mrf.mxu0
        %v2301 = vadd.f32 %v2104, %v2300
        %v2302 = vpop.f32.mrf.mxu0
        %v2303 = vpop.f32.mrf.mxu0
        %v2304 = vadd.f32 %v2104, %v2303
        %v2305 = vpop.f32.mrf.mxu0
        %2306 = vmatprep.mubr.bf16.mxu0 0
        %2307 = vmatmul.mubr.bf16.gmra.mxu0 %v2082
        %v2308 = vpop.f32.mrf.mxu0
        %v2309 = vadd.f32 %v2104, %v2308
        %v2310 = vpop.f32.mrf.mxu0
        %v2311 = vpop.f32.mrf.mxu0
        %v2312 = vadd.f32 %v2104, %v2311
        %v2313 = vpop.f32.mrf.mxu0
        %2314 = vdwg.mxu0
        %v2315 = vmax.f32 %v2189, 0.0
        %v2316 = vmax.f32 %v2192, 0.0
        %v2317 = vmax.f32 %v2197, 0.0
        %v2318 = vmax.f32 %v2200, 0.0
        %v2319 = vmax.f32 %v2205, 0.0
        %v2320 = vmax.f32 %v2208, 0.0
        %v2321 = vmax.f32 %v2213, 0.0
        %v2322 = vmax.f32 %v2216, 0.0
        %v2323 = vmax.f32 %v2221, 0.0
        %v2324 = vmax.f32 %v2224, 0.0
        %v2325 = vmax.f32 %v2229, 0.0
        %v2326 = vmax.f32 %v2232, 0.0
        %v2327 = vmax.f32 %v2237, 0.0
        %v2328 = vmax.f32 %v2240, 0.0
        %v2329 = vmax.f32 %v2245, 0.0
        %v2330 = vmax.f32 %v2248, 0.0
        %v2331 = vmax.f32 %v2253, 0.0
        %v2332 = vmax.f32 %v2256, 0.0
        %v2333 = vmax.f32 %v2261, 0.0
        %v2334 = vmax.f32 %v2264, 0.0
        %v2335 = vmax.f32 %v2269, 0.0
        %v2336 = vmax.f32 %v2272, 0.0
        %v2337 = vmax.f32 %v2277, 0.0
        %v2338 = vmax.f32 %v2280, 0.0
        %v2339 = vmax.f32 %v2285, 0.0
        %v2340 = vmax.f32 %v2288, 0.0
        %v2341 = vmax.f32 %v2293, 0.0
        %v2342 = vmax.f32 %v2296, 0.0
        %v2343 = vmax.f32 %v2301, 0.0
        %v2344 = vmax.f32 %v2304, 0.0
        %v2345 = vmax.f32 %v2309, 0.0
        %v2346 = vmax.f32 %v2312, 0.0
        %v2347 = vpack.c.bf16 %v2316, %v2315
        %v2348 = vpack.c.bf16 %v2318, %v2317
        %v2349 = vpack.c.bf16 %v2320, %v2319
        %v2350 = vpack.c.bf16 %v2322, %v2321
        %v2351 = vpack.c.bf16 %v2324, %v2323
        %v2352 = vpack.c.bf16 %v2326, %v2325
        %v2353 = vpack.c.bf16 %v2328, %v2327
        %v2354 = vpack.c.bf16 %v2330, %v2329
        %v2355 = vpack.c.bf16 %v2332, %v2331
        %v2356 = vpack.c.bf16 %v2334, %v2333
        %v2357 = vpack.c.bf16 %v2336, %v2335
        %v2358 = vpack.c.bf16 %v2338, %v2337
        %v2359 = vpack.c.bf16 %v2340, %v2339
        %v2360 = vpack.c.bf16 %v2342, %v2341
        %v2361 = vpack.c.bf16 %v2344, %v2343
        %v2362 = vpack.c.bf16 %v2346, %v2345
        %v2363 = vld [vmem:[#allocation13] sm:$0xf]
        %v2364 = vld [vmem:[#allocation13 + $0x4] sm:$0xf]
        %v2365 = vld [vmem:[#allocation13 + $0x8] sm:$0xf]
        %v2366 = vld [vmem:[#allocation13 + $0xc] sm:$0xf]
        %v2367 = vld [vmem:[#allocation13 + $0x10] sm:$0xf]
        %v2368 = vld [vmem:[#allocation13 + $0x14] sm:$0xf]
        %v2369 = vld [vmem:[#allocation13 + $0x18] sm:$0xf]
        %v2370 = vld [vmem:[#allocation13 + $0x1c] sm:$0xf]
        %v2371 = vld [vmem:[#allocation13 + $0x20] sm:$0xf]
        %v2372 = vld [vmem:[#allocation13 + $0x24] sm:$0xf]
        %v2373 = vld [vmem:[#allocation13 + $0x28] sm:$0xf]
        %v2374 = vld [vmem:[#allocation13 + $0x2c] sm:$0xf]
        %v2375 = vld [vmem:[#allocation13 + $0x30] sm:$0xf]
        %v2376 = vld [vmem:[#allocation13 + $0x34] sm:$0xf]
        %v2377 = vld [vmem:[#allocation13 + $0x38] sm:$0xf]
        %v2378 = vld [vmem:[#allocation13 + $0x3c] sm:$0xf]
        %v2379 = vld [vmem:[%s12] sm:$0x1]
        %v2381 = vlaneseq
        %v2382 = vshrl.u32 %v2381, 7
        %v2383 = vsub.s32 0, %v2382
        %v2384 = vrot.slane %v2379, %v2383
        %v2402 = vunpack.c.l.b16 %v2363
        %v2403 = vunpack.c.l.b16 %v2364
        %v2404 = vunpack.c.l.b16 %v2365
        %v2405 = vunpack.c.l.b16 %v2366
        %v2406 = vunpack.c.l.b16 %v2367
        %v2407 = vunpack.c.l.b16 %v2368
        %v2408 = vunpack.c.l.b16 %v2369
        %v2409 = vunpack.c.l.b16 %v2370
        %v2410 = vunpack.c.l.b16 %v2371
        %v2411 = vunpack.c.l.b16 %v2372
        %v2412 = vunpack.c.l.b16 %v2373
        %v2413 = vunpack.c.l.b16 %v2374
        %v2414 = vunpack.c.l.b16 %v2375
        %v2415 = vunpack.c.l.b16 %v2376
        %v2416 = vunpack.c.l.b16 %v2377
        %v2417 = vunpack.c.l.b16 %v2378
        %v2418 = vpack.c.b16 %v2403, %v2402
        %v2419 = vpack.c.b16 %v2405, %v2404
        %v2420 = vpack.c.b16 %v2407, %v2406
        %v2421 = vpack.c.b16 %v2409, %v2408
        %v2422 = vpack.c.b16 %v2411, %v2410
        %v2423 = vpack.c.b16 %v2413, %v2412
        %v2424 = vpack.c.b16 %v2415, %v2414
        %v2425 = vpack.c.b16 %v2417, %v2416
        %2434 = vmatprep.subr.bf16.mxu0 0
        %2435 = vmatpush1.bf16.msra.mxu0 %v2425
        %2436 = vmatprep.subr.bf16.mxu0 0
        %2437 = vmatpush1.bf16.msra.mxu0 %v2424
        %2438 = vmatprep.subr.bf16.mxu0 0
        %2439 = vmatpush1.bf16.msra.mxu0 %v2423
        %2440 = vmatprep.subr.bf16.mxu0 0
        %2441 = vmatpush1.bf16.msra.mxu0 %v2422
        %2442 = vmatprep.subr.bf16.mxu0 0
        %2443 = vmatpush1.bf16.msra.mxu0 %v2421
        %2444 = vmatprep.subr.bf16.mxu0 0
        %2445 = vmatpush1.bf16.msra.mxu0 %v2420
        %2446 = vmatprep.subr.bf16.mxu0 0
        %2447 = vmatpush1.bf16.msra.mxu0 %v2419
        %2448 = vmatprep.subr.bf16.mxu0 0
        %2449 = vmatpush1.bf16.msra.mxu0 %v2418
        %2450 = vmatprep.subr.bf16.mxu0 0
        %2451 = vmatpush2.bf16.msra.mxu0 0
        %2452 = vmatprep.subr.bf16.mxu0 0
        %2453 = vmatpush2.bf16.msra.mxu0 0
        %2454 = vmatprep.subr.bf16.mxu0 0
        %2455 = vmatpush2.bf16.msra.mxu0 0
        %2456 = vmatprep.subr.bf16.mxu0 0
        %2457 = vmatpush2.bf16.msra.mxu0 0
        %2458 = vmatprep.subr.bf16.mxu0 0
        %2459 = vmatpush2.bf16.msra.mxu0 0
        %2460 = vmatprep.subr.bf16.mxu0 0
        %2461 = vmatpush2.bf16.msra.mxu0 0
        %2462 = vmatprep.subr.bf16.mxu0 0
        %2463 = vmatpush2.bf16.msra.mxu0 0
        %2464 = vmatprep.subr.bf16.mxu0 0
        %2465 = vmatpush2.bf16.msra.mxu0 0
        %2466 = vmatprep.mubr.bf16.mxu0 0
        %2467 = vmatmul.mubr.bf16.gmra.mxu0 %v2347
        %v2468 = vpop.f32.mrf.mxu0
        %v2469 = vadd.f32 %v2384, %v2468
        %v2470 = vpop.f32.mrf.mxu0
        %v2471 = vpop.f32.mrf.mxu0
        %v2472 = vadd.f32 %v2384, %v2471
        %v2473 = vpop.f32.mrf.mxu0
        %2474 = vmatprep.mubr.bf16.mxu0 0
        %2475 = vmatmul.mubr.bf16.gmra.mxu0 %v2348
        %v2476 = vpop.f32.mrf.mxu0
        %v2477 = vadd.f32 %v2384, %v2476
        %v2478 = vpop.f32.mrf.mxu0
        %v2479 = vpop.f32.mrf.mxu0
        %v2480 = vadd.f32 %v2384, %v2479
        %v2481 = vpop.f32.mrf.mxu0
        %2482 = vmatprep.mubr.bf16.mxu0 0
        %2483 = vmatmul.mubr.bf16.gmra.mxu0 %v2349
        %v2484 = vpop.f32.mrf.mxu0
        %v2485 = vadd.f32 %v2384, %v2484
        %v2486 = vpop.f32.mrf.mxu0
        %v2487 = vpop.f32.mrf.mxu0
        %v2488 = vadd.f32 %v2384, %v2487
        %v2489 = vpop.f32.mrf.mxu0
        %2490 = vmatprep.mubr.bf16.mxu0 0
        %2491 = vmatmul.mubr.bf16.gmra.mxu0 %v2350
        %v2492 = vpop.f32.mrf.mxu0
        %v2493 = vadd.f32 %v2384, %v2492
        %v2494 = vpop.f32.mrf.mxu0
        %v2495 = vpop.f32.mrf.mxu0
        %v2496 = vadd.f32 %v2384, %v2495
        %v2497 = vpop.f32.mrf.mxu0
        %2498 = vmatprep.mubr.bf16.mxu0 0
        %2499 = vmatmul.mubr.bf16.gmra.mxu0 %v2351
        %v2500 = vpop.f32.mrf.mxu0
        %v2501 = vadd.f32 %v2384, %v2500
        %v2502 = vpop.f32.mrf.mxu0
        %v2503 = vpop.f32.mrf.mxu0
        %v2504 = vadd.f32 %v2384, %v2503
        %v2505 = vpop.f32.mrf.mxu0
        %2506 = vmatprep.mubr.bf16.mxu0 0
        %2507 = vmatmul.mubr.bf16.gmra.mxu0 %v2352
        %v2508 = vpop.f32.mrf.mxu0
        %v2509 = vadd.f32 %v2384, %v2508
        %v2510 = vpop.f32.mrf.mxu0
        %v2511 = vpop.f32.mrf.mxu0
        %v2512 = vadd.f32 %v2384, %v2511
        %v2513 = vpop.f32.mrf.mxu0
        %2514 = vmatprep.mubr.bf16.mxu0 0
        %2515 = vmatmul.mubr.bf16.gmra.mxu0 %v2353
        %v2516 = vpop.f32.mrf.mxu0
        %v2517 = vadd.f32 %v2384, %v2516
        %v2518 = vpop.f32.mrf.mxu0
        %v2519 = vpop.f32.mrf.mxu0
        %v2520 = vadd.f32 %v2384, %v2519
        %v2521 = vpop.f32.mrf.mxu0
        %2522 = vmatprep.mubr.bf16.mxu0 0
        %2523 = vmatmul.mubr.bf16.gmra.mxu0 %v2354
        %v2524 = vpop.f32.mrf.mxu0
        %v2525 = vadd.f32 %v2384, %v2524
        %v2526 = vpop.f32.mrf.mxu0
        %v2527 = vpop.f32.mrf.mxu0
        %v2528 = vadd.f32 %v2384, %v2527
        %v2529 = vpop.f32.mrf.mxu0
        %2530 = vmatprep.mubr.bf16.mxu0 0
        %2531 = vmatmul.mubr.bf16.gmra.mxu0 %v2355
        %v2532 = vpop.f32.mrf.mxu0
        %v2533 = vadd.f32 %v2384, %v2532
        %v2534 = vpop.f32.mrf.mxu0
        %v2535 = vpop.f32.mrf.mxu0
        %v2536 = vadd.f32 %v2384, %v2535
        %v2537 = vpop.f32.mrf.mxu0
        %2538 = vmatprep.mubr.bf16.mxu0 0
        %2539 = vmatmul.mubr.bf16.gmra.mxu0 %v2356
        %v2540 = vpop.f32.mrf.mxu0
        %v2541 = vadd.f32 %v2384, %v2540
        %v2542 = vpop.f32.mrf.mxu0
        %v2543 = vpop.f32.mrf.mxu0
        %v2544 = vadd.f32 %v2384, %v2543
        %v2545 = vpop.f32.mrf.mxu0
        %2546 = vmatprep.mubr.bf16.mxu0 0
        %2547 = vmatmul.mubr.bf16.gmra.mxu0 %v2357
        %v2548 = vpop.f32.mrf.mxu0
        %v2549 = vadd.f32 %v2384, %v2548
        %v2550 = vpop.f32.mrf.mxu0
        %v2551 = vpop.f32.mrf.mxu0
        %v2552 = vadd.f32 %v2384, %v2551
        %v2553 = vpop.f32.mrf.mxu0
        %2554 = vmatprep.mubr.bf16.mxu0 0
        %2555 = vmatmul.mubr.bf16.gmra.mxu0 %v2358
        %v2556 = vpop.f32.mrf.mxu0
        %v2557 = vadd.f32 %v2384, %v2556
        %v2558 = vpop.f32.mrf.mxu0
        %v2559 = vpop.f32.mrf.mxu0
        %v2560 = vadd.f32 %v2384, %v2559
        %v2561 = vpop.f32.mrf.mxu0
        %2562 = vmatprep.mubr.bf16.mxu0 0
        %2563 = vmatmul.mubr.bf16.gmra.mxu0 %v2359
        %v2564 = vpop.f32.mrf.mxu0
        %v2565 = vadd.f32 %v2384, %v2564
        %v2566 = vpop.f32.mrf.mxu0
        %v2567 = vpop.f32.mrf.mxu0
        %v2568 = vadd.f32 %v2384, %v2567
        %v2569 = vpop.f32.mrf.mxu0
        %2570 = vmatprep.mubr.bf16.mxu0 0
        %2571 = vmatmul.mubr.bf16.gmra.mxu0 %v2360
        %v2572 = vpop.f32.mrf.mxu0
        %v2573 = vadd.f32 %v2384, %v2572
        %v2574 = vpop.f32.mrf.mxu0
        %v2575 = vpop.f32.mrf.mxu0
        %v2576 = vadd.f32 %v2384, %v2575
        %v2577 = vpop.f32.mrf.mxu0
        %2578 = vmatprep.mubr.bf16.mxu0 0
        %2579 = vmatmul.mubr.bf16.gmra.mxu0 %v2361
        %v2580 = vpop.f32.mrf.mxu0
        %v2581 = vadd.f32 %v2384, %v2580
        %v2582 = vpop.f32.mrf.mxu0
        %v2583 = vpop.f32.mrf.mxu0
        %v2584 = vadd.f32 %v2384, %v2583
        %v2585 = vpop.f32.mrf.mxu0
        %2586 = vmatprep.mubr.bf16.mxu0 0
        %2587 = vmatmul.mubr.bf16.gmra.mxu0 %v2362
        %v2588 = vpop.f32.mrf.mxu0
        %v2589 = vadd.f32 %v2384, %v2588
        %v2590 = vpop.f32.mrf.mxu0
        %v2591 = vpop.f32.mrf.mxu0
        %v2592 = vadd.f32 %v2384, %v2591
        %v2593 = vpop.f32.mrf.mxu0
        %2594 = vdwg.mxu0
        %v2595 = vmax.f32 %v2469, 0.0
        %v2596 = vmax.f32 %v2472, 0.0
        %v2597 = vmax.f32 %v2477, 0.0
        %v2598 = vmax.f32 %v2480, 0.0
        %v2599 = vmax.f32 %v2485, 0.0
        %v2600 = vmax.f32 %v2488, 0.0
        %v2601 = vmax.f32 %v2493, 0.0
        %v2602 = vmax.f32 %v2496, 0.0
        %v2603 = vmax.f32 %v2501, 0.0
        %v2604 = vmax.f32 %v2504, 0.0
        %v2605 = vmax.f32 %v2509, 0.0
        %v2606 = vmax.f32 %v2512, 0.0
        %v2607 = vmax.f32 %v2517, 0.0
        %v2608 = vmax.f32 %v2520, 0.0
        %v2609 = vmax.f32 %v2525, 0.0
        %v2610 = vmax.f32 %v2528, 0.0
        %v2611 = vmax.f32 %v2533, 0.0
        %v2612 = vmax.f32 %v2536, 0.0
        %v2613 = vmax.f32 %v2541, 0.0
        %v2614 = vmax.f32 %v2544, 0.0
        %v2615 = vmax.f32 %v2549, 0.0
        %v2616 = vmax.f32 %v2552, 0.0
        %v2617 = vmax.f32 %v2557, 0.0
        %v2618 = vmax.f32 %v2560, 0.0
        %v2619 = vmax.f32 %v2565, 0.0
        %v2620 = vmax.f32 %v2568, 0.0
        %v2621 = vmax.f32 %v2573, 0.0
        %v2622 = vmax.f32 %v2576, 0.0
        %v2623 = vmax.f32 %v2581, 0.0
        %v2624 = vmax.f32 %v2584, 0.0
        %v2625 = vmax.f32 %v2589, 0.0
        %v2626 = vmax.f32 %v2592, 0.0
        %v2627 = vpack.c.bf16 %v2596, %v2595
        %v2628 = vpack.c.bf16 %v2598, %v2597
        %v2629 = vpack.c.bf16 %v2600, %v2599
        %v2630 = vpack.c.bf16 %v2602, %v2601
        %v2631 = vpack.c.bf16 %v2604, %v2603
        %v2632 = vpack.c.bf16 %v2606, %v2605
        %v2633 = vpack.c.bf16 %v2608, %v2607
        %v2634 = vpack.c.bf16 %v2610, %v2609
        %v2635 = vpack.c.bf16 %v2612, %v2611
        %v2636 = vpack.c.bf16 %v2614, %v2613
        %v2637 = vpack.c.bf16 %v2616, %v2615
        %v2638 = vpack.c.bf16 %v2618, %v2617
        %v2639 = vpack.c.bf16 %v2620, %v2619
        %v2640 = vpack.c.bf16 %v2622, %v2621
        %v2641 = vpack.c.bf16 %v2624, %v2623
        %v2642 = vpack.c.bf16 %v2626, %v2625
        %v2643 = vld [vmem:[#allocation14] sm:$0xff]
        %v2644 = vld [vmem:[#allocation14 + $0x8] sm:$0xff]
        %v2645 = vld [vmem:[#allocation14 + $0x10] sm:$0xff]
        %v2646 = vld [vmem:[#allocation14 + $0x18] sm:$0xff]
        %v2647 = vld [vmem:[#allocation14 + $0x20] sm:$0xff]
        %v2648 = vld [vmem:[#allocation14 + $0x28] sm:$0xff]
        %v2649 = vld [vmem:[#allocation14 + $0x30] sm:$0xff]
        %v2650 = vld [vmem:[#allocation14 + $0x38] sm:$0xff]
        %v2651 = vld [vmem:[#allocation14 + $0x40] sm:$0xff]
        %v2652 = vld [vmem:[#allocation14 + $0x48] sm:$0xff]
        %v2653 = vld [vmem:[#allocation14 + $0x50] sm:$0xff]
        %v2654 = vld [vmem:[#allocation14 + $0x58] sm:$0xff]
        %v2655 = vld [vmem:[#allocation14 + $0x60] sm:$0xff]
        %v2656 = vld [vmem:[#allocation14 + $0x68] sm:$0xff]
        %v2657 = vld [vmem:[#allocation14 + $0x70] sm:$0xff]
        %v2658 = vld [vmem:[#allocation14 + $0x78] sm:$0xff]
        %v2659 = vld [vmem:[%s14] sm:$0x3]
        %v2661 = vlaneseq
        %v2662 = vshrl.u32 %v2661, 7
        %v2663 = vsub.s32 0, %v2662
        %v2664 = vrot.slane %v2659, %v2663
        %v2665 = vlaneseq
        %v2666 = vshrl.u32 %v2665, 7
        %v2667 = vsub.s32 1, %v2666
        %v2668 = vrot.slane %v2659, %v2667
        %v2687 = vunpack.c.l.b16 %v2643
        %v2688 = vunpack.c.h.b16 %v2643
        %v2689 = vunpack.c.l.b16 %v2644
        %v2690 = vunpack.c.h.b16 %v2644
        %v2691 = vunpack.c.l.b16 %v2645
        %v2692 = vunpack.c.h.b16 %v2645
        %v2693 = vunpack.c.l.b16 %v2646
        %v2694 = vunpack.c.h.b16 %v2646
        %v2695 = vunpack.c.l.b16 %v2647
        %v2696 = vunpack.c.h.b16 %v2647
        %v2697 = vunpack.c.l.b16 %v2648
        %v2698 = vunpack.c.h.b16 %v2648
        %v2699 = vunpack.c.l.b16 %v2649
        %v2700 = vunpack.c.h.b16 %v2649
        %v2701 = vunpack.c.l.b16 %v2650
        %v2702 = vunpack.c.h.b16 %v2650
        %v2703 = vunpack.c.l.b16 %v2651
        %v2704 = vunpack.c.h.b16 %v2651
        %v2705 = vunpack.c.l.b16 %v2652
        %v2706 = vunpack.c.h.b16 %v2652
        %v2707 = vunpack.c.l.b16 %v2653
        %v2708 = vunpack.c.h.b16 %v2653
        %v2709 = vunpack.c.l.b16 %v2654
        %v2710 = vunpack.c.h.b16 %v2654
        %v2711 = vunpack.c.l.b16 %v2655
        %v2712 = vunpack.c.h.b16 %v2655
        %v2713 = vunpack.c.l.b16 %v2656
        %v2714 = vunpack.c.h.b16 %v2656
        %v2715 = vunpack.c.l.b16 %v2657
        %v2716 = vunpack.c.h.b16 %v2657
        %v2717 = vunpack.c.l.b16 %v2658
        %v2718 = vunpack.c.h.b16 %v2658
        %v2719 = vpack.c.b16 %v2689, %v2687
        %v2720 = vpack.c.b16 %v2690, %v2688
        %v2721 = vpack.c.b16 %v2693, %v2691
        %v2722 = vpack.c.b16 %v2694, %v2692
        %v2723 = vpack.c.b16 %v2697, %v2695
        %v2724 = vpack.c.b16 %v2698, %v2696
        %v2725 = vpack.c.b16 %v2701, %v2699
        %v2726 = vpack.c.b16 %v2702, %v2700
        %v2727 = vpack.c.b16 %v2705, %v2703
        %v2728 = vpack.c.b16 %v2706, %v2704
        %v2729 = vpack.c.b16 %v2709, %v2707
        %v2730 = vpack.c.b16 %v2710, %v2708
        %v2731 = vpack.c.b16 %v2713, %v2711
        %v2732 = vpack.c.b16 %v2714, %v2712
        %v2733 = vpack.c.b16 %v2717, %v2715
        %v2734 = vpack.c.b16 %v2718, %v2716
        %2751 = vmatprep.subr.bf16.mxu0 %v2734
        %2752 = vmatpush1.bf16.msra.mxu0 %v2733
        %2753 = vmatprep.subr.bf16.mxu0 %v2732
        %2754 = vmatpush1.bf16.msra.mxu0 %v2731
        %2755 = vmatprep.subr.bf16.mxu0 %v2730
        %2756 = vmatpush1.bf16.msra.mxu0 %v2729
        %2757 = vmatprep.subr.bf16.mxu0 %v2728
        %2758 = vmatpush1.bf16.msra.mxu0 %v2727
        %2759 = vmatprep.subr.bf16.mxu0 %v2726
        %2760 = vmatpush1.bf16.msra.mxu0 %v2725
        %2761 = vmatprep.subr.bf16.mxu0 %v2724
        %2762 = vmatpush1.bf16.msra.mxu0 %v2723
        %2763 = vmatprep.subr.bf16.mxu0 %v2722
        %2764 = vmatpush1.bf16.msra.mxu0 %v2721
        %2765 = vmatprep.subr.bf16.mxu0 %v2720
        %2766 = vmatpush1.bf16.msra.mxu0 %v2719
        %2767 = vmatprep.subr.bf16.mxu0 0
        %2768 = vmatpush2.bf16.msra.mxu0 0
        %2769 = vmatprep.subr.bf16.mxu0 0
        %2770 = vmatpush2.bf16.msra.mxu0 0
        %2771 = vmatprep.subr.bf16.mxu0 0
        %2772 = vmatpush2.bf16.msra.mxu0 0
        %2773 = vmatprep.subr.bf16.mxu0 0
        %2774 = vmatpush2.bf16.msra.mxu0 0
        %2775 = vmatprep.subr.bf16.mxu0 0
        %2776 = vmatpush2.bf16.msra.mxu0 0
        %2777 = vmatprep.subr.bf16.mxu0 0
        %2778 = vmatpush2.bf16.msra.mxu0 0
        %2779 = vmatprep.subr.bf16.mxu0 0
        %2780 = vmatpush2.bf16.msra.mxu0 0
        %2781 = vmatprep.subr.bf16.mxu0 0
        %2782 = vmatpush2.bf16.msra.mxu0 0
        %2783 = vmatprep.mubr.bf16.mxu0 0
        %2784 = vmatmul.mubr.bf16.gmra.mxu0 %v2627
        %v2785 = vpop.f32.mrf.mxu0
        %v2786 = vadd.f32 %v2664, %v2785
        %v2787 = vpop.f32.mrf.mxu0
        %v2788 = vadd.f32 %v2668, %v2787
        %v2789 = vpop.f32.mrf.mxu0
        %v2790 = vadd.f32 %v2664, %v2789
        %v2791 = vpop.f32.mrf.mxu0
        %v2792 = vadd.f32 %v2668, %v2791
        %2793 = vmatprep.mubr.bf16.mxu0 0
        %2794 = vmatmul.mubr.bf16.gmra.mxu0 %v2628
        %v2795 = vpop.f32.mrf.mxu0
        %v2796 = vadd.f32 %v2664, %v2795
        %v2797 = vpop.f32.mrf.mxu0
        %v2798 = vadd.f32 %v2668, %v2797
        %v2799 = vpop.f32.mrf.mxu0
        %v2800 = vadd.f32 %v2664, %v2799
        %v2801 = vpop.f32.mrf.mxu0
        %v2802 = vadd.f32 %v2668, %v2801
        %2803 = vmatprep.mubr.bf16.mxu0 0
        %2804 = vmatmul.mubr.bf16.gmra.mxu0 %v2629
        %v2805 = vpop.f32.mrf.mxu0
        %v2806 = vadd.f32 %v2664, %v2805
        %v2807 = vpop.f32.mrf.mxu0
        %v2808 = vadd.f32 %v2668, %v2807
        %v2809 = vpop.f32.mrf.mxu0
        %v2810 = vadd.f32 %v2664, %v2809
        %v2811 = vpop.f32.mrf.mxu0
        %v2812 = vadd.f32 %v2668, %v2811
        %2813 = vmatprep.mubr.bf16.mxu0 0
        %2814 = vmatmul.mubr.bf16.gmra.mxu0 %v2630
        %v2815 = vpop.f32.mrf.mxu0
        %v2816 = vadd.f32 %v2664, %v2815
        %v2817 = vpop.f32.mrf.mxu0
        %v2818 = vadd.f32 %v2668, %v2817
        %v2819 = vpop.f32.mrf.mxu0
        %v2820 = vadd.f32 %v2664, %v2819
        %v2821 = vpop.f32.mrf.mxu0
        %v2822 = vadd.f32 %v2668, %v2821
        %2823 = vmatprep.mubr.bf16.mxu0 0
        %2824 = vmatmul.mubr.bf16.gmra.mxu0 %v2631
        %v2825 = vpop.f32.mrf.mxu0
        %v2826 = vadd.f32 %v2664, %v2825
        %v2827 = vpop.f32.mrf.mxu0
        %v2828 = vadd.f32 %v2668, %v2827
        %v2829 = vpop.f32.mrf.mxu0
        %v2830 = vadd.f32 %v2664, %v2829
        %v2831 = vpop.f32.mrf.mxu0
        %v2832 = vadd.f32 %v2668, %v2831
        %2833 = vmatprep.mubr.bf16.mxu0 0
        %2834 = vmatmul.mubr.bf16.gmra.mxu0 %v2632
        %v2835 = vpop.f32.mrf.mxu0
        %v2836 = vadd.f32 %v2664, %v2835
        %v2837 = vpop.f32.mrf.mxu0
        %v2838 = vadd.f32 %v2668, %v2837
        %v2839 = vpop.f32.mrf.mxu0
        %v2840 = vadd.f32 %v2664, %v2839
        %v2841 = vpop.f32.mrf.mxu0
        %v2842 = vadd.f32 %v2668, %v2841
        %2843 = vmatprep.mubr.bf16.mxu0 0
        %2844 = vmatmul.mubr.bf16.gmra.mxu0 %v2633
        %v2845 = vpop.f32.mrf.mxu0
        %v2846 = vadd.f32 %v2664, %v2845
        %v2847 = vpop.f32.mrf.mxu0
        %v2848 = vadd.f32 %v2668, %v2847
        %v2849 = vpop.f32.mrf.mxu0
        %v2850 = vadd.f32 %v2664, %v2849
        %v2851 = vpop.f32.mrf.mxu0
        %v2852 = vadd.f32 %v2668, %v2851
        %2853 = vmatprep.mubr.bf16.mxu0 0
        %2854 = vmatmul.mubr.bf16.gmra.mxu0 %v2634
        %v2855 = vpop.f32.mrf.mxu0
        %v2856 = vadd.f32 %v2664, %v2855
        %v2857 = vpop.f32.mrf.mxu0
        %v2858 = vadd.f32 %v2668, %v2857
        %v2859 = vpop.f32.mrf.mxu0
        %v2860 = vadd.f32 %v2664, %v2859
        %v2861 = vpop.f32.mrf.mxu0
        %v2862 = vadd.f32 %v2668, %v2861
        %2863 = vmatprep.mubr.bf16.mxu0 0
        %2864 = vmatmul.mubr.bf16.gmra.mxu0 %v2635
        %v2865 = vpop.f32.mrf.mxu0
        %v2866 = vadd.f32 %v2664, %v2865
        %v2867 = vpop.f32.mrf.mxu0
        %v2868 = vadd.f32 %v2668, %v2867
        %v2869 = vpop.f32.mrf.mxu0
        %v2870 = vadd.f32 %v2664, %v2869
        %v2871 = vpop.f32.mrf.mxu0
        %v2872 = vadd.f32 %v2668, %v2871
        %2873 = vmatprep.mubr.bf16.mxu0 0
        %2874 = vmatmul.mubr.bf16.gmra.mxu0 %v2636
        %v2875 = vpop.f32.mrf.mxu0
        %v2876 = vadd.f32 %v2664, %v2875
        %v2877 = vpop.f32.mrf.mxu0
        %v2878 = vadd.f32 %v2668, %v2877
        %v2879 = vpop.f32.mrf.mxu0
        %v2880 = vadd.f32 %v2664, %v2879
        %v2881 = vpop.f32.mrf.mxu0
        %v2882 = vadd.f32 %v2668, %v2881
        %2883 = vmatprep.mubr.bf16.mxu0 0
        %2884 = vmatmul.mubr.bf16.gmra.mxu0 %v2637
        %v2885 = vpop.f32.mrf.mxu0
        %v2886 = vadd.f32 %v2664, %v2885
        %v2887 = vpop.f32.mrf.mxu0
        %v2888 = vadd.f32 %v2668, %v2887
        %v2889 = vpop.f32.mrf.mxu0
        %v2890 = vadd.f32 %v2664, %v2889
        %v2891 = vpop.f32.mrf.mxu0
        %v2892 = vadd.f32 %v2668, %v2891
        %2893 = vmatprep.mubr.bf16.mxu0 0
        %2894 = vmatmul.mubr.bf16.gmra.mxu0 %v2638
        %v2895 = vpop.f32.mrf.mxu0
        %v2896 = vadd.f32 %v2664, %v2895
        %v2897 = vpop.f32.mrf.mxu0
        %v2898 = vadd.f32 %v2668, %v2897
        %v2899 = vpop.f32.mrf.mxu0
        %v2900 = vadd.f32 %v2664, %v2899
        %v2901 = vpop.f32.mrf.mxu0
        %v2902 = vadd.f32 %v2668, %v2901
        %2903 = vmatprep.mubr.bf16.mxu0 0
        %2904 = vmatmul.mubr.bf16.gmra.mxu0 %v2639
        %v2905 = vpop.f32.mrf.mxu0
        %v2906 = vadd.f32 %v2664, %v2905
        %v2907 = vpop.f32.mrf.mxu0
        %v2908 = vadd.f32 %v2668, %v2907
        %v2909 = vpop.f32.mrf.mxu0
        %v2910 = vadd.f32 %v2664, %v2909
        %v2911 = vpop.f32.mrf.mxu0
        %v2912 = vadd.f32 %v2668, %v2911
        %2913 = vmatprep.mubr.bf16.mxu0 0
        %2914 = vmatmul.mubr.bf16.gmra.mxu0 %v2640
        %v2915 = vpop.f32.mrf.mxu0
        %v2916 = vadd.f32 %v2664, %v2915
        %v2917 = vpop.f32.mrf.mxu0
        %v2918 = vadd.f32 %v2668, %v2917
        %v2919 = vpop.f32.mrf.mxu0
        %v2920 = vadd.f32 %v2664, %v2919
        %v2921 = vpop.f32.mrf.mxu0
        %v2922 = vadd.f32 %v2668, %v2921
        %2923 = vmatprep.mubr.bf16.mxu0 0
        %2924 = vmatmul.mubr.bf16.gmra.mxu0 %v2641
        %v2925 = vpop.f32.mrf.mxu0
        %v2926 = vadd.f32 %v2664, %v2925
        %v2927 = vpop.f32.mrf.mxu0
        %v2928 = vadd.f32 %v2668, %v2927
        %v2929 = vpop.f32.mrf.mxu0
        %v2930 = vadd.f32 %v2664, %v2929
        %v2931 = vpop.f32.mrf.mxu0
        %v2932 = vadd.f32 %v2668, %v2931
        %2933 = vmatprep.mubr.bf16.mxu0 0
        %2934 = vmatmul.mubr.bf16.gmra.mxu0 %v2642
        %v2935 = vpop.f32.mrf.mxu0
        %v2936 = vadd.f32 %v2664, %v2935
        %v2937 = vpop.f32.mrf.mxu0
        %v2938 = vadd.f32 %v2668, %v2937
        %v2939 = vpop.f32.mrf.mxu0
        %v2940 = vadd.f32 %v2664, %v2939
        %v2941 = vpop.f32.mrf.mxu0
        %v2942 = vadd.f32 %v2668, %v2941
        %2943 = vdwg.mxu0
        %v2944 = vmax.f32 %v2786, 0.0
        %v2945 = vmax.f32 %v2788, 0.0
        %v2946 = vmax.f32 %v2790, 0.0
        %v2947 = vmax.f32 %v2792, 0.0
        %v2948 = vmax.f32 %v2796, 0.0
        %v2949 = vmax.f32 %v2798, 0.0
        %v2950 = vmax.f32 %v2800, 0.0
        %v2951 = vmax.f32 %v2802, 0.0
        %v2952 = vmax.f32 %v2806, 0.0
        %v2953 = vmax.f32 %v2808, 0.0
        %v2954 = vmax.f32 %v2810, 0.0
        %v2955 = vmax.f32 %v2812, 0.0
        %v2956 = vmax.f32 %v2816, 0.0
        %v2957 = vmax.f32 %v2818, 0.0
        %v2958 = vmax.f32 %v2820, 0.0
        %v2959 = vmax.f32 %v2822, 0.0
        %v2960 = vmax.f32 %v2826, 0.0
        %v2961 = vmax.f32 %v2828, 0.0
        %v2962 = vmax.f32 %v2830, 0.0
        %v2963 = vmax.f32 %v2832, 0.0
        %v2964 = vmax.f32 %v2836, 0.0
        %v2965 = vmax.f32 %v2838, 0.0
        %v2966 = vmax.f32 %v2840, 0.0
        %v2967 = vmax.f32 %v2842, 0.0
        %v2968 = vmax.f32 %v2846, 0.0
        %v2969 = vmax.f32 %v2848, 0.0
        %v2970 = vmax.f32 %v2850, 0.0
        %v2971 = vmax.f32 %v2852, 0.0
        %v2972 = vmax.f32 %v2856, 0.0
        %v2973 = vmax.f32 %v2858, 0.0
        %v2974 = vmax.f32 %v2860, 0.0
        %v2975 = vmax.f32 %v2862, 0.0
        %v2976 = vmax.f32 %v2866, 0.0
        %v2977 = vmax.f32 %v2868, 0.0
        %v2978 = vmax.f32 %v2870, 0.0
        %v2979 = vmax.f32 %v2872, 0.0
        %v2980 = vmax.f32 %v2876, 0.0
        %v2981 = vmax.f32 %v2878, 0.0
        %v2982 = vmax.f32 %v2880, 0.0
        %v2983 = vmax.f32 %v2882, 0.0
        %v2984 = vmax.f32 %v2886, 0.0
        %v2985 = vmax.f32 %v2888, 0.0
        %v2986 = vmax.f32 %v2890, 0.0
        %v2987 = vmax.f32 %v2892, 0.0
        %v2988 = vmax.f32 %v2896, 0.0
        %v2989 = vmax.f32 %v2898, 0.0
        %v2990 = vmax.f32 %v2900, 0.0
        %v2991 = vmax.f32 %v2902, 0.0
        %v2992 = vmax.f32 %v2906, 0.0
        %v2993 = vmax.f32 %v2908, 0.0
        %v2994 = vmax.f32 %v2910, 0.0
        %v2995 = vmax.f32 %v2912, 0.0
        %v2996 = vmax.f32 %v2916, 0.0
        %v2997 = vmax.f32 %v2918, 0.0
        %v2998 = vmax.f32 %v2920, 0.0
        %v2999 = vmax.f32 %v2922, 0.0
        %v3000 = vmax.f32 %v2926, 0.0
        %v3001 = vmax.f32 %v2928, 0.0
        %v3002 = vmax.f32 %v2930, 0.0
        %v3003 = vmax.f32 %v2932, 0.0
        %v3004 = vmax.f32 %v2936, 0.0
        %v3005 = vmax.f32 %v2938, 0.0
        %v3006 = vmax.f32 %v2940, 0.0
        %v3007 = vmax.f32 %v2942, 0.0
        %v3008 = vpack.c.bf16 %v2946, %v2944
        %v3009 = vpack.c.bf16 %v2947, %v2945
        %v3010 = vpack.c.bf16 %v2950, %v2948
        %v3011 = vpack.c.bf16 %v2951, %v2949
        %v3012 = vpack.c.bf16 %v2954, %v2952
        %v3013 = vpack.c.bf16 %v2955, %v2953
        %v3014 = vpack.c.bf16 %v2958, %v2956
        %v3015 = vpack.c.bf16 %v2959, %v2957
        %v3016 = vpack.c.bf16 %v2962, %v2960
        %v3017 = vpack.c.bf16 %v2963, %v2961
        %v3018 = vpack.c.bf16 %v2966, %v2964
        %v3019 = vpack.c.bf16 %v2967, %v2965
        %v3020 = vpack.c.bf16 %v2970, %v2968
        %v3021 = vpack.c.bf16 %v2971, %v2969
        %v3022 = vpack.c.bf16 %v2974, %v2972
        %v3023 = vpack.c.bf16 %v2975, %v2973
        %v3024 = vpack.c.bf16 %v2978, %v2976
        %v3025 = vpack.c.bf16 %v2979, %v2977
        %v3026 = vpack.c.bf16 %v2982, %v2980
        %v3027 = vpack.c.bf16 %v2983, %v2981
        %v3028 = vpack.c.bf16 %v2986, %v2984
        %v3029 = vpack.c.bf16 %v2987, %v2985
        %v3030 = vpack.c.bf16 %v2990, %v2988
        %v3031 = vpack.c.bf16 %v2991, %v2989
        %v3032 = vpack.c.bf16 %v2994, %v2992
        %v3033 = vpack.c.bf16 %v2995, %v2993
        %v3034 = vpack.c.bf16 %v2998, %v2996
        %v3035 = vpack.c.bf16 %v2999, %v2997
        %v3036 = vpack.c.bf16 %v3002, %v3000
        %v3037 = vpack.c.bf16 %v3003, %v3001
        %v3038 = vpack.c.bf16 %v3006, %v3004
        %v3039 = vpack.c.bf16 %v3007, %v3005
        %v3040 = vld [vmem:[#allocation16] sm:$0xf]
        %v3041 = vld [vmem:[#allocation16 + $0x4] sm:$0xf]
        %v3042 = vld [vmem:[#allocation16 + $0x8] sm:$0xf]
        %v3043 = vld [vmem:[#allocation16 + $0xc] sm:$0xf]
        %v3044 = vld [vmem:[#allocation16 + $0x10] sm:$0xf]
        %v3045 = vld [vmem:[#allocation16 + $0x14] sm:$0xf]
        %v3046 = vld [vmem:[#allocation16 + $0x18] sm:$0xf]
        %v3047 = vld [vmem:[#allocation16 + $0x1c] sm:$0xf]
        %v3048 = vld [vmem:[#allocation16 + $0x20] sm:$0xf]
        %v3049 = vld [vmem:[#allocation16 + $0x24] sm:$0xf]
        %v3050 = vld [vmem:[#allocation16 + $0x28] sm:$0xf]
        %v3051 = vld [vmem:[#allocation16 + $0x2c] sm:$0xf]
        %v3052 = vld [vmem:[#allocation16 + $0x30] sm:$0xf]
        %v3053 = vld [vmem:[#allocation16 + $0x34] sm:$0xf]
        %v3054 = vld [vmem:[#allocation16 + $0x38] sm:$0xf]
        %v3055 = vld [vmem:[#allocation16 + $0x3c] sm:$0xf]
        %v3056 = vld [vmem:[#allocation16 + $0x40] sm:$0xf]
        %v3057 = vld [vmem:[#allocation16 + $0x44] sm:$0xf]
        %v3058 = vld [vmem:[#allocation16 + $0x48] sm:$0xf]
        %v3059 = vld [vmem:[#allocation16 + $0x4c] sm:$0xf]
        %v3060 = vld [vmem:[#allocation16 + $0x50] sm:$0xf]
        %v3061 = vld [vmem:[#allocation16 + $0x54] sm:$0xf]
        %v3062 = vld [vmem:[#allocation16 + $0x58] sm:$0xf]
        %v3063 = vld [vmem:[#allocation16 + $0x5c] sm:$0xf]
        %v3064 = vld [vmem:[#allocation16 + $0x60] sm:$0xf]
        %v3065 = vld [vmem:[#allocation16 + $0x64] sm:$0xf]
        %v3066 = vld [vmem:[#allocation16 + $0x68] sm:$0xf]
        %v3067 = vld [vmem:[#allocation16 + $0x6c] sm:$0xf]
        %v3068 = vld [vmem:[#allocation16 + $0x70] sm:$0xf]
        %v3069 = vld [vmem:[#allocation16 + $0x74] sm:$0xf]
        %v3070 = vld [vmem:[#allocation16 + $0x78] sm:$0xf]
        %v3071 = vld [vmem:[#allocation16 + $0x7c] sm:$0xf]
        %v3072 = vld [vmem:[%s16] sm:$0x1]
        %v3074 = vlaneseq
        %v3075 = vshrl.u32 %v3074, 7
        %v3076 = vsub.s32 0, %v3075
        %v3077 = vrot.slane %v3072, %v3076
        %v3111 = vunpack.c.l.b16 %v3040
        %v3112 = vunpack.c.l.b16 %v3041
        %v3113 = vunpack.c.l.b16 %v3042
        %v3114 = vunpack.c.l.b16 %v3043
        %v3115 = vunpack.c.l.b16 %v3044
        %v3116 = vunpack.c.l.b16 %v3045
        %v3117 = vunpack.c.l.b16 %v3046
        %v3118 = vunpack.c.l.b16 %v3047
        %v3119 = vunpack.c.l.b16 %v3048
        %v3120 = vunpack.c.l.b16 %v3049
        %v3121 = vunpack.c.l.b16 %v3050
        %v3122 = vunpack.c.l.b16 %v3051
        %v3123 = vunpack.c.l.b16 %v3052
        %v3124 = vunpack.c.l.b16 %v3053
        %v3125 = vunpack.c.l.b16 %v3054
        %v3126 = vunpack.c.l.b16 %v3055
        %v3127 = vunpack.c.l.b16 %v3056
        %v3128 = vunpack.c.l.b16 %v3057
        %v3129 = vunpack.c.l.b16 %v3058
        %v3130 = vunpack.c.l.b16 %v3059
        %v3131 = vunpack.c.l.b16 %v3060
        %v3132 = vunpack.c.l.b16 %v3061
        %v3133 = vunpack.c.l.b16 %v3062
        %v3134 = vunpack.c.l.b16 %v3063
        %v3135 = vunpack.c.l.b16 %v3064
        %v3136 = vunpack.c.l.b16 %v3065
        %v3137 = vunpack.c.l.b16 %v3066
        %v3138 = vunpack.c.l.b16 %v3067
        %v3139 = vunpack.c.l.b16 %v3068
        %v3140 = vunpack.c.l.b16 %v3069
        %v3141 = vunpack.c.l.b16 %v3070
        %v3142 = vunpack.c.l.b16 %v3071
        %v3143 = vpack.c.b16 %v3112, %v3111
        %v3144 = vpack.c.b16 %v3114, %v3113
        %v3145 = vpack.c.b16 %v3116, %v3115
        %v3146 = vpack.c.b16 %v3118, %v3117
        %v3147 = vpack.c.b16 %v3120, %v3119
        %v3148 = vpack.c.b16 %v3122, %v3121
        %v3149 = vpack.c.b16 %v3124, %v3123
        %v3150 = vpack.c.b16 %v3126, %v3125
        %v3151 = vpack.c.b16 %v3128, %v3127
        %v3152 = vpack.c.b16 %v3130, %v3129
        %v3153 = vpack.c.b16 %v3132, %v3131
        %v3154 = vpack.c.b16 %v3134, %v3133
        %v3155 = vpack.c.b16 %v3136, %v3135
        %v3156 = vpack.c.b16 %v3138, %v3137
        %v3157 = vpack.c.b16 %v3140, %v3139
        %v3158 = vpack.c.b16 %v3142, %v3141
        %3175 = vmatprep.subr.bf16.mxu0 0
        %3176 = vmatpush1.bf16.msra.mxu0 %v3150
        %3177 = vmatprep.subr.bf16.mxu0 0
        %3178 = vmatpush1.bf16.msra.mxu0 %v3149
        %3179 = vmatprep.subr.bf16.mxu0 0
        %3180 = vmatpush1.bf16.msra.mxu0 %v3148
        %3181 = vmatprep.subr.bf16.mxu0 0
        %3182 = vmatpush1.bf16.msra.mxu0 %v3147
        %3183 = vmatprep.subr.bf16.mxu0 0
        %3184 = vmatpush1.bf16.msra.mxu0 %v3146
        %3185 = vmatprep.subr.bf16.mxu0 0
        %3186 = vmatpush1.bf16.msra.mxu0 %v3145
        %3187 = vmatprep.subr.bf16.mxu0 0
        %3188 = vmatpush1.bf16.msra.mxu0 %v3144
        %3189 = vmatprep.subr.bf16.mxu0 0
        %3190 = vmatpush1.bf16.msra.mxu0 %v3143
        %3191 = vmatprep.subr.bf16.mxu0 0
        %3192 = vmatpush2.bf16.msra.mxu0 %v3158
        %3193 = vmatprep.subr.bf16.mxu0 0
        %3194 = vmatpush2.bf16.msra.mxu0 %v3157
        %3195 = vmatprep.subr.bf16.mxu0 0
        %3196 = vmatpush2.bf16.msra.mxu0 %v3156
        %3197 = vmatprep.subr.bf16.mxu0 0
        %3198 = vmatpush2.bf16.msra.mxu0 %v3155
        %3199 = vmatprep.subr.bf16.mxu0 0
        %3200 = vmatpush2.bf16.msra.mxu0 %v3154
        %3201 = vmatprep.subr.bf16.mxu0 0
        %3202 = vmatpush2.bf16.msra.mxu0 %v3153
        %3203 = vmatprep.subr.bf16.mxu0 0
        %3204 = vmatpush2.bf16.msra.mxu0 %v3152
        %3205 = vmatprep.subr.bf16.mxu0 0
        %3206 = vmatpush2.bf16.msra.mxu0 %v3151
        %3207 = vmatprep.mubr.bf16.mxu0 %v3009
        %3208 = vmatmul.mubr.bf16.gmra.mxu0 %v3008
        %v3209 = vpop.f32.mrf.mxu0
        %v3210 = vadd.f32 %v3077, %v3209
        %v3211 = vpop.f32.mrf.mxu0
        %v3212 = vpop.f32.mrf.mxu0
        %v3213 = vadd.f32 %v3077, %v3212
        %v3214 = vpop.f32.mrf.mxu0
        %3215 = vmatprep.mubr.bf16.mxu0 %v3011
        %3216 = vmatmul.mubr.bf16.gmra.mxu0 %v3010
        %v3217 = vpop.f32.mrf.mxu0
        %v3218 = vadd.f32 %v3077, %v3217
        %v3219 = vpop.f32.mrf.mxu0
        %v3220 = vpop.f32.mrf.mxu0
        %v3221 = vadd.f32 %v3077, %v3220
        %v3222 = vpop.f32.mrf.mxu0
        %3223 = vmatprep.mubr.bf16.mxu0 %v3013
        %3224 = vmatmul.mubr.bf16.gmra.mxu0 %v3012
        %v3225 = vpop.f32.mrf.mxu0
        %v3226 = vadd.f32 %v3077, %v3225
        %v3227 = vpop.f32.mrf.mxu0
        %v3228 = vpop.f32.mrf.mxu0
        %v3229 = vadd.f32 %v3077, %v3228
        %v3230 = vpop.f32.mrf.mxu0
        %3231 = vmatprep.mubr.bf16.mxu0 %v3015
        %3232 = vmatmul.mubr.bf16.gmra.mxu0 %v3014
        %v3233 = vpop.f32.mrf.mxu0
        %v3234 = vadd.f32 %v3077, %v3233
        %v3235 = vpop.f32.mrf.mxu0
        %v3236 = vpop.f32.mrf.mxu0
        %v3237 = vadd.f32 %v3077, %v3236
        %v3238 = vpop.f32.mrf.mxu0
        %3239 = vmatprep.mubr.bf16.mxu0 %v3017
        %3240 = vmatmul.mubr.bf16.gmra.mxu0 %v3016
        %v3241 = vpop.f32.mrf.mxu0
        %v3242 = vadd.f32 %v3077, %v3241
        %v3243 = vpop.f32.mrf.mxu0
        %v3244 = vpop.f32.mrf.mxu0
        %v3245 = vadd.f32 %v3077, %v3244
        %v3246 = vpop.f32.mrf.mxu0
        %3247 = vmatprep.mubr.bf16.mxu0 %v3019
        %3248 = vmatmul.mubr.bf16.gmra.mxu0 %v3018
        %v3249 = vpop.f32.mrf.mxu0
        %v3250 = vadd.f32 %v3077, %v3249
        %v3251 = vpop.f32.mrf.mxu0
        %v3252 = vpop.f32.mrf.mxu0
        %v3253 = vadd.f32 %v3077, %v3252
        %v3254 = vpop.f32.mrf.mxu0
        %3255 = vmatprep.mubr.bf16.mxu0 %v3021
        %3256 = vmatmul.mubr.bf16.gmra.mxu0 %v3020
        %v3257 = vpop.f32.mrf.mxu0
        %v3258 = vadd.f32 %v3077, %v3257
        %v3259 = vpop.f32.mrf.mxu0
        %v3260 = vpop.f32.mrf.mxu0
        %v3261 = vadd.f32 %v3077, %v3260
        %v3262 = vpop.f32.mrf.mxu0
        %3263 = vmatprep.mubr.bf16.mxu0 %v3023
        %3264 = vmatmul.mubr.bf16.gmra.mxu0 %v3022
        %v3265 = vpop.f32.mrf.mxu0
        %v3266 = vadd.f32 %v3077, %v3265
        %v3267 = vpop.f32.mrf.mxu0
        %v3268 = vpop.f32.mrf.mxu0
        %v3269 = vadd.f32 %v3077, %v3268
        %v3270 = vpop.f32.mrf.mxu0
        %3271 = vmatprep.mubr.bf16.mxu0 %v3025
        %3272 = vmatmul.mubr.bf16.gmra.mxu0 %v3024
        %v3273 = vpop.f32.mrf.mxu0
        %v3274 = vadd.f32 %v3077, %v3273
        %v3275 = vpop.f32.mrf.mxu0
        %v3276 = vpop.f32.mrf.mxu0
        %v3277 = vadd.f32 %v3077, %v3276
        %v3278 = vpop.f32.mrf.mxu0
        %3279 = vmatprep.mubr.bf16.mxu0 %v3027
        %3280 = vmatmul.mubr.bf16.gmra.mxu0 %v3026
        %v3281 = vpop.f32.mrf.mxu0
        %v3282 = vadd.f32 %v3077, %v3281
        %v3283 = vpop.f32.mrf.mxu0
        %v3284 = vpop.f32.mrf.mxu0
        %v3285 = vadd.f32 %v3077, %v3284
        %v3286 = vpop.f32.mrf.mxu0
        %3287 = vmatprep.mubr.bf16.mxu0 %v3029
        %3288 = vmatmul.mubr.bf16.gmra.mxu0 %v3028
        %v3289 = vpop.f32.mrf.mxu0
        %v3290 = vadd.f32 %v3077, %v3289
        %v3291 = vpop.f32.mrf.mxu0
        %v3292 = vpop.f32.mrf.mxu0
        %v3293 = vadd.f32 %v3077, %v3292
        %v3294 = vpop.f32.mrf.mxu0
        %3295 = vmatprep.mubr.bf16.mxu0 %v3031
        %3296 = vmatmul.mubr.bf16.gmra.mxu0 %v3030
        %v3297 = vpop.f32.mrf.mxu0
        %v3298 = vadd.f32 %v3077, %v3297
        %v3299 = vpop.f32.mrf.mxu0
        %v3300 = vpop.f32.mrf.mxu0
        %v3301 = vadd.f32 %v3077, %v3300
        %v3302 = vpop.f32.mrf.mxu0
        %3303 = vmatprep.mubr.bf16.mxu0 %v3033
        %3304 = vmatmul.mubr.bf16.gmra.mxu0 %v3032
        %v3305 = vpop.f32.mrf.mxu0
        %v3306 = vadd.f32 %v3077, %v3305
        %v3307 = vpop.f32.mrf.mxu0
        %v3308 = vpop.f32.mrf.mxu0
        %v3309 = vadd.f32 %v3077, %v3308
        %v3310 = vpop.f32.mrf.mxu0
        %3311 = vmatprep.mubr.bf16.mxu0 %v3035
        %3312 = vmatmul.mubr.bf16.gmra.mxu0 %v3034
        %v3313 = vpop.f32.mrf.mxu0
        %v3314 = vadd.f32 %v3077, %v3313
        %v3315 = vpop.f32.mrf.mxu0
        %v3316 = vpop.f32.mrf.mxu0
        %v3317 = vadd.f32 %v3077, %v3316
        %v3318 = vpop.f32.mrf.mxu0
        %3319 = vmatprep.mubr.bf16.mxu0 %v3037
        %3320 = vmatmul.mubr.bf16.gmra.mxu0 %v3036
        %v3321 = vpop.f32.mrf.mxu0
        %v3322 = vadd.f32 %v3077, %v3321
        %v3323 = vpop.f32.mrf.mxu0
        %v3324 = vpop.f32.mrf.mxu0
        %v3325 = vadd.f32 %v3077, %v3324
        %v3326 = vpop.f32.mrf.mxu0
        %3327 = vmatprep.mubr.bf16.mxu0 %v3039
        %3328 = vmatmul.mubr.bf16.gmra.mxu0 %v3038
        %v3329 = vpop.f32.mrf.mxu0
        %v3330 = vadd.f32 %v3077, %v3329
        %v3331 = vpop.f32.mrf.mxu0
        %v3332 = vpop.f32.mrf.mxu0
        %v3333 = vadd.f32 %v3077, %v3332
        %v3334 = vpop.f32.mrf.mxu0
        %3335 = vdwg.mxu0
        %v3336 = vadd.f32 %v3210, %v1941
        %v3337 = vadd.f32 %v3213, %v1944
        %v3338 = vadd.f32 %v3218, %v1949
        %v3339 = vadd.f32 %v3221, %v1952
        %v3340 = vadd.f32 %v3226, %v1957
        %v3341 = vadd.f32 %v3229, %v1960
        %v3342 = vadd.f32 %v3234, %v1965
        %v3343 = vadd.f32 %v3237, %v1968
        %v3344 = vadd.f32 %v3242, %v1973
        %v3345 = vadd.f32 %v3245, %v1976
        %v3346 = vadd.f32 %v3250, %v1981
        %v3347 = vadd.f32 %v3253, %v1984
        %v3348 = vadd.f32 %v3258, %v1989
        %v3349 = vadd.f32 %v3261, %v1992
        %v3350 = vadd.f32 %v3266, %v1997
        %v3351 = vadd.f32 %v3269, %v2000
        %v3352 = vadd.f32 %v3274, %v2005
        %v3353 = vadd.f32 %v3277, %v2008
        %v3354 = vadd.f32 %v3282, %v2013
        %v3355 = vadd.f32 %v3285, %v2016
        %v3356 = vadd.f32 %v3290, %v2021
        %v3357 = vadd.f32 %v3293, %v2024
        %v3358 = vadd.f32 %v3298, %v2029
        %v3359 = vadd.f32 %v3301, %v2032
        %v3360 = vadd.f32 %v3306, %v2037
        %v3361 = vadd.f32 %v3309, %v2040
        %v3362 = vadd.f32 %v3314, %v2045
        %v3363 = vadd.f32 %v3317, %v2048
        %v3364 = vadd.f32 %v3322, %v2053
        %v3365 = vadd.f32 %v3325, %v2056
        %v3366 = vadd.f32 %v3330, %v2061
        %v3367 = vadd.f32 %v3333, %v2064
        %3368 = vst [vmem:[%s682] sm:$0xff] %v3336
        %3369 = vst [vmem:[%s682 + $0x8] sm:$0xff] %v3337
        %3370 = vst [vmem:[%s682 + $0x10] sm:$0xff] %v3338
        %3371 = vst [vmem:[%s682 + $0x18] sm:$0xff] %v3339
        %3372 = vst [vmem:[%s682 + $0x20] sm:$0xff] %v3340
        %3373 = vst [vmem:[%s682 + $0x28] sm:$0xff] %v3341
        %3374 = vst [vmem:[%s682 + $0x30] sm:$0xff] %v3342
        %3375 = vst [vmem:[%s682 + $0x38] sm:$0xff] %v3343
        %3376 = vst [vmem:[%s682 + $0x40] sm:$0xff] %v3344
        %3377 = vst [vmem:[%s682 + $0x48] sm:$0xff] %v3345
        %3378 = vst [vmem:[%s682 + $0x50] sm:$0xff] %v3346
        %3379 = vst [vmem:[%s682 + $0x58] sm:$0xff] %v3347
        %3380 = vst [vmem:[%s682 + $0x60] sm:$0xff] %v3348
        %3381 = vst [vmem:[%s682 + $0x68] sm:$0xff] %v3349
        %3382 = vst [vmem:[%s682 + $0x70] sm:$0xff] %v3350
        %3383 = vst [vmem:[%s682 + $0x78] sm:$0xff] %v3351
        %3384 = vst [vmem:[%s682 + $0x80] sm:$0xff] %v3352
        %3385 = vst [vmem:[%s682 + $0x88] sm:$0xff] %v3353
        %3386 = vst [vmem:[%s682 + $0x90] sm:$0xff] %v3354
        %3387 = vst [vmem:[%s682 + $0x98] sm:$0xff] %v3355
        %3388 = vst [vmem:[%s682 + $0xa0] sm:$0xff] %v3356
        %3389 = vst [vmem:[%s682 + $0xa8] sm:$0xff] %v3357
        %3390 = vst [vmem:[%s682 + $0xb0] sm:$0xff] %v3358
        %3391 = vst [vmem:[%s682 + $0xb8] sm:$0xff] %v3359
        %3392 = vst [vmem:[%s682 + $0xc0] sm:$0xff] %v3360
        %3393 = vst [vmem:[%s682 + $0xc8] sm:$0xff] %v3361
        %3394 = vst [vmem:[%s682 + $0xd0] sm:$0xff] %v3362
        %3395 = vst [vmem:[%s682 + $0xd8] sm:$0xff] %v3363
        %3396 = vst [vmem:[%s682 + $0xe0] sm:$0xff] %v3364
        %3397 = vst [vmem:[%s682 + $0xe8] sm:$0xff] %v3365
        %3398 = vst [vmem:[%s682 + $0xf0] sm:$0xff] %v3366
        %3399 = vst [vmem:[%s682 + $0xf8] sm:$0xff] %v3367
        %s3400 = sand.u32 %s408, 1
        %s3401 = scalar_lea.sflag [#allocation4], %s3400
        %s3402 = sand.u32 %s408, 1
        %s3403 = smul.addr %s3402, 256
        %s3404 = scalar_lea.vmem [#allocation17], %s3403
        // Predicated region
        $region125: #{tpu_custom_call.1} parent=87 // pred_check
          %p3405 = pneg %p418
        $region126: #{tpu_custom_call.1} parent=87 // pred_check_branch
          %3407 = sbr.rel (%p3405) target = $region128
        $region127: #{tpu_custom_call.1} parent=87 // pred_region
          %s3408 = smul.u32 32, %s38
          %s3410 = ssub.s32 4096, 4096
          %3411 = vsyncadd %s3401, %s3410
          %s3412 = smul.addr %s3408, 128
          %s3413 = scalar_lea.hbm %s17, %s3412
          %s3414 = sshll.u32 %s3404, 4
          %s3415 = int_to_ptr.vmem [resolvable:$true] %s3414
          %3420 = dma.vmem_to_hbm [thread:$0]  %s3415, 4096, %s3413, %s3401, 128, 128, 8
        $region128: #{tpu_custom_call.1} parent=87 // pred_fallthru
          _
      $region88: #{tpu_custom_call.1} parent=5 // pred_fallthru
        _
      %p3421 = scmp.le.s32.totalorder 2, %s33
      // Predicated region
      $region129: #{tpu_custom_call.1} parent=5 // pred_check
        %p3422 = pneg %p3421
      $region130: #{tpu_custom_call.1} parent=5 // pred_check_branch
        %3424 = sbr.rel (%p3422) target = $region132
      $region131: #{tpu_custom_call.1} parent=5 // pred_region
        %s3425 = ssub.s32 %s33, 2
        // Predicated region
        $region133: #{tpu_custom_call.1} parent=131 // pred_check
          %p3426 = pneg %p424
        $region134: #{tpu_custom_call.1} parent=131 // pred_check_branch
          %3428 = sbr.rel (%p3426) target = $region136
        $region135: #{tpu_custom_call.1} parent=131 // pred_region
          %s3429 = sand.u32 %s409, 1
          %s3430 = scalar_lea.sflag [#allocation4], %s3429
          %s3431 = sand.u32 %s409, 1
          %s3432 = smul.addr %s3431, 256
          %s3433 = scalar_lea.vmem [#allocation17], %s3432
          %3434 = dma.done %s3430, 4096
        $region136: #{tpu_custom_call.1} parent=131 // pred_fallthru
          _
      $region132: #{tpu_custom_call.1} parent=5 // pred_fallthru
        _
    $region6: #{tpu_custom_call.1} parent=1 // loop_footer
      %s37 = sadd.s32 1, %s33
    $region7: #{tpu_custom_call.1} parent=1 // loop_footer_branch
      %32 = sbr.rel target = $region3
    $region8: #{tpu_custom_call.1} parent=1 // loop_exit
      _
    %3435 = vsyncpa [#allocation3], 1
    %s3436 = scalar_lea.sflag [#allocation3], 1
    %3437 = vsyncpa %s3436, 1
    %3438 = vsyncpa [#allocation6], 1
    %3439 = vsyncpa [#allocation9], 1
    %3440 = vsyncpa [#allocation12], 1
    %3441 = vsyncpa [#allocation15], 1
    %3442 = vsyncpa [#allocation4], 1
    %s3443 = scalar_lea.sflag [#allocation4], 1
    %3444 = vsyncpa %s3443, 1

</llo_original>
